<compile_context>
chip_gen: v5e
topology: v5e:2x2
jax: 0.10.0
libtpu: 0.0.40
codegen_flags: <defaults>
</compile_context>

<pallas_src>
import functools

import jax
import jax.numpy as jnp
from jax.experimental import pallas as pl
from jax.experimental.pallas import tpu as pltpu


# ----------------------------------------------------------------------------
# Fused bidirectional LSTM recurrence, time-chunked.
#
#   gx (T_pad, B, 8H) f32 : hoisted input projection, lanes [0:4H)=fwd gates,
#                           [4H:8H)=bwd gates, per-direction gate order [i|f|o|g].
#   whh (2H, 8H) bf16     : block-diag recurrent weights, rows [0:H)->fwd cols,
#                           rows [H:2H)->bwd cols.
#   outputs: out_f, out_b (T_pad, B, H) bf16.
#   grid: one step per time chunk (serial / "arbitrary"); h/c carried in VMEM
#   scratch across chunks; inner fori_loop (unrolled) walks the chunk.
# ----------------------------------------------------------------------------
def _bilstm_chunk_kernel(gx_f_ref, gx_b_ref, whh_ref, out_f_ref, out_b_ref,
                         hf_ref, hb_ref, cf_ref, cb_ref, *,
                         hidden, t_chunk, seq_len, t_pad):
    H = hidden
    chunk = pl.program_id(0)

    @pl.when(chunk == 0)
    def _():
        hf_ref[...] = jnp.zeros_like(hf_ref)
        hb_ref[...] = jnp.zeros_like(hb_ref)
        cf_ref[...] = jnp.zeros_like(cf_ref)
        cb_ref[...] = jnp.zeros_like(cb_ref)

    whh = whh_ref[...]                       # (2H, 8H) bf16, hoisted

    def cell(g, c_prev):
        # Gate order [i | f | o | g]: one sigmoid over the contiguous 3H slice.
        sg = jax.nn.sigmoid(g[:, 0:3 * H])
        g_g = jnp.tanh(g[:, 3 * H:4 * H])
        c_new = sg[:, H:2 * H] * c_prev + sg[:, 0:H] * g_g
        h_new = sg[:, 2 * H:3 * H] * jnp.tanh(c_new)
        return h_new, c_new

    def step(s, carry):
        h_f, h_b, c_f, c_b = carry
        # One fused (B,2H)x(2H,8H) MXU op per step (bf16 in / f32 acc).
        h_cat = jnp.concatenate([h_f, h_b], axis=-1).astype(jnp.bfloat16)
        g_rec = jnp.dot(h_cat, whh, preferred_element_type=jnp.float32)

        g_f = gx_f_ref[s] + g_rec[:, 0:4 * H]
        g_b = gx_b_ref[t_chunk - 1 - s] + g_rec[:, 4 * H:8 * H]

        h_f_new, c_f_new = cell(g_f, c_f)
        h_b_new, c_b_new = cell(g_b, c_b)

        if seq_len != t_pad:
            # Only emitted when T was padded: the bwd scan visits padded
            # timesteps (t >= seq_len) first -> freeze its state there.
            t_b = t_pad - 1 - (chunk * t_chunk + s)
            keep = t_b < seq_len
            h_b_new = jnp.where(keep, h_b_new, h_b)
            c_b_new = jnp.where(keep, c_b_new, c_b)

        out_f_ref[s] = h_f_new.astype(out_f_ref.dtype)
        out_b_ref[t_chunk - 1 - s] = h_b_new.astype(out_b_ref.dtype)
        return h_f_new, h_b_new, c_f_new, c_b_new

    carry0 = (hf_ref[...], hb_ref[...], cf_ref[...], cb_ref[...])
    h_f, h_b, c_f, c_b = jax.lax.fori_loop(0, t_chunk, step, carry0,
                                           unroll=True)
    hf_ref[...] = h_f
    hb_ref[...] = h_b
    cf_ref[...] = c_f
    cb_ref[...] = c_b


def bilstm_layer(gx, whh_packed, hidden, t_chunk, seq_len):
    """gx (T_pad, B, 8H) f32; whh_packed (2H, 8H) bf16 -> (out_f, out_b) bf16."""
    t_pad, B, _ = gx.shape
    H = hidden
    n_chunks = t_pad // t_chunk

    kernel = functools.partial(_bilstm_chunk_kernel, hidden=H, t_chunk=t_chunk,
                               seq_len=seq_len, t_pad=t_pad)
    out_f, out_b = pl.pallas_call(
        kernel,
        out_shape=(jax.ShapeDtypeStruct((t_pad, B, H), jnp.bfloat16),
                   jax.ShapeDtypeStruct((t_pad, B, H), jnp.bfloat16)),
        grid_spec=pltpu.PrefetchScalarGridSpec(
            num_scalar_prefetch=0,
            grid=(n_chunks,),
            in_specs=[
                # fwd gates: lanes [0:4H) of chunk i.
                pl.BlockSpec((t_chunk, B, 4 * H), lambda i: (i, 0, 0)),
                # bwd gates: lanes [4H:8H) of the time-mirrored chunk.
                pl.BlockSpec((t_chunk, B, 4 * H),
                             lambda i: (n_chunks - 1 - i, 0, 1)),
                pl.BlockSpec((2 * H, 8 * H), lambda i: (0, 0)),
            ],
            out_specs=(
                pl.BlockSpec((t_chunk, B, H), lambda i: (i, 0, 0)),
                pl.BlockSpec((t_chunk, B, H), lambda i: (n_chunks - 1 - i, 0, 0)),
            ),
            scratch_shapes=[pltpu.VMEM((B, H), jnp.float32)] * 4,
        ),
        compiler_params=pltpu.CompilerParams(
            dimension_semantics=("arbitrary",),
            vmem_limit_bytes=32 * 1024 * 1024),
    )(gx, gx, whh_packed)
    return out_f, out_b


# ----------------------------------------------------------------------------
# Tiled matmul-chain kernel:
#   y = sum_j x_j @ w_j + b ; then n_ff times: y = relu(y @ fw[l] + fb[l]).
# Used for (a) hoisted fused LSTM input projections (n_ff = 0) and
#          (b) the final projection + ReLU FF stack.
# Supports 1 or 2 stacked x inputs so the bidirectional hidden state never
# needs an explicit lane-concat in HBM.
# ----------------------------------------------------------------------------
def _linear_chain_kernel(*refs, n_x, n_ff):
    x_refs = refs[0:n_x]
    w_refs = refs[n_x:2 * n_x]
    b_ref = refs[2 * n_x]
    o_ref = refs[-1]

    acc = jnp.dot(x_refs[0][...], w_refs[0][...],
                  preferred_element_type=jnp.float32)
    for j in range(1, n_x):
        acc = acc + jnp.dot(x_refs[j][...], w_refs[j][...],
                            preferred_element_type=jnp.float32)
    y = acc + b_ref[...]

    if n_ff > 0:
        fw_ref = refs[2 * n_x + 1]
        fb_ref = refs[2 * n_x + 2]
        for l in range(n_ff):
            y = jnp.dot(y.astype(jnp.bfloat16), fw_ref[l],
                        preferred_element_type=jnp.float32) + fb_ref[l]
            y = jnp.maximum(y, 0.0)

    o_ref[...] = y.astype(o_ref.dtype)


def linear_chain(xs, ws, b0, ffw=None, ffb=None, tm=512,
                 out_dtype=jnp.float32):
    """xs: list of (M, K_j) bf16; ws: list of (K_j, N) bf16; b0 (1, N) f32;
    ffw (L, N, N) bf16; ffb (L, 1, N) f32."""
    assert len(xs) == len(ws)
    n_x = len(xs)
    M = xs[0].shape[0]
    N = ws[0].shape[1]
    n_ff = 0 if ffw is None else int(ffw.shape[0])

    tm = max(8, min(tm, M))
    m_pad = pl.cdiv(M, tm) * tm
    if m_pad != M:
        xs = [jnp.pad(x, ((0, m_pad - M), (0, 0))) for x in xs]

    in_specs, args = [], []
    for x in xs:
        k = x.shape[1]
        in_specs.append(pl.BlockSpec((tm, k), lambda i: (i, 0)))
        args.append(x)
    for w in ws:
        in_specs.append(pl.BlockSpec(w.shape, lambda i: (0, 0)))
        args.append(w)
    in_specs.append(pl.BlockSpec(b0.shape, lambda i: (0, 0)))
    args.append(b0)
    if n_ff > 0:
        in_specs.append(pl.BlockSpec(ffw.shape, lambda i: (0, 0, 0)))
        in_specs.append(pl.BlockSpec(ffb.shape, lambda i: (0, 0, 0)))
        args += [ffw, ffb]

    out = pl.pallas_call(
        functools.partial(_linear_chain_kernel, n_x=n_x, n_ff=n_ff),
        out_shape=jax.ShapeDtypeStruct((m_pad, N), out_dtype),
        grid_spec=pltpu.PrefetchScalarGridSpec(
            num_scalar_prefetch=0,
            grid=(m_pad // tm,),
            in_specs=in_specs,
            out_specs=pl.BlockSpec((tm, N), lambda i: (i, 0)),
        ),
        compiler_params=pltpu.CompilerParams(
            dimension_semantics=("parallel",),
            vmem_limit_bytes=32 * 1024 * 1024),
    )(*args)
    return out[:M] if m_pad != M else out


# ----------------------------------------------------------------------------
# Parameter init (PyTorch-style uniform(-1/sqrt(H), 1/sqrt(H))), stored
# directly in the fused layouts with matmul weights pre-cast to bf16.
# Internal gate order is [i|f|o|g] (PyTorch is [i|f|g|o]; importing real
# PyTorch weights would require permuting the g/o column blocks).
# ----------------------------------------------------------------------------
def init_params(key, num_layers, in_dims, hidden_dims, out_dims, num_ff_layers):
    H = hidden_dims
    bound = 1.0 / float(H) ** 0.5

    def u(k, shape):
        return jax.random.uniform(k, shape, jnp.float32, -bound, bound)

    params = {"layers": [], "ff_w": None, "ff_b": None}
    for layer in range(num_layers):
        d_in = in_dims if layer == 0 else 2 * H
        key, *ks = jax.random.split(key, 9)
        wih_f = u(ks[0], (d_in, 4 * H))
        wih_b = u(ks[1], (d_in, 4 * H))
        whh_f = u(ks[2], (H, 4 * H))
        whh_b = u(ks[3], (H, 4 * H))
        b_f = u(ks[4], (1, 4 * H)) + u(ks[5], (1, 4 * H))   # b_ih + b_hh
        b_b = u(ks[6], (1, 4 * H)) + u(ks[7], (1, 4 * H))

        wih_fused = jnp.concatenate([wih_f, wih_b], axis=1).astype(jnp.bfloat16)
        if layer == 0:
            wih_list = [wih_fused]
        else:
            # Rows [0:H) multiply the fwd hidden input, rows [H:2H) the bwd.
            wih_list = [wih_fused[:H], wih_fused[H:]]

        whh_packed = jnp.zeros((2 * H, 8 * H), jnp.float32)
        whh_packed = whh_packed.at[0:H, 0:4 * H].set(whh_f)
        whh_packed = whh_packed.at[H:2 * H, 4 * H:8 * H].set(whh_b)

        params["layers"].append({
            "wih": wih_list,
            "b": jnp.concatenate([b_f, b_b], axis=1),
            "whh": whh_packed.astype(jnp.bfloat16),
        })

    key, kw, kb = jax.random.split(key, 3)
    proj_w = u(kw, (2 * H, out_dims))
    params["proj_w"] = [proj_w[:H].astype(jnp.bfloat16),
                        proj_w[H:].astype(jnp.bfloat16)]
    params["proj_b"] = u(kb, (1, out_dims))

    ffw, ffb = [], []
    for _ in range(num_ff_layers - 1):
        key, kw, kb = jax.random.split(key, 3)
        ffw.append(u(kw, (out_dims, out_dims)))
        ffb.append(u(kb, (1, out_dims)))
    if ffw:
        params["ff_w"] = jnp.stack(ffw).astype(jnp.bfloat16)
        params["ff_b"] = jnp.stack(ffb)
    return params


# ----------------------------------------------------------------------------
# Forward: stacked bidirectional LSTM -> final projection + ReLU FF stack.
# ----------------------------------------------------------------------------
def bilstm_moreff_forward(params, feat, *, t_chunk=32, tm=512):
    T, B, _ = feat.shape
    H = params["layers"][0]["whh"].shape[0] // 2
    out_dims = params["proj_b"].shape[1]

    B_pad = ((B + 7) // 8) * 8            # fill sublanes; batch rows independent
    Tc = max(1, min(t_chunk, T))
    T_pad = pl.cdiv(T, Tc) * Tc

    x = feat
    if B_pad != B or T_pad != T:
        x = jnp.pad(x, ((0, T_pad - T), (0, B_pad - B), (0, 0)))
    xs = [x.reshape(T_pad * B_pad, x.shape[-1]).astype(jnp.bfloat16)]

    for layer in params["layers"]:
        # One fused input projection per layer -> (T*B, 8H), f32.
        gx = linear_chain(xs, layer["wih"], layer["b"], tm=tm)
        gx = gx.reshape(T_pad, B_pad, 8 * H)
        # Fused fwd+bwd recurrence (bwd time-reversal handled by index_map).
        h_f, h_b = bilstm_layer(gx, layer["whh"], H, Tc, seq_len=T)
        xs = [h_f.reshape(T_pad * B_pad, H), h_b.reshape(T_pad * B_pad, H)]

    out = linear_chain(xs, params["proj_w"], params["proj_b"],
                       ffw=params["ff_w"], ffb=params["ff_b"], tm=tm)
    out = out.reshape(T_pad, B_pad, out_dims)
    return out[:T, :B, :]


# ----------------------------------------------------------------------------
# Pure-JAX reference (mirrors the kernel's bf16 rounding of matmul operands).
# ----------------------------------------------------------------------------
def reference_forward(params, feat):
    T, B, _ = feat.shape
    H = params["layers"][0]["whh"].shape[0] // 2

    def rnd(a):  # bf16 round-trip, matching the kernel's matmul operand dtype
        return a.astype(jnp.bfloat16).astype(jnp.float32)

    x = rnd(feat)
    for layer in params["layers"]:
        wih = jnp.concatenate([w.astype(jnp.float32) for w in layer["wih"]],
                              axis=0)
        whh = layer["whh"].astype(jnp.float32)
        whh_f = whh[0:H, 0:4 * H]
        whh_b = whh[H:2 * H, 4 * H:8 * H]
        gx = jnp.einsum("tbk,kg->tbg", x, wih) + layer["b"]

        def scan_dir(gx_dir, whh_dir, reverse):
            def cell(carry, g_x):
                h, c = carry
                g = g_x + jnp.dot(rnd(h), whh_dir)
                i_g = jax.nn.sigmoid(g[:, 0:H])
                f_g = jax.nn.sigmoid(g[:, H:2 * H])
                o_g = jax.nn.sigmoid(g[:, 2 * H:3 * H])
                g_g = jnp.tanh(g[:, 3 * H:4 * H])
                c_new = f_g * c + i_g * g_g
                h_new = o_g * jnp.tanh(c_new)
                return (h_new, c_new), h_new
            init = (jnp.zeros((B, H), jnp.float32),
                    jnp.zeros((B, H), jnp.float32))
            _, hs = jax.lax.scan(cell, init, gx_dir, reverse=reverse)
            return hs

        h_f = scan_dir(gx[:, :, 0:4 * H], whh_f, reverse=False)
        h_b = scan_dir(gx[:, :, 4 * H:8 * H], whh_b, reverse=True)
        x = rnd(jnp.concatenate([h_f, h_b], axis=-1))

    pw = jnp.concatenate([w.astype(jnp.float32) for w in params["proj_w"]],
                         axis=0)
    y = jnp.einsum("tbk,kn->tbn", x, pw) + params["proj_b"]
    if params["ff_w"] is not None:
        for l in range(params["ff_w"].shape[0]):
            y = jnp.einsum("tbk,kn->tbn", rnd(y),
                           params["ff_w"][l].astype(jnp.float32))
            y = jnp.maximum(y + params["ff_b"][l], 0.0)
    return y


if __name__ == "__main__":
    # Small, forward-consistent shapes.
    num_layers, in_dims, hidden_dims, out_dims, num_ff_layers = 2, 16, 32, 32, 2
    T, B = 8, 4

    key = jax.random.PRNGKey(0)
    key, kf = jax.random.split(key)
    feat = jax.random.normal(kf, (T, B, in_dims), jnp.float32)

    params = init_params(key, num_layers, in_dims, hidden_dims, out_dims,
                         num_ff_layers)

    fwd = jax.jit(bilstm_moreff_forward)
    out = jax.block_until_ready(fwd(params, feat))
    assert out.shape == (T, B, out_dims)

    ref = jax.block_until_ready(reference_forward(params, feat))
    err = float(jnp.max(jnp.abs(out - ref)))
    assert err < 5e-2, f"kernel/reference mismatch: max abs err = {err}"

    print("KERNEL_OK")
</pallas_src>

<mosaic_0001>
module attributes {stable_mosaic.version = 11 : i64} {
  func.func @_linear_chain_kernel(%arg0: i32, %arg1: memref<64x16xbf16, #tpu.memory_space<vmem>>, %arg2: memref<16x256xbf16, #tpu.memory_space<vmem>>, %arg3: memref<1x256xf32, #tpu.memory_space<vmem>>, %arg4: memref<64x256xf32, #tpu.memory_space<vmem>>) attributes {dimension_semantics = [#tpu.dimension_semantics<parallel>], iteration_bounds = array<i64: 1>, scalar_prefetch = 0 : i64, scratch_operands = 0 : i64, tpu.core_type = #tpu.core_type<tc>, window_params = [{transform_indices = @transform_0, window_bounds = array<i64: 64, 16>}, {pipeline_mode = #tpu.pipeline_mode<synchronous>, transform_indices = @transform_1, window_bounds = array<i64: 16, 256>}, {pipeline_mode = #tpu.pipeline_mode<synchronous>, transform_indices = @transform_2, window_bounds = array<i64: 1, 256>}, {transform_indices = @transform_3, window_bounds = array<i64: 64, 256>}]} {
    %c0 = arith.constant 0 : index
    %c0_0 = arith.constant 0 : index
    %0 = vector.load %arg1[%c0, %c0_0] : memref<64x16xbf16, #tpu.memory_space<vmem>>, vector<64x16xbf16>
    %c0_1 = arith.constant 0 : index
    %c0_2 = arith.constant 0 : index
    %1 = vector.load %arg2[%c0_1, %c0_2] : memref<16x256xbf16, #tpu.memory_space<vmem>>, vector<16x256xbf16>
    %cst = arith.constant dense<0.000000e+00> : vector<64x256xf32>
    %2 = tpu.matmul %0, %1, %cst {dimension_numbers = #tpu.dot_dimension_numbers<[1], [0], [0], [1], [0, 0, 1, 1], [], []>} : vector<64x16xbf16>, vector<16x256xbf16>, vector<64x256xf32> -> vector<64x256xf32>
    %c0_3 = arith.constant 0 : index
    %c0_4 = arith.constant 0 : index
    %3 = vector.load %arg3[%c0_3, %c0_4] : memref<1x256xf32, #tpu.memory_space<vmem>>, vector<1x256xf32>
    %4 = vector.broadcast %3 : vector<1x256xf32> to vector<64x256xf32>
    %5 = arith.addf %2, %4 : vector<64x256xf32>
    %c0_5 = arith.constant 0 : index
    %c0_6 = arith.constant 0 : index
    %6 = vector.load %arg4[%c0_5, %c0_6] : memref<64x256xf32, #tpu.memory_space<vmem>>, vector<64x256xf32>
    tpu.vector_store %arg4[%c0_5, %c0_6], %5 {strides = array<i32>} : memref<64x256xf32, #tpu.memory_space<vmem>>, vector<64x256xf32>,
    return
  }
  func.func @transform_0(%arg0: i32) -> (i32, i32) {
    %c0_i32 = arith.constant 0 : i32
    %c0_i32_0 = arith.constant 0 : i32
    return %arg0, %c0_i32 : i32, i32
  }
  func.func @transform_1(%arg0: i32) -> (i32, i32) {
    %c0_i32 = arith.constant 0 : i32
    %c0_i32_0 = arith.constant 0 : i32
    %c0_i32_1 = arith.constant 0 : i32
    return %c0_i32, %c0_i32_0 : i32, i32
  }
  func.func @transform_2(%arg0: i32) -> (i32, i32) {
    %c0_i32 = arith.constant 0 : i32
    %c0_i32_0 = arith.constant 0 : i32
    %c0_i32_1 = arith.constant 0 : i32
    return %c0_i32, %c0_i32_0 : i32, i32
  }
  func.func @transform_3(%arg0: i32) -> (i32, i32) {
    %c0_i32 = arith.constant 0 : i32
    %c0_i32_0 = arith.constant 0 : i32
    return %arg0, %c0_i32 : i32, i32
  }
}

module attributes {stable_mosaic.version = 11 : i64} {
  func.func @_bilstm_chunk_kernel(%arg0: i32, %arg1: memref<8x8x128xf32, #tpu.memory_space<vmem>>, %arg2: memref<8x8x128xf32, #tpu.memory_space<vmem>>, %arg3: memref<64x256xbf16, #tpu.memory_space<vmem>>, %arg4: memref<8x8x32xbf16, #tpu.memory_space<vmem>>, %arg5: memref<8x8x32xbf16, #tpu.memory_space<vmem>>, %arg6: memref<8x32xf32, #tpu.memory_space<vmem>>, %arg7: memref<8x32xf32, #tpu.memory_space<vmem>>, %arg8: memref<8x32xf32, #tpu.memory_space<vmem>>, %arg9: memref<8x32xf32, #tpu.memory_space<vmem>>) attributes {dimension_semantics = [#tpu.dimension_semantics<arbitrary>], iteration_bounds = array<i64: 1>, scalar_prefetch = 0 : i64, scratch_operands = 4 : i64, tpu.core_type = #tpu.core_type<tc>, window_params = [{transform_indices = @transform_0, window_bounds = array<i64: 8, 8, 128>}, {transform_indices = @transform_1, window_bounds = array<i64: 8, 8, 128>}, {pipeline_mode = #tpu.pipeline_mode<synchronous>, transform_indices = @transform_2, window_bounds = array<i64: 64, 256>}, {transform_indices = @transform_3, window_bounds = array<i64: 8, 8, 32>}, {transform_indices = @transform_4, window_bounds = array<i64: 8, 8, 32>}]} {
    %c0_i32 = arith.constant 0 : i32
    %0 = arith.cmpi eq, %arg0, %c0_i32 : i32
    %1 = arith.extui %0 : i1 to i32
    %c0_i32_0 = arith.constant 0 : i32
    %2 = arith.cmpi ne, %1, %c0_i32_0 : i32
    scf.if %2 {
      %cst_122 = arith.constant 0.000000e+00 : f32
      %468 = vector.broadcast %cst_122 : f32 to vector<8x32xf32>
      %c0_123 = arith.constant 0 : index
      %c0_124 = arith.constant 0 : index
      %469 = vector.load %arg6[%c0_123, %c0_124] : memref<8x32xf32, #tpu.memory_space<vmem>>, vector<8x32xf32>
      tpu.vector_store %arg6[%c0_123, %c0_124], %468 {strides = array<i32>} : memref<8x32xf32, #tpu.memory_space<vmem>>, vector<8x32xf32>,
      %cst_125 = arith.constant 0.000000e+00 : f32
      %470 = vector.broadcast %cst_125 : f32 to vector<8x32xf32>
      %c0_126 = arith.constant 0 : index
      %c0_127 = arith.constant 0 : index
      %471 = vector.load %arg7[%c0_126, %c0_127] : memref<8x32xf32, #tpu.memory_space<vmem>>, vector<8x32xf32>
      tpu.vector_store %arg7[%c0_126, %c0_127], %470 {strides = array<i32>} : memref<8x32xf32, #tpu.memory_space<vmem>>, vector<8x32xf32>,
      %cst_128 = arith.constant 0.000000e+00 : f32
      %472 = vector.broadcast %cst_128 : f32 to vector<8x32xf32>
      %c0_129 = arith.constant 0 : index
      %c0_130 = arith.constant 0 : index
      %473 = vector.load %arg8[%c0_129, %c0_130] : memref<8x32xf32, #tpu.memory_space<vmem>>, vector<8x32xf32>
      tpu.vector_store %arg8[%c0_129, %c0_130], %472 {strides = array<i32>} : memref<8x32xf32, #tpu.memory_space<vmem>>, vector<8x32xf32>,
      %cst_131 = arith.constant 0.000000e+00 : f32
      %474 = vector.broadcast %cst_131 : f32 to vector<8x32xf32>
      %c0_132 = arith.constant 0 : index
      %c0_133 = arith.constant 0 : index
      %475 = vector.load %arg9[%c0_132, %c0_133] : memref<8x32xf32, #tpu.memory_space<vmem>>, vector<8x32xf32>
      tpu.vector_store %arg9[%c0_132, %c0_133], %474 {strides = array<i32>} : memref<8x32xf32, #tpu.memory_space<vmem>>, vector<8x32xf32>,
    } else {
    }
    %c0 = arith.constant 0 : index
    %c0_1 = arith.constant 0 : index
    %3 = vector.load %arg3[%c0, %c0_1] : memref<64x256xbf16, #tpu.memory_space<vmem>>, vector<64x256xbf16>
    %c0_2 = arith.constant 0 : index
    %c0_3 = arith.constant 0 : index
    %4 = vector.load %arg6[%c0_2, %c0_3] : memref<8x32xf32, #tpu.memory_space<vmem>>, vector<8x32xf32>
    %c0_4 = arith.constant 0 : index
    %c0_5 = arith.constant 0 : index
    %5 = vector.load %arg7[%c0_4, %c0_5] : memref<8x32xf32, #tpu.memory_space<vmem>>, vector<8x32xf32>
    %c0_6 = arith.constant 0 : index
    %c0_7 = arith.constant 0 : index
    %6 = vector.load %arg8[%c0_6, %c0_7] : memref<8x32xf32, #tpu.memory_space<vmem>>, vector<8x32xf32>
    %c0_8 = arith.constant 0 : index
    %c0_9 = arith.constant 0 : index
    %7 = vector.load %arg9[%c0_8, %c0_9] : memref<8x32xf32, #tpu.memory_space<vmem>>, vector<8x32xf32>
    %c0_i32_10 = arith.constant 0 : i32
    %8 = tpu.concatenate %4, %5 in 1 : vector<8x32xf32>, vector<8x32xf32> -> vector<8x64xf32>
    %9 = arith.truncf %8 : vector<8x64xf32> to vector<8x64xbf16>
    %cst = arith.constant dense<0.000000e+00> : vector<8x256xf32>
    %10 = tpu.matmul %9, %3, %cst {dimension_numbers = #tpu.dot_dimension_numbers<[1], [0], [0], [1], [0, 0, 1, 1], [], []>} : vector<8x64xbf16>, vector<64x256xbf16>, vector<8x256xf32> -> vector<8x256xf32>
    %11 = arith.index_cast %c0_i32_10 : i32 to index
    %c0_11 = arith.constant 0 : index
    %c0_12 = arith.constant 0 : index
    %12 = vector.load %arg1[%11, %c0_11, %c0_12] : memref<8x8x128xf32, #tpu.memory_space<vmem>>, vector<1x8x128xf32>
    %13 = vector.shape_cast %12 : vector<1x8x128xf32> to vector<8x128xf32>
    %14 = vector.extract_strided_slice %10 {offsets = [0, 0], sizes = [8, 128], strides = [1, 1]} : vector<8x256xf32> to vector<8x128xf32>
    %15 = arith.addf %13, %14 : vector<8x128xf32>
    %c7_i32 = arith.constant 7 : i32
    %16 = arith.subi %c7_i32, %c0_i32_10 : i32
    %17 = arith.index_cast %16 : i32 to index
    %c0_13 = arith.constant 0 : index
    %c0_14 = arith.constant 0 : index
    %18 = vector.load %arg2[%17, %c0_13, %c0_14] : memref<8x8x128xf32, #tpu.memory_space<vmem>>, vector<1x8x128xf32>
    %19 = vector.shape_cast %18 : vector<1x8x128xf32> to vector<8x128xf32>
    %20 = vector.extract_strided_slice %10 {offsets = [0, 128], sizes = [8, 128], strides = [1, 1]} : vector<8x256xf32> to vector<8x128xf32>
    %21 = arith.addf %19, %20 : vector<8x128xf32>
    %22 = vector.extract_strided_slice %15 {offsets = [0, 0], sizes = [8, 96], strides = [1, 1]} : vector<8x128xf32> to vector<8x96xf32>
    %23 = arith.negf %22 : vector<8x96xf32>
    %24 = math.exp %23 : vector<8x96xf32>
    %cst_15 = arith.constant 1.000000e+00 : f32
    %25 = vector.broadcast %cst_15 : f32 to vector<8x96xf32>
    %26 = arith.addf %25, %24 : vector<8x96xf32>
    %27 = arith.divf %25, %26 : vector<8x96xf32>
    %28 = vector.extract_strided_slice %15 {offsets = [0, 96], sizes = [8, 32], strides = [1, 1]} : vector<8x128xf32> to vector<8x32xf32>
    %29 = math.tanh %28 : vector<8x32xf32>
    %30 = vector.extract_strided_slice %27 {offsets = [0, 32], sizes = [8, 32], strides = [1, 1]} : vector<8x96xf32> to vector<8x32xf32>
    %31 = arith.mulf %30, %6 : vector<8x32xf32>
    %32 = vector.extract_strided_slice %27 {offsets = [0, 0], sizes = [8, 32], strides = [1, 1]} : vector<8x96xf32> to vector<8x32xf32>
    %33 = arith.mulf %32, %29 : vector<8x32xf32>
    %34 = arith.addf %31, %33 : vector<8x32xf32>
    %35 = vector.extract_strided_slice %27 {offsets = [0, 64], sizes = [8, 32], strides = [1, 1]} : vector<8x96xf32> to vector<8x32xf32>
    %36 = math.tanh %34 : vector<8x32xf32>
    %37 = arith.mulf %35, %36 : vector<8x32xf32>
    %38 = vector.extract_strided_slice %21 {offsets = [0, 0], sizes = [8, 96], strides = [1, 1]} : vector<8x128xf32> to vector<8x96xf32>
    %39 = arith.negf %38 : vector<8x96xf32>
    %40 = math.exp %39 : vector<8x96xf32>
    %cst_16 = arith.constant 1.000000e+00 : f32
    %41 = vector.broadcast %cst_16 : f32 to vector<8x96xf32>
    %42 = arith.addf %41, %40 : vector<8x96xf32>
    %43 = arith.divf %41, %42 : vector<8x96xf32>
    %44 = vector.extract_strided_slice %21 {offsets = [0, 96], sizes = [8, 32], strides = [1, 1]} : vector<8x128xf32> to vector<8x32xf32>
    %45 = math.tanh %44 : vector<8x32xf32>
    %46 = vector.extract_strided_slice %43 {offsets = [0, 32], sizes = [8, 32], strides = [1, 1]} : vector<8x96xf32> to vector<8x32xf32>
    %47 = arith.mulf %46, %7 : vector<8x32xf32>
    %48 = vector.extract_strided_slice %43 {offsets = [0, 0], sizes = [8, 32], strides = [1, 1]} : vector<8x96xf32> to vector<8x32xf32>
    %49 = arith.mulf %48, %45 : vector<8x32xf32>
    %50 = arith.addf %47, %49 : vector<8x32xf32>
    %51 = vector.extract_strided_slice %43 {offsets = [0, 64], sizes = [8, 32], strides = [1, 1]} : vector<8x96xf32> to vector<8x32xf32>
    %52 = math.tanh %50 : vector<8x32xf32>
    %53 = arith.mulf %51, %52 : vector<8x32xf32>
    %54 = arith.truncf %37 : vector<8x32xf32> to vector<8x32xbf16>
    %55 = arith.index_cast %c0_i32_10 : i32 to index
    %c0_17 = arith.constant 0 : index
    %c0_18 = arith.constant 0 : index
    %56 = vector.load %arg4[%55, %c0_17, %c0_18] : memref<8x8x32xbf16, #tpu.memory_space<vmem>>, vector<1x8x32xbf16>
    %57 = vector.shape_cast %56 : vector<1x8x32xbf16> to vector<8x32xbf16>
    %58 = vector.shape_cast %54 : vector<8x32xbf16> to vector<1x8x32xbf16>
    tpu.vector_store %arg4[%55, %c0_17, %c0_18], %58 {strides = array<i32>} : memref<8x8x32xbf16, #tpu.memory_space<vmem>>, vector<1x8x32xbf16>,
    %59 = arith.truncf %53 : vector<8x32xf32> to vector<8x32xbf16>
    %c7_i32_19 = arith.constant 7 : i32
    %60 = arith.subi %c7_i32_19, %c0_i32_10 : i32
    %61 = arith.index_cast %60 : i32 to index
    %c0_20 = arith.constant 0 : index
    %c0_21 = arith.constant 0 : index
    %62 = vector.load %arg5[%61, %c0_20, %c0_21] : memref<8x8x32xbf16, #tpu.memory_space<vmem>>, vector<1x8x32xbf16>
    %63 = vector.shape_cast %62 : vector<1x8x32xbf16> to vector<8x32xbf16>
    %64 = vector.shape_cast %59 : vector<8x32xbf16> to vector<1x8x32xbf16>
    tpu.vector_store %arg5[%61, %c0_20, %c0_21], %64 {strides = array<i32>} : memref<8x8x32xbf16, #tpu.memory_space<vmem>>, vector<1x8x32xbf16>,
    %c1_i32 = arith.constant 1 : i32
    %65 = tpu.concatenate %37, %53 in 1 : vector<8x32xf32>, vector<8x32xf32> -> vector<8x64xf32>
    %66 = arith.truncf %65 : vector<8x64xf32> to vector<8x64xbf16>
    %cst_22 = arith.constant dense<0.000000e+00> : vector<8x256xf32>
    %67 = tpu.matmul %66, %3, %cst_22 {dimension_numbers = #tpu.dot_dimension_numbers<[1], [0], [0], [1], [0, 0, 1, 1], [], []>} : vector<8x64xbf16>, vector<64x256xbf16>, vector<8x256xf32> -> vector<8x256xf32>
    %68 = arith.index_cast %c1_i32 : i32 to index
    %c0_23 = arith.constant 0 : index
    %c0_24 = arith.constant 0 : index
    %69 = vector.load %arg1[%68, %c0_23, %c0_24] : memref<8x8x128xf32, #tpu.memory_space<vmem>>, vector<1x8x128xf32>
    %70 = vector.shape_cast %69 : vector<1x8x128xf32> to vector<8x128xf32>
    %71 = vector.extract_strided_slice %67 {offsets = [0, 0], sizes = [8, 128], strides = [1, 1]} : vector<8x256xf32> to vector<8x128xf32>
    %72 = arith.addf %70, %71 : vector<8x128xf32>
    %c7_i32_25 = arith.constant 7 : i32
    %73 = arith.subi %c7_i32_25, %c1_i32 : i32
    %74 = arith.index_cast %73 : i32 to index
    %c0_26 = arith.constant 0 : index
    %c0_27 = arith.constant 0 : index
    %75 = vector.load %arg2[%74, %c0_26, %c0_27] : memref<8x8x128xf32, #tpu.memory_space<vmem>>, vector<1x8x128xf32>
    %76 = vector.shape_cast %75 : vector<1x8x128xf32> to vector<8x128xf32>
    %77 = vector.extract_strided_slice %67 {offsets = [0, 128], sizes = [8, 128], strides = [1, 1]} : vector<8x256xf32> to vector<8x128xf32>
    %78 = arith.addf %76, %77 : vector<8x128xf32>
    %79 = vector.extract_strided_slice %72 {offsets = [0, 0], sizes = [8, 96], strides = [1, 1]} : vector<8x128xf32> to vector<8x96xf32>
    %80 = arith.negf %79 : vector<8x96xf32>
    %81 = math.exp %80 : vector<8x96xf32>
    %cst_28 = arith.constant 1.000000e+00 : f32
    %82 = vector.broadcast %cst_28 : f32 to vector<8x96xf32>
    %83 = arith.addf %82, %81 : vector<8x96xf32>
    %84 = arith.divf %82, %83 : vector<8x96xf32>
    %85 = vector.extract_strided_slice %72 {offsets = [0, 96], sizes = [8, 32], strides = [1, 1]} : vector<8x128xf32> to vector<8x32xf32>
    %86 = math.tanh %85 : vector<8x32xf32>
    %87 = vector.extract_strided_slice %84 {offsets = [0, 32], sizes = [8, 32], strides = [1, 1]} : vector<8x96xf32> to vector<8x32xf32>
    %88 = arith.mulf %87, %34 : vector<8x32xf32>
    %89 = vector.extract_strided_slice %84 {offsets = [0, 0], sizes = [8, 32], strides = [1, 1]} : vector<8x96xf32> to vector<8x32xf32>
    %90 = arith.mulf %89, %86 : vector<8x32xf32>
    %91 = arith.addf %88, %90 : vector<8x32xf32>
    %92 = vector.extract_strided_slice %84 {offsets = [0, 64], sizes = [8, 32], strides = [1, 1]} : vector<8x96xf32> to vector<8x32xf32>
    %93 = math.tanh %91 : vector<8x32xf32>
    %94 = arith.mulf %92, %93 : vector<8x32xf32>
    %95 = vector.extract_strided_slice %78 {offsets = [0, 0], sizes = [8, 96], strides = [1, 1]} : vector<8x128xf32> to vector<8x96xf32>
    %96 = arith.negf %95 : vector<8x96xf32>
    %97 = math.exp %96 : vector<8x96xf32>
    %cst_29 = arith.constant 1.000000e+00 : f32
    %98 = vector.broadcast %cst_29 : f32 to vector<8x96xf32>
    %99 = arith.addf %98, %97 : vector<8x96xf32>
    %100 = arith.divf %98, %99 : vector<8x96xf32>
    %101 = vector.extract_strided_slice %78 {offsets = [0, 96], sizes = [8, 32], strides = [1, 1]} : vector<8x128xf32> to vector<8x32xf32>
    %102 = math.tanh %101 : vector<8x32xf32>
    %103 = vector.extract_strided_slice %100 {offsets = [0, 32], sizes = [8, 32], strides = [1, 1]} : vector<8x96xf32> to vector<8x32xf32>
    %104 = arith.mulf %103, %50 : vector<8x32xf32>
    %105 = vector.extract_strided_slice %100 {offsets = [0, 0], sizes = [8, 32], strides = [1, 1]} : vector<8x96xf32> to vector<8x32xf32>
    %106 = arith.mulf %105, %102 : vector<8x32xf32>
    %107 = arith.addf %104, %106 : vector<8x32xf32>
    %108 = vector.extract_strided_slice %100 {offsets = [0, 64], sizes = [8, 32], strides = [1, 1]} : vector<8x96xf32> to vector<8x32xf32>
    %109 = math.tanh %107 : vector<8x32xf32>
    %110 = arith.mulf %108, %109 : vector<8x32xf32>
    %111 = arith.truncf %94 : vector<8x32xf32> to vector<8x32xbf16>
    %112 = arith.index_cast %c1_i32 : i32 to index
    %c0_30 = arith.constant 0 : index
    %c0_31 = arith.constant 0 : index
    %113 = vector.load %arg4[%112, %c0_30, %c0_31] : memref<8x8x32xbf16, #tpu.memory_space<vmem>>, vector<1x8x32xbf16>
    %114 = vector.shape_cast %113 : vector<1x8x32xbf16> to vector<8x32xbf16>
    %115 = vector.shape_cast %111 : vector<8x32xbf16> to vector<1x8x32xbf16>
    tpu.vector_store %arg4[%112, %c0_30, %c0_31], %115 {strides = array<i32>} : memref<8x8x32xbf16, #tpu.memory_space<vmem>>, vector<1x8x32xbf16>,
    %116 = arith.truncf %110 : vector<8x32xf32> to vector<8x32xbf16>
    %c7_i32_32 = arith.constant 7 : i32
    %117 = arith.subi %c7_i32_32, %c1_i32 : i32
    %118 = arith.index_cast %117 : i32 to index
    %c0_33 = arith.constant 0 : index
    %c0_34 = arith.constant 0 : index
    %119 = vector.load %arg5[%118, %c0_33, %c0_34] : memref<8x8x32xbf16, #tpu.memory_space<vmem>>, vector<1x8x32xbf16>
    %120 = vector.shape_cast %119 : vector<1x8x32xbf16> to vector<8x32xbf16>
    %121 = vector.shape_cast %116 : vector<8x32xbf16> to vector<1x8x32xbf16>
    tpu.vector_store %arg5[%118, %c0_33, %c0_34], %121 {strides = array<i32>} : memref<8x8x32xbf16, #tpu.memory_space<vmem>>, vector<1x8x32xbf16>,
    %c2_i32 = arith.constant 2 : i32
    %122 = tpu.concatenate %94, %110 in 1 : vector<8x32xf32>, vector<8x32xf32> -> vector<8x64xf32>
    %123 = arith.truncf %122 : vector<8x64xf32> to vector<8x64xbf16>
    %cst_35 = arith.constant dense<0.000000e+00> : vector<8x256xf32>
    %124 = tpu.matmul %123, %3, %cst_35 {dimension_numbers = #tpu.dot_dimension_numbers<[1], [0], [0], [1], [0, 0, 1, 1], [], []>} : vector<8x64xbf16>, vector<64x256xbf16>, vector<8x256xf32> -> vector<8x256xf32>
    %125 = arith.index_cast %c2_i32 : i32 to index
    %c0_36 = arith.constant 0 : index
    %c0_37 = arith.constant 0 : index
    %126 = vector.load %arg1[%125, %c0_36, %c0_37] : memref<8x8x128xf32, #tpu.memory_space<vmem>>, vector<1x8x128xf32>
    %127 = vector.shape_cast %126 : vector<1x8x128xf32> to vector<8x128xf32>
    %128 = vector.extract_strided_slice %124 {offsets = [0, 0], sizes = [8, 128], strides = [1, 1]} : vector<8x256xf32> to vector<8x128xf32>
    %129 = arith.addf %127, %128 : vector<8x128xf32>
    %c7_i32_38 = arith.constant 7 : i32
    %130 = arith.subi %c7_i32_38, %c2_i32 : i32
    %131 = arith.index_cast %130 : i32 to index
    %c0_39 = arith.constant 0 : index
    %c0_40 = arith.constant 0 : index
    %132 = vector.load %arg2[%131, %c0_39, %c0_40] : memref<8x8x128xf32, #tpu.memory_space<vmem>>, vector<1x8x128xf32>
    %133 = vector.shape_cast %132 : vector<1x8x128xf32> to vector<8x128xf32>
    %134 = vector.extract_strided_slice %124 {offsets = [0, 128], sizes = [8, 128], strides = [1, 1]} : vector<8x256xf32> to vector<8x128xf32>
    %135 = arith.addf %133, %134 : vector<8x128xf32>
    %136 = vector.extract_strided_slice %129 {offsets = [0, 0], sizes = [8, 96], strides = [1, 1]} : vector<8x128xf32> to vector<8x96xf32>
    %137 = arith.negf %136 : vector<8x96xf32>
    %138 = math.exp %137 : vector<8x96xf32>
    %cst_41 = arith.constant 1.000000e+00 : f32
    %139 = vector.broadcast %cst_41 : f32 to vector<8x96xf32>
    %140 = arith.addf %139, %138 : vector<8x96xf32>
    %141 = arith.divf %139, %140 : vector<8x96xf32>
    %142 = vector.extract_strided_slice %129 {offsets = [0, 96], sizes = [8, 32], strides = [1, 1]} : vector<8x128xf32> to vector<8x32xf32>
    %143 = math.tanh %142 : vector<8x32xf32>
    %144 = vector.extract_strided_slice %141 {offsets = [0, 32], sizes = [8, 32], strides = [1, 1]} : vector<8x96xf32> to vector<8x32xf32>
    %145 = arith.mulf %144, %91 : vector<8x32xf32>
    %146 = vector.extract_strided_slice %141 {offsets = [0, 0], sizes = [8, 32], strides = [1, 1]} : vector<8x96xf32> to vector<8x32xf32>
    %147 = arith.mulf %146, %143 : vector<8x32xf32>
    %148 = arith.addf %145, %147 : vector<8x32xf32>
    %149 = vector.extract_strided_slice %141 {offsets = [0, 64], sizes = [8, 32], strides = [1, 1]} : vector<8x96xf32> to vector<8x32xf32>
    %150 = math.tanh %148 : vector<8x32xf32>
    %151 = arith.mulf %149, %150 : vector<8x32xf32>
    %152 = vector.extract_strided_slice %135 {offsets = [0, 0], sizes = [8, 96], strides = [1, 1]} : vector<8x128xf32> to vector<8x96xf32>
    %153 = arith.negf %152 : vector<8x96xf32>
    %154 = math.exp %153 : vector<8x96xf32>
    %cst_42 = arith.constant 1.000000e+00 : f32
    %155 = vector.broadcast %cst_42 : f32 to vector<8x96xf32>
    %156 = arith.addf %155, %154 : vector<8x96xf32>
    %157 = arith.divf %155, %156 : vector<8x96xf32>
    %158 = vector.extract_strided_slice %135 {offsets = [0, 96], sizes = [8, 32], strides = [1, 1]} : vector<8x128xf32> to vector<8x32xf32>
    %159 = math.tanh %158 : vector<8x32xf32>
    %160 = vector.extract_strided_slice %157 {offsets = [0, 32], sizes = [8, 32], strides = [1, 1]} : vector<8x96xf32> to vector<8x32xf32>
    %161 = arith.mulf %160, %107 : vector<8x32xf32>
    %162 = vector.extract_strided_slice %157 {offsets = [0, 0], sizes = [8, 32], strides = [1, 1]} : vector<8x96xf32> to vector<8x32xf32>
    %163 = arith.mulf %162, %159 : vector<8x32xf32>
    %164 = arith.addf %161, %163 : vector<8x32xf32>
    %165 = vector.extract_strided_slice %157 {offsets = [0, 64], sizes = [8, 32], strides = [1, 1]} : vector<8x96xf32> to vector<8x32xf32>
    %166 = math.tanh %164 : vector<8x32xf32>
    %167 = arith.mulf %165, %166 : vector<8x32xf32>
    %168 = arith.truncf %151 : vector<8x32xf32> to vector<8x32xbf16>
    %169 = arith.index_cast %c2_i32 : i32 to index
    %c0_43 = arith.constant 0 : index
    %c0_44 = arith.constant 0 : index
    %170 = vector.load %arg4[%169, %c0_43, %c0_44] : memref<8x8x32xbf16, #tpu.memory_space<vmem>>, vector<1x8x32xbf16>
    %171 = vector.shape_cast %170 : vector<1x8x32xbf16> to vector<8x32xbf16>
    %172 = vector.shape_cast %168 : vector<8x32xbf16> to vector<1x8x32xbf16>
    tpu.vector_store %arg4[%169, %c0_43, %c0_44], %172 {strides = array<i32>} : memref<8x8x32xbf16, #tpu.memory_space<vmem>>, vector<1x8x32xbf16>,
    %173 = arith.truncf %167 : vector<8x32xf32> to vector<8x32xbf16>
    %c7_i32_45 = arith.constant 7 : i32
    %174 = arith.subi %c7_i32_45, %c2_i32 : i32
    %175 = arith.index_cast %174 : i32 to index
    %c0_46 = arith.constant 0 : index
    %c0_47 = arith.constant 0 : index
    %176 = vector.load %arg5[%175, %c0_46, %c0_47] : memref<8x8x32xbf16, #tpu.memory_space<vmem>>, vector<1x8x32xbf16>
    %177 = vector.shape_cast %176 : vector<1x8x32xbf16> to vector<8x32xbf16>
    %178 = vector.shape_cast %173 : vector<8x32xbf16> to vector<1x8x32xbf16>
    tpu.vector_store %arg5[%175, %c0_46, %c0_47], %178 {strides = array<i32>} : memref<8x8x32xbf16, #tpu.memory_space<vmem>>, vector<1x8x32xbf16>,
    %c3_i32 = arith.constant 3 : i32
    %179 = tpu.concatenate %151, %167 in 1 : vector<8x32xf32>, vector<8x32xf32> -> vector<8x64xf32>
    %180 = arith.truncf %179 : vector<8x64xf32> to vector<8x64xbf16>
    %cst_48 = arith.constant dense<0.000000e+00> : vector<8x256xf32>
    %181 = tpu.matmul %180, %3, %cst_48 {dimension_numbers = #tpu.dot_dimension_numbers<[1], [0], [0], [1], [0, 0, 1, 1], [], []>} : vector<8x64xbf16>, vector<64x256xbf16>, vector<8x256xf32> -> vector<8x256xf32>
    %182 = arith.index_cast %c3_i32 : i32 to index
    %c0_49 = arith.constant 0 : index
    %c0_50 = arith.constant 0 : index
    %183 = vector.load %arg1[%182, %c0_49, %c0_50] : memref<8x8x128xf32, #tpu.memory_space<vmem>>, vector<1x8x128xf32>
    %184 = vector.shape_cast %183 : vector<1x8x128xf32> to vector<8x128xf32>
    %185 = vector.extract_strided_slice %181 {offsets = [0, 0], sizes = [8, 128], strides = [1, 1]} : vector<8x256xf32> to vector<8x128xf32>
    %186 = arith.addf %184, %185 : vector<8x128xf32>
    %c7_i32_51 = arith.constant 7 : i32
    %187 = arith.subi %c7_i32_51, %c3_i32 : i32
    %188 = arith.index_cast %187 : i32 to index
    %c0_52 = arith.constant 0 : index
    %c0_53 = arith.constant 0 : index
    %189 = vector.load %arg2[%188, %c0_52, %c0_53] : memref<8x8x128xf32, #tpu.memory_space<vmem>>, vector<1x8x128xf32>
    %190 = vector.shape_cast %189 : vector<1x8x128xf32> to vector<8x128xf32>
    %191 = vector.extract_strided_slice %181 {offsets = [0, 128], sizes = [8, 128], strides = [1, 1]} : vector<8x256xf32> to vector<8x128xf32>
    %192 = arith.addf %190, %191 : vector<8x128xf32>
    %193 = vector.extract_strided_slice %186 {offsets = [0, 0], sizes = [8, 96], strides = [1, 1]} : vector<8x128xf32> to vector<8x96xf32>
    %194 = arith.negf %193 : vector<8x96xf32>
    %195 = math.exp %194 : vector<8x96xf32>
    %cst_54 = arith.constant 1.000000e+00 : f32
    %196 = vector.broadcast %cst_54 : f32 to vector<8x96xf32>
    %197 = arith.addf %196, %195 : vector<8x96xf32>
    %198 = arith.divf %196, %197 : vector<8x96xf32>
    %199 = vector.extract_strided_slice %186 {offsets = [0, 96], sizes = [8, 32], strides = [1, 1]} : vector<8x128xf32> to vector<8x32xf32>
    %200 = math.tanh %199 : vector<8x32xf32>
    %201 = vector.extract_strided_slice %198 {offsets = [0, 32], sizes = [8, 32], strides = [1, 1]} : vector<8x96xf32> to vector<8x32xf32>
    %202 = arith.mulf %201, %148 : vector<8x32xf32>
    %203 = vector.extract_strided_slice %198 {offsets = [0, 0], sizes = [8, 32], strides = [1, 1]} : vector<8x96xf32> to vector<8x32xf32>
    %204 = arith.mulf %203, %200 : vector<8x32xf32>
    %205 = arith.addf %202, %204 : vector<8x32xf32>
    %206 = vector.extract_strided_slice %198 {offsets = [0, 64], sizes = [8, 32], strides = [1, 1]} : vector<8x96xf32> to vector<8x32xf32>
    %207 = math.tanh %205 : vector<8x32xf32>
    %208 = arith.mulf %206, %207 : vector<8x32xf32>
    %209 = vector.extract_strided_slice %192 {offsets = [0, 0], sizes = [8, 96], strides = [1, 1]} : vector<8x128xf32> to vector<8x96xf32>
    %210 = arith.negf %209 : vector<8x96xf32>
    %211 = math.exp %210 : vector<8x96xf32>
    %cst_55 = arith.constant 1.000000e+00 : f32
    %212 = vector.broadcast %cst_55 : f32 to vector<8x96xf32>
    %213 = arith.addf %212, %211 : vector<8x96xf32>
    %214 = arith.divf %212, %213 : vector<8x96xf32>
    %215 = vector.extract_strided_slice %192 {offsets = [0, 96], sizes = [8, 32], strides = [1, 1]} : vector<8x128xf32> to vector<8x32xf32>
    %216 = math.tanh %215 : vector<8x32xf32>
    %217 = vector.extract_strided_slice %214 {offsets = [0, 32], sizes = [8, 32], strides = [1, 1]} : vector<8x96xf32> to vector<8x32xf32>
    %218 = arith.mulf %217, %164 : vector<8x32xf32>
    %219 = vector.extract_strided_slice %214 {offsets = [0, 0], sizes = [8, 32], strides = [1, 1]} : vector<8x96xf32> to vector<8x32xf32>
    %220 = arith.mulf %219, %216 : vector<8x32xf32>
    %221 = arith.addf %218, %220 : vector<8x32xf32>
    %222 = vector.extract_strided_slice %214 {offsets = [0, 64], sizes = [8, 32], strides = [1, 1]} : vector<8x96xf32> to vector<8x32xf32>
    %223 = math.tanh %221 : vector<8x32xf32>
    %224 = arith.mulf %222, %223 : vector<8x32xf32>
    %225 = arith.truncf %208 : vector<8x32xf32> to vector<8x32xbf16>
    %226 = arith.index_cast %c3_i32 : i32 to index
    %c0_56 = arith.constant 0 : index
    %c0_57 = arith.constant 0 : index
    %227 = vector.load %arg4[%226, %c0_56, %c0_57] : memref<8x8x32xbf16, #tpu.memory_space<vmem>>, vector<1x8x32xbf16>
    %228 = vector.shape_cast %227 : vector<1x8x32xbf16> to vector<8x32xbf16>
    %229 = vector.shape_cast %225 : vector<8x32xbf16> to vector<1x8x32xbf16>
    tpu.vector_store %arg4[%226, %c0_56, %c0_57], %229 {strides = array<i32>} : memref<8x8x32xbf16, #tpu.memory_space<vmem>>, vector<1x8x32xbf16>,
    %230 = arith.truncf %224 : vector<8x32xf32> to vector<8x32xbf16>
    %c7_i32_58 = arith.constant 7 : i32
    %231 = arith.subi %c7_i32_58, %c3_i32 : i32
    %232 = arith.index_cast %231 : i32 to index
    %c0_59 = arith.constant 0 : index
    %c0_60 = arith.constant 0 : index
    %233 = vector.load %arg5[%232, %c0_59, %c0_60] : memref<8x8x32xbf16, #tpu.memory_space<vmem>>, vector<1x8x32xbf16>
    %234 = vector.shape_cast %233 : vector<1x8x32xbf16> to vector<8x32xbf16>
    %235 = vector.shape_cast %230 : vector<8x32xbf16> to vector<1x8x32xbf16>
    tpu.vector_store %arg5[%232, %c0_59, %c0_60], %235 {strides = array<i32>} : memref<8x8x32xbf16, #tpu.memory_space<vmem>>, vector<1x8x32xbf16>,
    %c4_i32 = arith.constant 4 : i32
    %236 = tpu.concatenate %208, %224 in 1 : vector<8x32xf32>, vector<8x32xf32> -> vector<8x64xf32>
    %237 = arith.truncf %236 : vector<8x64xf32> to vector<8x64xbf16>
    %cst_61 = arith.constant dense<0.000000e+00> : vector<8x256xf32>
    %238 = tpu.matmul %237, %3, %cst_61 {dimension_numbers = #tpu.dot_dimension_numbers<[1], [0], [0], [1], [0, 0, 1, 1], [], []>} : vector<8x64xbf16>, vector<64x256xbf16>, vector<8x256xf32> -> vector<8x256xf32>
    %239 = arith.index_cast %c4_i32 : i32 to index
    %c0_62 = arith.constant 0 : index
    %c0_63 = arith.constant 0 : index
    %240 = vector.load %arg1[%239, %c0_62, %c0_63] : memref<8x8x128xf32, #tpu.memory_space<vmem>>, vector<1x8x128xf32>
    %241 = vector.shape_cast %240 : vector<1x8x128xf32> to vector<8x128xf32>
    %242 = vector.extract_strided_slice %238 {offsets = [0, 0], sizes = [8, 128], strides = [1, 1]} : vector<8x256xf32> to vector<8x128xf32>
    %243 = arith.addf %241, %242 : vector<8x128xf32>
    %c7_i32_64 = arith.constant 7 : i32
    %244 = arith.subi %c7_i32_64, %c4_i32 : i32
    %245 = arith.index_cast %244 : i32 to index
    %c0_65 = arith.constant 0 : index
    %c0_66 = arith.constant 0 : index
    %246 = vector.load %arg2[%245, %c0_65, %c0_66] : memref<8x8x128xf32, #tpu.memory_space<vmem>>, vector<1x8x128xf32>
    %247 = vector.shape_cast %246 : vector<1x8x128xf32> to vector<8x128xf32>
    %248 = vector.extract_strided_slice %238 {offsets = [0, 128], sizes = [8, 128], strides = [1, 1]} : vector<8x256xf32> to vector<8x128xf32>
    %249 = arith.addf %247, %248 : vector<8x128xf32>
    %250 = vector.extract_strided_slice %243 {offsets = [0, 0], sizes = [8, 96], strides = [1, 1]} : vector<8x128xf32> to vector<8x96xf32>
    %251 = arith.negf %250 : vector<8x96xf32>
    %252 = math.exp %251 : vector<8x96xf32>
    %cst_67 = arith.constant 1.000000e+00 : f32
    %253 = vector.broadcast %cst_67 : f32 to vector<8x96xf32>
    %254 = arith.addf %253, %252 : vector<8x96xf32>
    %255 = arith.divf %253, %254 : vector<8x96xf32>
    %256 = vector.extract_strided_slice %243 {offsets = [0, 96], sizes = [8, 32], strides = [1, 1]} : vector<8x128xf32> to vector<8x32xf32>
    %257 = math.tanh %256 : vector<8x32xf32>
    %258 = vector.extract_strided_slice %255 {offsets = [0, 32], sizes = [8, 32], strides = [1, 1]} : vector<8x96xf32> to vector<8x32xf32>
    %259 = arith.mulf %258, %205 : vector<8x32xf32>
    %260 = vector.extract_strided_slice %255 {offsets = [0, 0], sizes = [8, 32], strides = [1, 1]} : vector<8x96xf32> to vector<8x32xf32>
    %261 = arith.mulf %260, %257 : vector<8x32xf32>
    %262 = arith.addf %259, %261 : vector<8x32xf32>
    %263 = vector.extract_strided_slice %255 {offsets = [0, 64], sizes = [8, 32], strides = [1, 1]} : vector<8x96xf32> to vector<8x32xf32>
    %264 = math.tanh %262 : vector<8x32xf32>
    %265 = arith.mulf %263, %264 : vector<8x32xf32>
    %266 = vector.extract_strided_slice %249 {offsets = [0, 0], sizes = [8, 96], strides = [1, 1]} : vector<8x128xf32> to vector<8x96xf32>
    %267 = arith.negf %266 : vector<8x96xf32>
    %268 = math.exp %267 : vector<8x96xf32>
    %cst_68 = arith.constant 1.000000e+00 : f32
    %269 = vector.broadcast %cst_68 : f32 to vector<8x96xf32>
    %270 = arith.addf %269, %268 : vector<8x96xf32>
    %271 = arith.divf %269, %270 : vector<8x96xf32>
    %272 = vector.extract_strided_slice %249 {offsets = [0, 96], sizes = [8, 32], strides = [1, 1]} : vector<8x128xf32> to vector<8x32xf32>
    %273 = math.tanh %272 : vector<8x32xf32>
    %274 = vector.extract_strided_slice %271 {offsets = [0, 32], sizes = [8, 32], strides = [1, 1]} : vector<8x96xf32> to vector<8x32xf32>
    %275 = arith.mulf %274, %221 : vector<8x32xf32>
    %276 = vector.extract_strided_slice %271 {offsets = [0, 0], sizes = [8, 32], strides = [1, 1]} : vector<8x96xf32> to vector<8x32xf32>
    %277 = arith.mulf %276, %273 : vector<8x32xf32>
    %278 = arith.addf %275, %277 : vector<8x32xf32>
    %279 = vector.extract_strided_slice %271 {offsets = [0, 64], sizes = [8, 32], strides = [1, 1]} : vector<8x96xf32> to vector<8x32xf32>
    %280 = math.tanh %278 : vector<8x32xf32>
    %281 = arith.mulf %279, %280 : vector<8x32xf32>
    %282 = arith.truncf %265 : vector<8x32xf32> to vector<8x32xbf16>
    %283 = arith.index_cast %c4_i32 : i32 to index
    %c0_69 = arith.constant 0 : index
    %c0_70 = arith.constant 0 : index
    %284 = vector.load %arg4[%283, %c0_69, %c0_70] : memref<8x8x32xbf16, #tpu.memory_space<vmem>>, vector<1x8x32xbf16>
    %285 = vector.shape_cast %284 : vector<1x8x32xbf16> to vector<8x32xbf16>
    %286 = vector.shape_cast %282 : vector<8x32xbf16> to vector<1x8x32xbf16>
    tpu.vector_store %arg4[%283, %c0_69, %c0_70], %286 {strides = array<i32>} : memref<8x8x32xbf16, #tpu.memory_space<vmem>>, vector<1x8x32xbf16>,
    %287 = arith.truncf %281 : vector<8x32xf32> to vector<8x32xbf16>
    %c7_i32_71 = arith.constant 7 : i32
    %288 = arith.subi %c7_i32_71, %c4_i32 : i32
    %289 = arith.index_cast %288 : i32 to index
    %c0_72 = arith.constant 0 : index
    %c0_73 = arith.constant 0 : index
    %290 = vector.load %arg5[%289, %c0_72, %c0_73] : memref<8x8x32xbf16, #tpu.memory_space<vmem>>, vector<1x8x32xbf16>
    %291 = vector.shape_cast %290 : vector<1x8x32xbf16> to vector<8x32xbf16>
    %292 = vector.shape_cast %287 : vector<8x32xbf16> to vector<1x8x32xbf16>
    tpu.vector_store %arg5[%289, %c0_72, %c0_73], %292 {strides = array<i32>} : memref<8x8x32xbf16, #tpu.memory_space<vmem>>, vector<1x8x32xbf16>,
    %c5_i32 = arith.constant 5 : i32
    %293 = tpu.concatenate %265, %281 in 1 : vector<8x32xf32>, vector<8x32xf32> -> vector<8x64xf32>
    %294 = arith.truncf %293 : vector<8x64xf32> to vector<8x64xbf16>
    %cst_74 = arith.constant dense<0.000000e+00> : vector<8x256xf32>
    %295 = tpu.matmul %294, %3, %cst_74 {dimension_numbers = #tpu.dot_dimension_numbers<[1], [0], [0], [1], [0, 0, 1, 1], [], []>} : vector<8x64xbf16>, vector<64x256xbf16>, vector<8x256xf32> -> vector<8x256xf32>
    %296 = arith.index_cast %c5_i32 : i32 to index
    %c0_75 = arith.constant 0 : index
    %c0_76 = arith.constant 0 : index
    %297 = vector.load %arg1[%296, %c0_75, %c0_76] : memref<8x8x128xf32, #tpu.memory_space<vmem>>, vector<1x8x128xf32>
    %298 = vector.shape_cast %297 : vector<1x8x128xf32> to vector<8x128xf32>
    %299 = vector.extract_strided_slice %295 {offsets = [0, 0], sizes = [8, 128], strides = [1, 1]} : vector<8x256xf32> to vector<8x128xf32>
    %300 = arith.addf %298, %299 : vector<8x128xf32>
    %c7_i32_77 = arith.constant 7 : i32
    %301 = arith.subi %c7_i32_77, %c5_i32 : i32
    %302 = arith.index_cast %301 : i32 to index
    %c0_78 = arith.constant 0 : index
    %c0_79 = arith.constant 0 : index
    %303 = vector.load %arg2[%302, %c0_78, %c0_79] : memref<8x8x128xf32, #tpu.memory_space<vmem>>, vector<1x8x128xf32>
    %304 = vector.shape_cast %303 : vector<1x8x128xf32> to vector<8x128xf32>
    %305 = vector.extract_strided_slice %295 {offsets = [0, 128], sizes = [8, 128], strides = [1, 1]} : vector<8x256xf32> to vector<8x128xf32>
    %306 = arith.addf %304, %305 : vector<8x128xf32>
    %307 = vector.extract_strided_slice %300 {offsets = [0, 0], sizes = [8, 96], strides = [1, 1]} : vector<8x128xf32> to vector<8x96xf32>
    %308 = arith.negf %307 : vector<8x96xf32>
    %309 = math.exp %308 : vector<8x96xf32>
    %cst_80 = arith.constant 1.000000e+00 : f32
    %310 = vector.broadcast %cst_80 : f32 to vector<8x96xf32>
    %311 = arith.addf %310, %309 : vector<8x96xf32>
    %312 = arith.divf %310, %311 : vector<8x96xf32>
    %313 = vector.extract_strided_slice %300 {offsets = [0, 96], sizes = [8, 32], strides = [1, 1]} : vector<8x128xf32> to vector<8x32xf32>
    %314 = math.tanh %313 : vector<8x32xf32>
    %315 = vector.extract_strided_slice %312 {offsets = [0, 32], sizes = [8, 32], strides = [1, 1]} : vector<8x96xf32> to vector<8x32xf32>
    %316 = arith.mulf %315, %262 : vector<8x32xf32>
    %317 = vector.extract_strided_slice %312 {offsets = [0, 0], sizes = [8, 32], strides = [1, 1]} : vector<8x96xf32> to vector<8x32xf32>
    %318 = arith.mulf %317, %314 : vector<8x32xf32>
    %319 = arith.addf %316, %318 : vector<8x32xf32>
    %320 = vector.extract_strided_slice %312 {offsets = [0, 64], sizes = [8, 32], strides = [1, 1]} : vector<8x96xf32> to vector<8x32xf32>
    %321 = math.tanh %319 : vector<8x32xf32>
    %322 = arith.mulf %320, %321 : vector<8x32xf32>
    %323 = vector.extract_strided_slice %306 {offsets = [0, 0], sizes = [8, 96], strides = [1, 1]} : vector<8x128xf32> to vector<8x96xf32>
    %324 = arith.negf %323 : vector<8x96xf32>
    %325 = math.exp %324 : vector<8x96xf32>
    %cst_81 = arith.constant 1.000000e+00 : f32
    %326 = vector.broadcast %cst_81 : f32 to vector<8x96xf32>
    %327 = arith.addf %326, %325 : vector<8x96xf32>
    %328 = arith.divf %326, %327 : vector<8x96xf32>
    %329 = vector.extract_strided_slice %306 {offsets = [0, 96], sizes = [8, 32], strides = [1, 1]} : vector<8x128xf32> to vector<8x32xf32>
    %330 = math.tanh %329 : vector<8x32xf32>
    %331 = vector.extract_strided_slice %328 {offsets = [0, 32], sizes = [8, 32], strides = [1, 1]} : vector<8x96xf32> to vector<8x32xf32>
    %332 = arith.mulf %331, %278 : vector<8x32xf32>
    %333 = vector.extract_strided_slice %328 {offsets = [0, 0], sizes = [8, 32], strides = [1, 1]} : vector<8x96xf32> to vector<8x32xf32>
    %334 = arith.mulf %333, %330 : vector<8x32xf32>
    %335 = arith.addf %332, %334 : vector<8x32xf32>
    %336 = vector.extract_strided_slice %328 {offsets = [0, 64], sizes = [8, 32], strides = [1, 1]} : vector<8x96xf32> to vector<8x32xf32>
    %337 = math.tanh %335 : vector<8x32xf32>
    %338 = arith.mulf %336, %337 : vector<8x32xf32>
    %339 = arith.truncf %322 : vector<8x32xf32> to vector<8x32xbf16>
    %340 = arith.index_cast %c5_i32 : i32 to index
    %c0_82 = arith.constant 0 : index
    %c0_83 = arith.constant 0 : index
    %341 = vector.load %arg4[%340, %c0_82, %c0_83] : memref<8x8x32xbf16, #tpu.memory_space<vmem>>, vector<1x8x32xbf16>
    %342 = vector.shape_cast %341 : vector<1x8x32xbf16> to vector<8x32xbf16>
    %343 = vector.shape_cast %339 : vector<8x32xbf16> to vector<1x8x32xbf16>
    tpu.vector_store %arg4[%340, %c0_82, %c0_83], %343 {strides = array<i32>} : memref<8x8x32xbf16, #tpu.memory_space<vmem>>, vector<1x8x32xbf16>,
    %344 = arith.truncf %338 : vector<8x32xf32> to vector<8x32xbf16>
    %c7_i32_84 = arith.constant 7 : i32
    %345 = arith.subi %c7_i32_84, %c5_i32 : i32
    %346 = arith.index_cast %345 : i32 to index
    %c0_85 = arith.constant 0 : index
    %c0_86 = arith.constant 0 : index
    %347 = vector.load %arg5[%346, %c0_85, %c0_86] : memref<8x8x32xbf16, #tpu.memory_space<vmem>>, vector<1x8x32xbf16>
    %348 = vector.shape_cast %347 : vector<1x8x32xbf16> to vector<8x32xbf16>
    %349 = vector.shape_cast %344 : vector<8x32xbf16> to vector<1x8x32xbf16>
    tpu.vector_store %arg5[%346, %c0_85, %c0_86], %349 {strides = array<i32>} : memref<8x8x32xbf16, #tpu.memory_space<vmem>>, vector<1x8x32xbf16>,
    %c6_i32 = arith.constant 6 : i32
    %350 = tpu.concatenate %322, %338 in 1 : vector<8x32xf32>, vector<8x32xf32> -> vector<8x64xf32>
    %351 = arith.truncf %350 : vector<8x64xf32> to vector<8x64xbf16>
    %cst_87 = arith.constant dense<0.000000e+00> : vector<8x256xf32>
    %352 = tpu.matmul %351, %3, %cst_87 {dimension_numbers = #tpu.dot_dimension_numbers<[1], [0], [0], [1], [0, 0, 1, 1], [], []>} : vector<8x64xbf16>, vector<64x256xbf16>, vector<8x256xf32> -> vector<8x256xf32>
    %353 = arith.index_cast %c6_i32 : i32 to index
    %c0_88 = arith.constant 0 : index
    %c0_89 = arith.constant 0 : index
    %354 = vector.load %arg1[%353, %c0_88, %c0_89] : memref<8x8x128xf32, #tpu.memory_space<vmem>>, vector<1x8x128xf32>
    %355 = vector.shape_cast %354 : vector<1x8x128xf32> to vector<8x128xf32>
    %356 = vector.extract_strided_slice %352 {offsets = [0, 0], sizes = [8, 128], strides = [1, 1]} : vector<8x256xf32> to vector<8x128xf32>
    %357 = arith.addf %355, %356 : vector<8x128xf32>
    %c7_i32_90 = arith.constant 7 : i32
    %358 = arith.subi %c7_i32_90, %c6_i32 : i32
    %359 = arith.index_cast %358 : i32 to index
    %c0_91 = arith.constant 0 : index
    %c0_92 = arith.constant 0 : index
    %360 = vector.load %arg2[%359, %c0_91, %c0_92] : memref<8x8x128xf32, #tpu.memory_space<vmem>>, vector<1x8x128xf32>
    %361 = vector.shape_cast %360 : vector<1x8x128xf32> to vector<8x128xf32>
    %362 = vector.extract_strided_slice %352 {offsets = [0, 128], sizes = [8, 128], strides = [1, 1]} : vector<8x256xf32> to vector<8x128xf32>
    %363 = arith.addf %361, %362 : vector<8x128xf32>
    %364 = vector.extract_strided_slice %357 {offsets = [0, 0], sizes = [8, 96], strides = [1, 1]} : vector<8x128xf32> to vector<8x96xf32>
    %365 = arith.negf %364 : vector<8x96xf32>
    %366 = math.exp %365 : vector<8x96xf32>
    %cst_93 = arith.constant 1.000000e+00 : f32
    %367 = vector.broadcast %cst_93 : f32 to vector<8x96xf32>
    %368 = arith.addf %367, %366 : vector<8x96xf32>
    %369 = arith.divf %367, %368 : vector<8x96xf32>
    %370 = vector.extract_strided_slice %357 {offsets = [0, 96], sizes = [8, 32], strides = [1, 1]} : vector<8x128xf32> to vector<8x32xf32>
    %371 = math.tanh %370 : vector<8x32xf32>
    %372 = vector.extract_strided_slice %369 {offsets = [0, 32], sizes = [8, 32], strides = [1, 1]} : vector<8x96xf32> to vector<8x32xf32>
    %373 = arith.mulf %372, %319 : vector<8x32xf32>
    %374 = vector.extract_strided_slice %369 {offsets = [0, 0], sizes = [8, 32], strides = [1, 1]} : vector<8x96xf32> to vector<8x32xf32>
    %375 = arith.mulf %374, %371 : vector<8x32xf32>
    %376 = arith.addf %373, %375 : vector<8x32xf32>
    %377 = vector.extract_strided_slice %369 {offsets = [0, 64], sizes = [8, 32], strides = [1, 1]} : vector<8x96xf32> to vector<8x32xf32>
    %378 = math.tanh %376 : vector<8x32xf32>
    %379 = arith.mulf %377, %378 : vector<8x32xf32>
    %380 = vector.extract_strided_slice %363 {offsets = [0, 0], sizes = [8, 96], strides = [1, 1]} : vector<8x128xf32> to vector<8x96xf32>
    %381 = arith.negf %380 : vector<8x96xf32>
    %382 = math.exp %381 : vector<8x96xf32>
    %cst_94 = arith.constant 1.000000e+00 : f32
    %383 = vector.broadcast %cst_94 : f32 to vector<8x96xf32>
    %384 = arith.addf %383, %382 : vector<8x96xf32>
    %385 = arith.divf %383, %384 : vector<8x96xf32>
    %386 = vector.extract_strided_slice %363 {offsets = [0, 96], sizes = [8, 32], strides = [1, 1]} : vector<8x128xf32> to vector<8x32xf32>
    %387 = math.tanh %386 : vector<8x32xf32>
    %388 = vector.extract_strided_slice %385 {offsets = [0, 32], sizes = [8, 32], strides = [1, 1]} : vector<8x96xf32> to vector<8x32xf32>
    %389 = arith.mulf %388, %335 : vector<8x32xf32>
    %390 = vector.extract_strided_slice %385 {offsets = [0, 0], sizes = [8, 32], strides = [1, 1]} : vector<8x96xf32> to vector<8x32xf32>
    %391 = arith.mulf %390, %387 : vector<8x32xf32>
    %392 = arith.addf %389, %391 : vector<8x32xf32>
    %393 = vector.extract_strided_slice %385 {offsets = [0, 64], sizes = [8, 32], strides = [1, 1]} : vector<8x96xf32> to vector<8x32xf32>
    %394 = math.tanh %392 : vector<8x32xf32>
    %395 = arith.mulf %393, %394 : vector<8x32xf32>
    %396 = arith.truncf %379 : vector<8x32xf32> to vector<8x32xbf16>
    %397 = arith.index_cast %c6_i32 : i32 to index
    %c0_95 = arith.constant 0 : index
    %c0_96 = arith.constant 0 : index
    %398 = vector.load %arg4[%397, %c0_95, %c0_96] : memref<8x8x32xbf16, #tpu.memory_space<vmem>>, vector<1x8x32xbf16>
    %399 = vector.shape_cast %398 : vector<1x8x32xbf16> to vector<8x32xbf16>
    %400 = vector.shape_cast %396 : vector<8x32xbf16> to vector<1x8x32xbf16>
    tpu.vector_store %arg4[%397, %c0_95, %c0_96], %400 {strides = array<i32>} : memref<8x8x32xbf16, #tpu.memory_space<vmem>>, vector<1x8x32xbf16>,
    %401 = arith.truncf %395 : vector<8x32xf32> to vector<8x32xbf16>
    %c7_i32_97 = arith.constant 7 : i32
    %402 = arith.subi %c7_i32_97, %c6_i32 : i32
    %403 = arith.index_cast %402 : i32 to index
    %c0_98 = arith.constant 0 : index
    %c0_99 = arith.constant 0 : index
    %404 = vector.load %arg5[%403, %c0_98, %c0_99] : memref<8x8x32xbf16, #tpu.memory_space<vmem>>, vector<1x8x32xbf16>
    %405 = vector.shape_cast %404 : vector<1x8x32xbf16> to vector<8x32xbf16>
    %406 = vector.shape_cast %401 : vector<8x32xbf16> to vector<1x8x32xbf16>
    tpu.vector_store %arg5[%403, %c0_98, %c0_99], %406 {strides = array<i32>} : memref<8x8x32xbf16, #tpu.memory_space<vmem>>, vector<1x8x32xbf16>,
    %c7_i32_100 = arith.constant 7 : i32
    %407 = tpu.concatenate %379, %395 in 1 : vector<8x32xf32>, vector<8x32xf32> -> vector<8x64xf32>
    %408 = arith.truncf %407 : vector<8x64xf32> to vector<8x64xbf16>
    %cst_101 = arith.constant dense<0.000000e+00> : vector<8x256xf32>
    %409 = tpu.matmul %408, %3, %cst_101 {dimension_numbers = #tpu.dot_dimension_numbers<[1], [0], [0], [1], [0, 0, 1, 1], [], []>} : vector<8x64xbf16>, vector<64x256xbf16>, vector<8x256xf32> -> vector<8x256xf32>
    %410 = arith.index_cast %c7_i32_100 : i32 to index
    %c0_102 = arith.constant 0 : index
    %c0_103 = arith.constant 0 : index
    %411 = vector.load %arg1[%410, %c0_102, %c0_103] : memref<8x8x128xf32, #tpu.memory_space<vmem>>, vector<1x8x128xf32>
    %412 = vector.shape_cast %411 : vector<1x8x128xf32> to vector<8x128xf32>
    %413 = vector.extract_strided_slice %409 {offsets = [0, 0], sizes = [8, 128], strides = [1, 1]} : vector<8x256xf32> to vector<8x128xf32>
    %414 = arith.addf %412, %413 : vector<8x128xf32>
    %c7_i32_104 = arith.constant 7 : i32
    %415 = arith.subi %c7_i32_104, %c7_i32_100 : i32
    %416 = arith.index_cast %415 : i32 to index
    %c0_105 = arith.constant 0 : index
    %c0_106 = arith.constant 0 : index
    %417 = vector.load %arg2[%416, %c0_105, %c0_106] : memref<8x8x128xf32, #tpu.memory_space<vmem>>, vector<1x8x128xf32>
    %418 = vector.shape_cast %417 : vector<1x8x128xf32> to vector<8x128xf32>
    %419 = vector.extract_strided_slice %409 {offsets = [0, 128], sizes = [8, 128], strides = [1, 1]} : vector<8x256xf32> to vector<8x128xf32>
    %420 = arith.addf %418, %419 : vector<8x128xf32>
    %421 = vector.extract_strided_slice %414 {offsets = [0, 0], sizes = [8, 96], strides = [1, 1]} : vector<8x128xf32> to vector<8x96xf32>
    %422 = arith.negf %421 : vector<8x96xf32>
    %423 = math.exp %422 : vector<8x96xf32>
    %cst_107 = arith.constant 1.000000e+00 : f32
    %424 = vector.broadcast %cst_107 : f32 to vector<8x96xf32>
    %425 = arith.addf %424, %423 : vector<8x96xf32>
    %426 = arith.divf %424, %425 : vector<8x96xf32>
    %427 = vector.extract_strided_slice %414 {offsets = [0, 96], sizes = [8, 32], strides = [1, 1]} : vector<8x128xf32> to vector<8x32xf32>
    %428 = math.tanh %427 : vector<8x32xf32>
    %429 = vector.extract_strided_slice %426 {offsets = [0, 32], sizes = [8, 32], strides = [1, 1]} : vector<8x96xf32> to vector<8x32xf32>
    %430 = arith.mulf %429, %376 : vector<8x32xf32>
    %431 = vector.extract_strided_slice %426 {offsets = [0, 0], sizes = [8, 32], strides = [1, 1]} : vector<8x96xf32> to vector<8x32xf32>
    %432 = arith.mulf %431, %428 : vector<8x32xf32>
    %433 = arith.addf %430, %432 : vector<8x32xf32>
    %434 = vector.extract_strided_slice %426 {offsets = [0, 64], sizes = [8, 32], strides = [1, 1]} : vector<8x96xf32> to vector<8x32xf32>
    %435 = math.tanh %433 : vector<8x32xf32>
    %436 = arith.mulf %434, %435 : vector<8x32xf32>
    %437 = vector.extract_strided_slice %420 {offsets = [0, 0], sizes = [8, 96], strides = [1, 1]} : vector<8x128xf32> to vector<8x96xf32>
    %438 = arith.negf %437 : vector<8x96xf32>
    %439 = math.exp %438 : vector<8x96xf32>
    %cst_108 = arith.constant 1.000000e+00 : f32
    %440 = vector.broadcast %cst_108 : f32 to vector<8x96xf32>
    %441 = arith.addf %440, %439 : vector<8x96xf32>
    %442 = arith.divf %440, %441 : vector<8x96xf32>
    %443 = vector.extract_strided_slice %420 {offsets = [0, 96], sizes = [8, 32], strides = [1, 1]} : vector<8x128xf32> to vector<8x32xf32>
    %444 = math.tanh %443 : vector<8x32xf32>
    %445 = vector.extract_strided_slice %442 {offsets = [0, 32], sizes = [8, 32], strides = [1, 1]} : vector<8x96xf32> to vector<8x32xf32>
    %446 = arith.mulf %445, %392 : vector<8x32xf32>
    %447 = vector.extract_strided_slice %442 {offsets = [0, 0], sizes = [8, 32], strides = [1, 1]} : vector<8x96xf32> to vector<8x32xf32>
    %448 = arith.mulf %447, %444 : vector<8x32xf32>
    %449 = arith.addf %446, %448 : vector<8x32xf32>
    %450 = vector.extract_strided_slice %442 {offsets = [0, 64], sizes = [8, 32], strides = [1, 1]} : vector<8x96xf32> to vector<8x32xf32>
    %451 = math.tanh %449 : vector<8x32xf32>
    %452 = arith.mulf %450, %451 : vector<8x32xf32>
    %453 = arith.truncf %436 : vector<8x32xf32> to vector<8x32xbf16>
    %454 = arith.index_cast %c7_i32_100 : i32 to index
    %c0_109 = arith.constant 0 : index
    %c0_110 = arith.constant 0 : index
    %455 = vector.load %arg4[%454, %c0_109, %c0_110] : memref<8x8x32xbf16, #tpu.memory_space<vmem>>, vector<1x8x32xbf16>
    %456 = vector.shape_cast %455 : vector<1x8x32xbf16> to vector<8x32xbf16>
    %457 = vector.shape_cast %453 : vector<8x32xbf16> to vector<1x8x32xbf16>
    tpu.vector_store %arg4[%454, %c0_109, %c0_110], %457 {strides = array<i32>} : memref<8x8x32xbf16, #tpu.memory_space<vmem>>, vector<1x8x32xbf16>,
    %458 = arith.truncf %452 : vector<8x32xf32> to vector<8x32xbf16>
    %c7_i32_111 = arith.constant 7 : i32
    %459 = arith.subi %c7_i32_111, %c7_i32_100 : i32
    %460 = arith.index_cast %459 : i32 to index
    %c0_112 = arith.constant 0 : index
    %c0_113 = arith.constant 0 : index
    %461 = vector.load %arg5[%460, %c0_112, %c0_113] : memref<8x8x32xbf16, #tpu.memory_space<vmem>>, vector<1x8x32xbf16>
    %462 = vector.shape_cast %461 : vector<1x8x32xbf16> to vector<8x32xbf16>
    %463 = vector.shape_cast %458 : vector<8x32xbf16> to vector<1x8x32xbf16>
    tpu.vector_store %arg5[%460, %c0_112, %c0_113], %463 {strides = array<i32>} : memref<8x8x32xbf16, #tpu.memory_space<vmem>>, vector<1x8x32xbf16>,
    %c8_i32 = arith.constant 8 : i32
    %c0_114 = arith.constant 0 : index
    %c0_115 = arith.constant 0 : index
    %464 = vector.load %arg6[%c0_114, %c0_115] : memref<8x32xf32, #tpu.memory_space<vmem>>, vector<8x32xf32>
    tpu.vector_store %arg6[%c0_114, %c0_115], %436 {strides = array<i32>} : memref<8x32xf32, #tpu.memory_space<vmem>>, vector<8x32xf32>,
    %c0_116 = arith.constant 0 : index
    %c0_117 = arith.constant 0 : index
    %465 = vector.load %arg7[%c0_116, %c0_117] : memref<8x32xf32, #tpu.memory_space<vmem>>, vector<8x32xf32>
    tpu.vector_store %arg7[%c0_116, %c0_117], %452 {strides = array<i32>} : memref<8x32xf32, #tpu.memory_space<vmem>>, vector<8x32xf32>,
    %c0_118 = arith.constant 0 : index
    %c0_119 = arith.constant 0 : index
    %466 = vector.load %arg8[%c0_118, %c0_119] : memref<8x32xf32, #tpu.memory_space<vmem>>, vector<8x32xf32>
    tpu.vector_store %arg8[%c0_118, %c0_119], %433 {strides = array<i32>} : memref<8x32xf32, #tpu.memory_space<vmem>>, vector<8x32xf32>,
    %c0_120 = arith.constant 0 : index
    %c0_121 = arith.constant 0 : index
    %467 = vector.load %arg9[%c0_120, %c0_121] : memref<8x32xf32, #tpu.memory_space<vmem>>, vector<8x32xf32>
    tpu.vector_store %arg9[%c0_120, %c0_121], %449 {strides = array<i32>} : memref<8x32xf32, #tpu.memory_space<vmem>>, vector<8x32xf32>,
    return
  }
  func.func @transform_0(%arg0: i32) -> (i32, i32, i32) {
    %c0_i32 = arith.constant 0 : i32
    %c0_i32_0 = arith.constant 0 : i32
    %c0_i32_1 = arith.constant 0 : i32
    return %arg0, %c0_i32, %c0_i32_0 : i32, i32, i32
  }
  func.func @transform_1(%arg0: i32) -> (i32, i32, i32) {
    %c0_i32 = arith.constant 0 : i32
    %0 = arith.subi %c0_i32, %arg0 : i32
    %c0_i32_0 = arith.constant 0 : i32
    %c1_i32 = arith.constant 1 : i32
    %c0_i32_1 = arith.constant 0 : i32
    return %0, %c0_i32_0, %c1_i32 : i32, i32, i32
  }
  func.func @transform_2(%arg0: i32) -> (i32, i32) {
    %c0_i32 = arith.constant 0 : i32
    %c0_i32_0 = arith.constant 0 : i32
    %c0_i32_1 = arith.constant 0 : i32
    return %c0_i32, %c0_i32_0 : i32, i32
  }
  func.func @transform_3(%arg0: i32) -> (i32, i32, i32) {
    %c0_i32 = arith.constant 0 : i32
    %c0_i32_0 = arith.constant 0 : i32
    %c0_i32_1 = arith.constant 0 : i32
    return %arg0, %c0_i32, %c0_i32_0 : i32, i32, i32
  }
  func.func @transform_4(%arg0: i32) -> (i32, i32, i32) {
    %c0_i32 = arith.constant 0 : i32
    %0 = arith.subi %c0_i32, %arg0 : i32
    %c0_i32_0 = arith.constant 0 : i32
    %c0_i32_1 = arith.constant 0 : i32
    %c0_i32_2 = arith.constant 0 : i32
    return %0, %c0_i32_0, %c0_i32_1 : i32, i32, i32
  }
}

module attributes {stable_mosaic.version = 11 : i64} {
  func.func @_linear_chain_kernel(%arg0: i32, %arg1: memref<64x32xbf16, #tpu.memory_space<vmem>>, %arg2: memref<64x32xbf16, #tpu.memory_space<vmem>>, %arg3: memref<32x256xbf16, #tpu.memory_space<vmem>>, %arg4: memref<32x256xbf16, #tpu.memory_space<vmem>>, %arg5: memref<1x256xf32, #tpu.memory_space<vmem>>, %arg6: memref<64x256xf32, #tpu.memory_space<vmem>>) attributes {dimension_semantics = [#tpu.dimension_semantics<parallel>], iteration_bounds = array<i64: 1>, scalar_prefetch = 0 : i64, scratch_operands = 0 : i64, tpu.core_type = #tpu.core_type<tc>, window_params = [{transform_indices = @transform_0, window_bounds = array<i64: 64, 32>}, {transform_indices = @transform_1, window_bounds = array<i64: 64, 32>}, {pipeline_mode = #tpu.pipeline_mode<synchronous>, transform_indices = @transform_2, window_bounds = array<i64: 32, 256>}, {pipeline_mode = #tpu.pipeline_mode<synchronous>, transform_indices = @transform_3, window_bounds = array<i64: 32, 256>}, {pipeline_mode = #tpu.pipeline_mode<synchronous>, transform_indices = @transform_4, window_bounds = array<i64: 1, 256>}, {transform_indices = @transform_5, window_bounds = array<i64: 64, 256>}]} {
    %c0 = arith.constant 0 : index
    %c0_0 = arith.constant 0 : index
    %0 = vector.load %arg1[%c0, %c0_0] : memref<64x32xbf16, #tpu.memory_space<vmem>>, vector<64x32xbf16>
    %c0_1 = arith.constant 0 : index
    %c0_2 = arith.constant 0 : index
    %1 = vector.load %arg3[%c0_1, %c0_2] : memref<32x256xbf16, #tpu.memory_space<vmem>>, vector<32x256xbf16>
    %cst = arith.constant dense<0.000000e+00> : vector<64x256xf32>
    %2 = tpu.matmul %0, %1, %cst {dimension_numbers = #tpu.dot_dimension_numbers<[1], [0], [0], [1], [0, 0, 1, 1], [], []>} : vector<64x32xbf16>, vector<32x256xbf16>, vector<64x256xf32> -> vector<64x256xf32>
    %c0_3 = arith.constant 0 : index
    %c0_4 = arith.constant 0 : index
    %3 = vector.load %arg2[%c0_3, %c0_4] : memref<64x32xbf16, #tpu.memory_space<vmem>>, vector<64x32xbf16>
    %c0_5 = arith.constant 0 : index
    %c0_6 = arith.constant 0 : index
    %4 = vector.load %arg4[%c0_5, %c0_6] : memref<32x256xbf16, #tpu.memory_space<vmem>>, vector<32x256xbf16>
    %cst_7 = arith.constant dense<0.000000e+00> : vector<64x256xf32>
    %5 = tpu.matmul %3, %4, %cst_7 {dimension_numbers = #tpu.dot_dimension_numbers<[1], [0], [0], [1], [0, 0, 1, 1], [], []>} : vector<64x32xbf16>, vector<32x256xbf16>, vector<64x256xf32> -> vector<64x256xf32>
    %6 = arith.addf %2, %5 : vector<64x256xf32>
    %c0_8 = arith.constant 0 : index
    %c0_9 = arith.constant 0 : index
    %7 = vector.load %arg5[%c0_8, %c0_9] : memref<1x256xf32, #tpu.memory_space<vmem>>, vector<1x256xf32>
    %8 = vector.broadcast %7 : vector<1x256xf32> to vector<64x256xf32>
    %9 = arith.addf %6, %8 : vector<64x256xf32>
    %c0_10 = arith.constant 0 : index
    %c0_11 = arith.constant 0 : index
    %10 = vector.load %arg6[%c0_10, %c0_11] : memref<64x256xf32, #tpu.memory_space<vmem>>, vector<64x256xf32>
    tpu.vector_store %arg6[%c0_10, %c0_11], %9 {strides = array<i32>} : memref<64x256xf32, #tpu.memory_space<vmem>>, vector<64x256xf32>,
    return
  }
  func.func @transform_0(%arg0: i32) -> (i32, i32) {
    %c0_i32 = arith.constant 0 : i32
    %c0_i32_0 = arith.constant 0 : i32
    return %arg0, %c0_i32 : i32, i32
  }
  func.func @transform_1(%arg0: i32) -> (i32, i32) {
    %c0_i32 = arith.constant 0 : i32
    %c0_i32_0 = arith.constant 0 : i32
    return %arg0, %c0_i32 : i32, i32
  }
  func.func @transform_2(%arg0: i32) -> (i32, i32) {
    %c0_i32 = arith.constant 0 : i32
    %c0_i32_0 = arith.constant 0 : i32
    %c0_i32_1 = arith.constant 0 : i32
    return %c0_i32, %c0_i32_0 : i32, i32
  }
  func.func @transform_3(%arg0: i32) -> (i32, i32) {
    %c0_i32 = arith.constant 0 : i32
    %c0_i32_0 = arith.constant 0 : i32
    %c0_i32_1 = arith.constant 0 : i32
    return %c0_i32, %c0_i32_0 : i32, i32
  }
  func.func @transform_4(%arg0: i32) -> (i32, i32) {
    %c0_i32 = arith.constant 0 : i32
    %c0_i32_0 = arith.constant 0 : i32
    %c0_i32_1 = arith.constant 0 : i32
    return %c0_i32, %c0_i32_0 : i32, i32
  }
  func.func @transform_5(%arg0: i32) -> (i32, i32) {
    %c0_i32 = arith.constant 0 : i32
    %c0_i32_0 = arith.constant 0 : i32
    return %arg0, %c0_i32 : i32, i32
  }
}

module attributes {stable_mosaic.version = 11 : i64} {
  func.func @_bilstm_chunk_kernel(%arg0: i32, %arg1: memref<8x8x128xf32, #tpu.memory_space<vmem>>, %arg2: memref<8x8x128xf32, #tpu.memory_space<vmem>>, %arg3: memref<64x256xbf16, #tpu.memory_space<vmem>>, %arg4: memref<8x8x32xbf16, #tpu.memory_space<vmem>>, %arg5: memref<8x8x32xbf16, #tpu.memory_space<vmem>>, %arg6: memref<8x32xf32, #tpu.memory_space<vmem>>, %arg7: memref<8x32xf32, #tpu.memory_space<vmem>>, %arg8: memref<8x32xf32, #tpu.memory_space<vmem>>, %arg9: memref<8x32xf32, #tpu.memory_space<vmem>>) attributes {dimension_semantics = [#tpu.dimension_semantics<arbitrary>], iteration_bounds = array<i64: 1>, scalar_prefetch = 0 : i64, scratch_operands = 4 : i64, tpu.core_type = #tpu.core_type<tc>, window_params = [{transform_indices = @transform_0, window_bounds = array<i64: 8, 8, 128>}, {transform_indices = @transform_1, window_bounds = array<i64: 8, 8, 128>}, {pipeline_mode = #tpu.pipeline_mode<synchronous>, transform_indices = @transform_2, window_bounds = array<i64: 64, 256>}, {transform_indices = @transform_3, window_bounds = array<i64: 8, 8, 32>}, {transform_indices = @transform_4, window_bounds = array<i64: 8, 8, 32>}]} {
    %c0_i32 = arith.constant 0 : i32
    %0 = arith.cmpi eq, %arg0, %c0_i32 : i32
    %1 = arith.extui %0 : i1 to i32
    %c0_i32_0 = arith.constant 0 : i32
    %2 = arith.cmpi ne, %1, %c0_i32_0 : i32
    scf.if %2 {
      %cst_122 = arith.constant 0.000000e+00 : f32
      %468 = vector.broadcast %cst_122 : f32 to vector<8x32xf32>
      %c0_123 = arith.constant 0 : index
      %c0_124 = arith.constant 0 : index
      %469 = vector.load %arg6[%c0_123, %c0_124] : memref<8x32xf32, #tpu.memory_space<vmem>>, vector<8x32xf32>
      tpu.vector_store %arg6[%c0_123, %c0_124], %468 {strides = array<i32>} : memref<8x32xf32, #tpu.memory_space<vmem>>, vector<8x32xf32>,
      %cst_125 = arith.constant 0.000000e+00 : f32
      %470 = vector.broadcast %cst_125 : f32 to vector<8x32xf32>
      %c0_126 = arith.constant 0 : index
      %c0_127 = arith.constant 0 : index
      %471 = vector.load %arg7[%c0_126, %c0_127] : memref<8x32xf32, #tpu.memory_space<vmem>>, vector<8x32xf32>
      tpu.vector_store %arg7[%c0_126, %c0_127], %470 {strides = array<i32>} : memref<8x32xf32, #tpu.memory_space<vmem>>, vector<8x32xf32>,
      %cst_128 = arith.constant 0.000000e+00 : f32
      %472 = vector.broadcast %cst_128 : f32 to vector<8x32xf32>
      %c0_129 = arith.constant 0 : index
      %c0_130 = arith.constant 0 : index
      %473 = vector.load %arg8[%c0_129, %c0_130] : memref<8x32xf32, #tpu.memory_space<vmem>>, vector<8x32xf32>
      tpu.vector_store %arg8[%c0_129, %c0_130], %472 {strides = array<i32>} : memref<8x32xf32, #tpu.memory_space<vmem>>, vector<8x32xf32>,
      %cst_131 = arith.constant 0.000000e+00 : f32
      %474 = vector.broadcast %cst_131 : f32 to vector<8x32xf32>
      %c0_132 = arith.constant 0 : index
      %c0_133 = arith.constant 0 : index
      %475 = vector.load %arg9[%c0_132, %c0_133] : memref<8x32xf32, #tpu.memory_space<vmem>>, vector<8x32xf32>
      tpu.vector_store %arg9[%c0_132, %c0_133], %474 {strides = array<i32>} : memref<8x32xf32, #tpu.memory_space<vmem>>, vector<8x32xf32>,
    } else {
    }
    %c0 = arith.constant 0 : index
    %c0_1 = arith.constant 0 : index
    %3 = vector.load %arg3[%c0, %c0_1] : memref<64x256xbf16, #tpu.memory_space<vmem>>, vector<64x256xbf16>
    %c0_2 = arith.constant 0 : index
    %c0_3 = arith.constant 0 : index
    %4 = vector.load %arg6[%c0_2, %c0_3] : memref<8x32xf32, #tpu.memory_space<vmem>>, vector<8x32xf32>
    %c0_4 = arith.constant 0 : index
    %c0_5 = arith.constant 0 : index
    %5 = vector.load %arg7[%c0_4, %c0_5] : memref<8x32xf32, #tpu.memory_space<vmem>>, vector<8x32xf32>
    %c0_6 = arith.constant 0 : index
    %c0_7 = arith.constant 0 : index
    %6 = vector.load %arg8[%c0_6, %c0_7] : memref<8x32xf32, #tpu.memory_space<vmem>>, vector<8x32xf32>
    %c0_8 = arith.constant 0 : index
    %c0_9 = arith.constant 0 : index
    %7 = vector.load %arg9[%c0_8, %c0_9] : memref<8x32xf32, #tpu.memory_space<vmem>>, vector<8x32xf32>
    %c0_i32_10 = arith.constant 0 : i32
    %8 = tpu.concatenate %4, %5 in 1 : vector<8x32xf32>, vector<8x32xf32> -> vector<8x64xf32>
    %9 = arith.truncf %8 : vector<8x64xf32> to vector<8x64xbf16>
    %cst = arith.constant dense<0.000000e+00> : vector<8x256xf32>
    %10 = tpu.matmul %9, %3, %cst {dimension_numbers = #tpu.dot_dimension_numbers<[1], [0], [0], [1], [0, 0, 1, 1], [], []>} : vector<8x64xbf16>, vector<64x256xbf16>, vector<8x256xf32> -> vector<8x256xf32>
    %11 = arith.index_cast %c0_i32_10 : i32 to index
    %c0_11 = arith.constant 0 : index
    %c0_12 = arith.constant 0 : index
    %12 = vector.load %arg1[%11, %c0_11, %c0_12] : memref<8x8x128xf32, #tpu.memory_space<vmem>>, vector<1x8x128xf32>
    %13 = vector.shape_cast %12 : vector<1x8x128xf32> to vector<8x128xf32>
    %14 = vector.extract_strided_slice %10 {offsets = [0, 0], sizes = [8, 128], strides = [1, 1]} : vector<8x256xf32> to vector<8x128xf32>
    %15 = arith.addf %13, %14 : vector<8x128xf32>
    %c7_i32 = arith.constant 7 : i32
    %16 = arith.subi %c7_i32, %c0_i32_10 : i32
    %17 = arith.index_cast %16 : i32 to index
    %c0_13 = arith.constant 0 : index
    %c0_14 = arith.constant 0 : index
    %18 = vector.load %arg2[%17, %c0_13, %c0_14] : memref<8x8x128xf32, #tpu.memory_space<vmem>>, vector<1x8x128xf32>
    %19 = vector.shape_cast %18 : vector<1x8x128xf32> to vector<8x128xf32>
    %20 = vector.extract_strided_slice %10 {offsets = [0, 128], sizes = [8, 128], strides = [1, 1]} : vector<8x256xf32> to vector<8x128xf32>
    %21 = arith.addf %19, %20 : vector<8x128xf32>
    %22 = vector.extract_strided_slice %15 {offsets = [0, 0], sizes = [8, 96], strides = [1, 1]} : vector<8x128xf32> to vector<8x96xf32>
    %23 = arith.negf %22 : vector<8x96xf32>
    %24 = math.exp %23 : vector<8x96xf32>
    %cst_15 = arith.constant 1.000000e+00 : f32
    %25 = vector.broadcast %cst_15 : f32 to vector<8x96xf32>
    %26 = arith.addf %25, %24 : vector<8x96xf32>
    %27 = arith.divf %25, %26 : vector<8x96xf32>
    %28 = vector.extract_strided_slice %15 {offsets = [0, 96], sizes = [8, 32], strides = [1, 1]} : vector<8x128xf32> to vector<8x32xf32>
    %29 = math.tanh %28 : vector<8x32xf32>
    %30 = vector.extract_strided_slice %27 {offsets = [0, 32], sizes = [8, 32], strides = [1, 1]} : vector<8x96xf32> to vector<8x32xf32>
    %31 = arith.mulf %30, %6 : vector<8x32xf32>
    %32 = vector.extract_strided_slice %27 {offsets = [0, 0], sizes = [8, 32], strides = [1, 1]} : vector<8x96xf32> to vector<8x32xf32>
    %33 = arith.mulf %32, %29 : vector<8x32xf32>
    %34 = arith.addf %31, %33 : vector<8x32xf32>
    %35 = vector.extract_strided_slice %27 {offsets = [0, 64], sizes = [8, 32], strides = [1, 1]} : vector<8x96xf32> to vector<8x32xf32>
    %36 = math.tanh %34 : vector<8x32xf32>
    %37 = arith.mulf %35, %36 : vector<8x32xf32>
    %38 = vector.extract_strided_slice %21 {offsets = [0, 0], sizes = [8, 96], strides = [1, 1]} : vector<8x128xf32> to vector<8x96xf32>
    %39 = arith.negf %38 : vector<8x96xf32>
    %40 = math.exp %39 : vector<8x96xf32>
    %cst_16 = arith.constant 1.000000e+00 : f32
    %41 = vector.broadcast %cst_16 : f32 to vector<8x96xf32>
    %42 = arith.addf %41, %40 : vector<8x96xf32>
    %43 = arith.divf %41, %42 : vector<8x96xf32>
    %44 = vector.extract_strided_slice %21 {offsets = [0, 96], sizes = [8, 32], strides = [1, 1]} : vector<8x128xf32> to vector<8x32xf32>
    %45 = math.tanh %44 : vector<8x32xf32>
    %46 = vector.extract_strided_slice %43 {offsets = [0, 32], sizes = [8, 32], strides = [1, 1]} : vector<8x96xf32> to vector<8x32xf32>
    %47 = arith.mulf %46, %7 : vector<8x32xf32>
    %48 = vector.extract_strided_slice %43 {offsets = [0, 0], sizes = [8, 32], strides = [1, 1]} : vector<8x96xf32> to vector<8x32xf32>
    %49 = arith.mulf %48, %45 : vector<8x32xf32>
    %50 = arith.addf %47, %49 : vector<8x32xf32>
    %51 = vector.extract_strided_slice %43 {offsets = [0, 64], sizes = [8, 32], strides = [1, 1]} : vector<8x96xf32> to vector<8x32xf32>
    %52 = math.tanh %50 : vector<8x32xf32>
    %53 = arith.mulf %51, %52 : vector<8x32xf32>
    %54 = arith.truncf %37 : vector<8x32xf32> to vector<8x32xbf16>
    %55 = arith.index_cast %c0_i32_10 : i32 to index
    %c0_17 = arith.constant 0 : index
    %c0_18 = arith.constant 0 : index
    %56 = vector.load %arg4[%55, %c0_17, %c0_18] : memref<8x8x32xbf16, #tpu.memory_space<vmem>>, vector<1x8x32xbf16>
    %57 = vector.shape_cast %56 : vector<1x8x32xbf16> to vector<8x32xbf16>
    %58 = vector.shape_cast %54 : vector<8x32xbf16> to vector<1x8x32xbf16>
    tpu.vector_store %arg4[%55, %c0_17, %c0_18], %58 {strides = array<i32>} : memref<8x8x32xbf16, #tpu.memory_space<vmem>>, vector<1x8x32xbf16>,
    %59 = arith.truncf %53 : vector<8x32xf32> to vector<8x32xbf16>
    %c7_i32_19 = arith.constant 7 : i32
    %60 = arith.subi %c7_i32_19, %c0_i32_10 : i32
    %61 = arith.index_cast %60 : i32 to index
    %c0_20 = arith.constant 0 : index
    %c0_21 = arith.constant 0 : index
    %62 = vector.load %arg5[%61, %c0_20, %c0_21] : memref<8x8x32xbf16, #tpu.memory_space<vmem>>, vector<1x8x32xbf16>
    %63 = vector.shape_cast %62 : vector<1x8x32xbf16> to vector<8x32xbf16>
    %64 = vector.shape_cast %59 : vector<8x32xbf16> to vector<1x8x32xbf16>
    tpu.vector_store %arg5[%61, %c0_20, %c0_21], %64 {strides = array<i32>} : memref<8x8x32xbf16, #tpu.memory_space<vmem>>, vector<1x8x32xbf16>,
    %c1_i32 = arith.constant 1 : i32
    %65 = tpu.concatenate %37, %53 in 1 : vector<8x32xf32>, vector<8x32xf32> -> vector<8x64xf32>
    %66 = arith.truncf %65 : vector<8x64xf32> to vector<8x64xbf16>
    %cst_22 = arith.constant dense<0.000000e+00> : vector<8x256xf32>
    %67 = tpu.matmul %66, %3, %cst_22 {dimension_numbers = #tpu.dot_dimension_numbers<[1], [0], [0], [1], [0, 0, 1, 1], [], []>} : vector<8x64xbf16>, vector<64x256xbf16>, vector<8x256xf32> -> vector<8x256xf32>
    %68 = arith.index_cast %c1_i32 : i32 to index
    %c0_23 = arith.constant 0 : index
    %c0_24 = arith.constant 0 : index
    %69 = vector.load %arg1[%68, %c0_23, %c0_24] : memref<8x8x128xf32, #tpu.memory_space<vmem>>, vector<1x8x128xf32>
    %70 = vector.shape_cast %69 : vector<1x8x128xf32> to vector<8x128xf32>
    %71 = vector.extract_strided_slice %67 {offsets = [0, 0], sizes = [8, 128], strides = [1, 1]} : vector<8x256xf32> to vector<8x128xf32>
    %72 = arith.addf %70, %71 : vector<8x128xf32>
    %c7_i32_25 = arith.constant 7 : i32
    %73 = arith.subi %c7_i32_25, %c1_i32 : i32
    %74 = arith.index_cast %73 : i32 to index
    %c0_26 = arith.constant 0 : index
    %c0_27 = arith.constant 0 : index
    %75 = vector.load %arg2[%74, %c0_26, %c0_27] : memref<8x8x128xf32, #tpu.memory_space<vmem>>, vector<1x8x128xf32>
    %76 = vector.shape_cast %75 : vector<1x8x128xf32> to vector<8x128xf32>
    %77 = vector.extract_strided_slice %67 {offsets = [0, 128], sizes = [8, 128], strides = [1, 1]} : vector<8x256xf32> to vector<8x128xf32>
    %78 = arith.addf %76, %77 : vector<8x128xf32>
    %79 = vector.extract_strided_slice %72 {offsets = [0, 0], sizes = [8, 96], strides = [1, 1]} : vector<8x128xf32> to vector<8x96xf32>
    %80 = arith.negf %79 : vector<8x96xf32>
    %81 = math.exp %80 : vector<8x96xf32>
    %cst_28 = arith.constant 1.000000e+00 : f32
    %82 = vector.broadcast %cst_28 : f32 to vector<8x96xf32>
    %83 = arith.addf %82, %81 : vector<8x96xf32>
    %84 = arith.divf %82, %83 : vector<8x96xf32>
    %85 = vector.extract_strided_slice %72 {offsets = [0, 96], sizes = [8, 32], strides = [1, 1]} : vector<8x128xf32> to vector<8x32xf32>
    %86 = math.tanh %85 : vector<8x32xf32>
    %87 = vector.extract_strided_slice %84 {offsets = [0, 32], sizes = [8, 32], strides = [1, 1]} : vector<8x96xf32> to vector<8x32xf32>
    %88 = arith.mulf %87, %34 : vector<8x32xf32>
    %89 = vector.extract_strided_slice %84 {offsets = [0, 0], sizes = [8, 32], strides = [1, 1]} : vector<8x96xf32> to vector<8x32xf32>
    %90 = arith.mulf %89, %86 : vector<8x32xf32>
    %91 = arith.addf %88, %90 : vector<8x32xf32>
    %92 = vector.extract_strided_slice %84 {offsets = [0, 64], sizes = [8, 32], strides = [1, 1]} : vector<8x96xf32> to vector<8x32xf32>
    %93 = math.tanh %91 : vector<8x32xf32>
    %94 = arith.mulf %92, %93 : vector<8x32xf32>
    %95 = vector.extract_strided_slice %78 {offsets = [0, 0], sizes = [8, 96], strides = [1, 1]} : vector<8x128xf32> to vector<8x96xf32>
    %96 = arith.negf %95 : vector<8x96xf32>
    %97 = math.exp %96 : vector<8x96xf32>
    %cst_29 = arith.constant 1.000000e+00 : f32
    %98 = vector.broadcast %cst_29 : f32 to vector<8x96xf32>
    %99 = arith.addf %98, %97 : vector<8x96xf32>
    %100 = arith.divf %98, %99 : vector<8x96xf32>
    %101 = vector.extract_strided_slice %78 {offsets = [0, 96], sizes = [8, 32], strides = [1, 1]} : vector<8x128xf32> to vector<8x32xf32>
    %102 = math.tanh %101 : vector<8x32xf32>
    %103 = vector.extract_strided_slice %100 {offsets = [0, 32], sizes = [8, 32], strides = [1, 1]} : vector<8x96xf32> to vector<8x32xf32>
    %104 = arith.mulf %103, %50 : vector<8x32xf32>
    %105 = vector.extract_strided_slice %100 {offsets = [0, 0], sizes = [8, 32], strides = [1, 1]} : vector<8x96xf32> to vector<8x32xf32>
    %106 = arith.mulf %105, %102 : vector<8x32xf32>
    %107 = arith.addf %104, %106 : vector<8x32xf32>
    %108 = vector.extract_strided_slice %100 {offsets = [0, 64], sizes = [8, 32], strides = [1, 1]} : vector<8x96xf32> to vector<8x32xf32>
    %109 = math.tanh %107 : vector<8x32xf32>
    %110 = arith.mulf %108, %109 : vector<8x32xf32>
    %111 = arith.truncf %94 : vector<8x32xf32> to vector<8x32xbf16>
    %112 = arith.index_cast %c1_i32 : i32 to index
    %c0_30 = arith.constant 0 : index
    %c0_31 = arith.constant 0 : index
    %113 = vector.load %arg4[%112, %c0_30, %c0_31] : memref<8x8x32xbf16, #tpu.memory_space<vmem>>, vector<1x8x32xbf16>
    %114 = vector.shape_cast %113 : vector<1x8x32xbf16> to vector<8x32xbf16>
    %115 = vector.shape_cast %111 : vector<8x32xbf16> to vector<1x8x32xbf16>
    tpu.vector_store %arg4[%112, %c0_30, %c0_31], %115 {strides = array<i32>} : memref<8x8x32xbf16, #tpu.memory_space<vmem>>, vector<1x8x32xbf16>,
    %116 = arith.truncf %110 : vector<8x32xf32> to vector<8x32xbf16>
    %c7_i32_32 = arith.constant 7 : i32
    %117 = arith.subi %c7_i32_32, %c1_i32 : i32
    %118 = arith.index_cast %117 : i32 to index
    %c0_33 = arith.constant 0 : index
    %c0_34 = arith.constant 0 : index
    %119 = vector.load %arg5[%118, %c0_33, %c0_34] : memref<8x8x32xbf16, #tpu.memory_space<vmem>>, vector<1x8x32xbf16>
    %120 = vector.shape_cast %119 : vector<1x8x32xbf16> to vector<8x32xbf16>
    %121 = vector.shape_cast %116 : vector<8x32xbf16> to vector<1x8x32xbf16>
    tpu.vector_store %arg5[%118, %c0_33, %c0_34], %121 {strides = array<i32>} : memref<8x8x32xbf16, #tpu.memory_space<vmem>>, vector<1x8x32xbf16>,
    %c2_i32 = arith.constant 2 : i32
    %122 = tpu.concatenate %94, %110 in 1 : vector<8x32xf32>, vector<8x32xf32> -> vector<8x64xf32>
    %123 = arith.truncf %122 : vector<8x64xf32> to vector<8x64xbf16>
    %cst_35 = arith.constant dense<0.000000e+00> : vector<8x256xf32>
    %124 = tpu.matmul %123, %3, %cst_35 {dimension_numbers = #tpu.dot_dimension_numbers<[1], [0], [0], [1], [0, 0, 1, 1], [], []>} : vector<8x64xbf16>, vector<64x256xbf16>, vector<8x256xf32> -> vector<8x256xf32>
    %125 = arith.index_cast %c2_i32 : i32 to index
    %c0_36 = arith.constant 0 : index
    %c0_37 = arith.constant 0 : index
    %126 = vector.load %arg1[%125, %c0_36, %c0_37] : memref<8x8x128xf32, #tpu.memory_space<vmem>>, vector<1x8x128xf32>
    %127 = vector.shape_cast %126 : vector<1x8x128xf32> to vector<8x128xf32>
    %128 = vector.extract_strided_slice %124 {offsets = [0, 0], sizes = [8, 128], strides = [1, 1]} : vector<8x256xf32> to vector<8x128xf32>
    %129 = arith.addf %127, %128 : vector<8x128xf32>
    %c7_i32_38 = arith.constant 7 : i32
    %130 = arith.subi %c7_i32_38, %c2_i32 : i32
    %131 = arith.index_cast %130 : i32 to index
    %c0_39 = arith.constant 0 : index
    %c0_40 = arith.constant 0 : index
    %132 = vector.load %arg2[%131, %c0_39, %c0_40] : memref<8x8x128xf32, #tpu.memory_space<vmem>>, vector<1x8x128xf32>
    %133 = vector.shape_cast %132 : vector<1x8x128xf32> to vector<8x128xf32>
    %134 = vector.extract_strided_slice %124 {offsets = [0, 128], sizes = [8, 128], strides = [1, 1]} : vector<8x256xf32> to vector<8x128xf32>
    %135 = arith.addf %133, %134 : vector<8x128xf32>
    %136 = vector.extract_strided_slice %129 {offsets = [0, 0], sizes = [8, 96], strides = [1, 1]} : vector<8x128xf32> to vector<8x96xf32>
    %137 = arith.negf %136 : vector<8x96xf32>
    %138 = math.exp %137 : vector<8x96xf32>
    %cst_41 = arith.constant 1.000000e+00 : f32
    %139 = vector.broadcast %cst_41 : f32 to vector<8x96xf32>
    %140 = arith.addf %139, %138 : vector<8x96xf32>
    %141 = arith.divf %139, %140 : vector<8x96xf32>
    %142 = vector.extract_strided_slice %129 {offsets = [0, 96], sizes = [8, 32], strides = [1, 1]} : vector<8x128xf32> to vector<8x32xf32>
    %143 = math.tanh %142 : vector<8x32xf32>
    %144 = vector.extract_strided_slice %141 {offsets = [0, 32], sizes = [8, 32], strides = [1, 1]} : vector<8x96xf32> to vector<8x32xf32>
    %145 = arith.mulf %144, %91 : vector<8x32xf32>
    %146 = vector.extract_strided_slice %141 {offsets = [0, 0], sizes = [8, 32], strides = [1, 1]} : vector<8x96xf32> to vector<8x32xf32>
    %147 = arith.mulf %146, %143 : vector<8x32xf32>
    %148 = arith.addf %145, %147 : vector<8x32xf32>
    %149 = vector.extract_strided_slice %141 {offsets = [0, 64], sizes = [8, 32], strides = [1, 1]} : vector<8x96xf32> to vector<8x32xf32>
    %150 = math.tanh %148 : vector<8x32xf32>
    %151 = arith.mulf %149, %150 : vector<8x32xf32>
    %152 = vector.extract_strided_slice %135 {offsets = [0, 0], sizes = [8, 96], strides = [1, 1]} : vector<8x128xf32> to vector<8x96xf32>
    %153 = arith.negf %152 : vector<8x96xf32>
    %154 = math.exp %153 : vector<8x96xf32>
    %cst_42 = arith.constant 1.000000e+00 : f32
    %155 = vector.broadcast %cst_42 : f32 to vector<8x96xf32>
    %156 = arith.addf %155, %154 : vector<8x96xf32>
    %157 = arith.divf %155, %156 : vector<8x96xf32>
    %158 = vector.extract_strided_slice %135 {offsets = [0, 96], sizes = [8, 32], strides = [1, 1]} : vector<8x128xf32> to vector<8x32xf32>
    %159 = math.tanh %158 : vector<8x32xf32>
    %160 = vector.extract_strided_slice %157 {offsets = [0, 32], sizes = [8, 32], strides = [1, 1]} : vector<8x96xf32> to vector<8x32xf32>
    %161 = arith.mulf %160, %107 : vector<8x32xf32>
    %162 = vector.extract_strided_slice %157 {offsets = [0, 0], sizes = [8, 32], strides = [1, 1]} : vector<8x96xf32> to vector<8x32xf32>
    %163 = arith.mulf %162, %159 : vector<8x32xf32>
    %164 = arith.addf %161, %163 : vector<8x32xf32>
    %165 = vector.extract_strided_slice %157 {offsets = [0, 64], sizes = [8, 32], strides = [1, 1]} : vector<8x96xf32> to vector<8x32xf32>
    %166 = math.tanh %164 : vector<8x32xf32>
    %167 = arith.mulf %165, %166 : vector<8x32xf32>
    %168 = arith.truncf %151 : vector<8x32xf32> to vector<8x32xbf16>
    %169 = arith.index_cast %c2_i32 : i32 to index
    %c0_43 = arith.constant 0 : index
    %c0_44 = arith.constant 0 : index
    %170 = vector.load %arg4[%169, %c0_43, %c0_44] : memref<8x8x32xbf16, #tpu.memory_space<vmem>>, vector<1x8x32xbf16>
    %171 = vector.shape_cast %170 : vector<1x8x32xbf16> to vector<8x32xbf16>
    %172 = vector.shape_cast %168 : vector<8x32xbf16> to vector<1x8x32xbf16>
    tpu.vector_store %arg4[%169, %c0_43, %c0_44], %172 {strides = array<i32>} : memref<8x8x32xbf16, #tpu.memory_space<vmem>>, vector<1x8x32xbf16>,
    %173 = arith.truncf %167 : vector<8x32xf32> to vector<8x32xbf16>
    %c7_i32_45 = arith.constant 7 : i32
    %174 = arith.subi %c7_i32_45, %c2_i32 : i32
    %175 = arith.index_cast %174 : i32 to index
    %c0_46 = arith.constant 0 : index
    %c0_47 = arith.constant 0 : index
    %176 = vector.load %arg5[%175, %c0_46, %c0_47] : memref<8x8x32xbf16, #tpu.memory_space<vmem>>, vector<1x8x32xbf16>
    %177 = vector.shape_cast %176 : vector<1x8x32xbf16> to vector<8x32xbf16>
    %178 = vector.shape_cast %173 : vector<8x32xbf16> to vector<1x8x32xbf16>
    tpu.vector_store %arg5[%175, %c0_46, %c0_47], %178 {strides = array<i32>} : memref<8x8x32xbf16, #tpu.memory_space<vmem>>, vector<1x8x32xbf16>,
    %c3_i32 = arith.constant 3 : i32
    %179 = tpu.concatenate %151, %167 in 1 : vector<8x32xf32>, vector<8x32xf32> -> vector<8x64xf32>
    %180 = arith.truncf %179 : vector<8x64xf32> to vector<8x64xbf16>
    %cst_48 = arith.constant dense<0.000000e+00> : vector<8x256xf32>
    %181 = tpu.matmul %180, %3, %cst_48 {dimension_numbers = #tpu.dot_dimension_numbers<[1], [0], [0], [1], [0, 0, 1, 1], [], []>} : vector<8x64xbf16>, vector<64x256xbf16>, vector<8x256xf32> -> vector<8x256xf32>
    %182 = arith.index_cast %c3_i32 : i32 to index
    %c0_49 = arith.constant 0 : index
    %c0_50 = arith.constant 0 : index
    %183 = vector.load %arg1[%182, %c0_49, %c0_50] : memref<8x8x128xf32, #tpu.memory_space<vmem>>, vector<1x8x128xf32>
    %184 = vector.shape_cast %183 : vector<1x8x128xf32> to vector<8x128xf32>
    %185 = vector.extract_strided_slice %181 {offsets = [0, 0], sizes = [8, 128], strides = [1, 1]} : vector<8x256xf32> to vector<8x128xf32>
    %186 = arith.addf %184, %185 : vector<8x128xf32>
    %c7_i32_51 = arith.constant 7 : i32
    %187 = arith.subi %c7_i32_51, %c3_i32 : i32
    %188 = arith.index_cast %187 : i32 to index
    %c0_52 = arith.constant 0 : index
    %c0_53 = arith.constant 0 : index
    %189 = vector.load %arg2[%188, %c0_52, %c0_53] : memref<8x8x128xf32, #tpu.memory_space<vmem>>, vector<1x8x128xf32>
    %190 = vector.shape_cast %189 : vector<1x8x128xf32> to vector<8x128xf32>
    %191 = vector.extract_strided_slice %181 {offsets = [0, 128], sizes = [8, 128], strides = [1, 1]} : vector<8x256xf32> to vector<8x128xf32>
    %192 = arith.addf %190, %191 : vector<8x128xf32>
    %193 = vector.extract_strided_slice %186 {offsets = [0, 0], sizes = [8, 96], strides = [1, 1]} : vector<8x128xf32> to vector<8x96xf32>
    %194 = arith.negf %193 : vector<8x96xf32>
    %195 = math.exp %194 : vector<8x96xf32>
    %cst_54 = arith.constant 1.000000e+00 : f32
    %196 = vector.broadcast %cst_54 : f32 to vector<8x96xf32>
    %197 = arith.addf %196, %195 : vector<8x96xf32>
    %198 = arith.divf %196, %197 : vector<8x96xf32>
    %199 = vector.extract_strided_slice %186 {offsets = [0, 96], sizes = [8, 32], strides = [1, 1]} : vector<8x128xf32> to vector<8x32xf32>
    %200 = math.tanh %199 : vector<8x32xf32>
    %201 = vector.extract_strided_slice %198 {offsets = [0, 32], sizes = [8, 32], strides = [1, 1]} : vector<8x96xf32> to vector<8x32xf32>
    %202 = arith.mulf %201, %148 : vector<8x32xf32>
    %203 = vector.extract_strided_slice %198 {offsets = [0, 0], sizes = [8, 32], strides = [1, 1]} : vector<8x96xf32> to vector<8x32xf32>
    %204 = arith.mulf %203, %200 : vector<8x32xf32>
    %205 = arith.addf %202, %204 : vector<8x32xf32>
    %206 = vector.extract_strided_slice %198 {offsets = [0, 64], sizes = [8, 32], strides = [1, 1]} : vector<8x96xf32> to vector<8x32xf32>
    %207 = math.tanh %205 : vector<8x32xf32>
    %208 = arith.mulf %206, %207 : vector<8x32xf32>
    %209 = vector.extract_strided_slice %192 {offsets = [0, 0], sizes = [8, 96], strides = [1, 1]} : vector<8x128xf32> to vector<8x96xf32>
    %210 = arith.negf %209 : vector<8x96xf32>
    %211 = math.exp %210 : vector<8x96xf32>
    %cst_55 = arith.constant 1.000000e+00 : f32
    %212 = vector.broadcast %cst_55 : f32 to vector<8x96xf32>
    %213 = arith.addf %212, %211 : vector<8x96xf32>
    %214 = arith.divf %212, %213 : vector<8x96xf32>
    %215 = vector.extract_strided_slice %192 {offsets = [0, 96], sizes = [8, 32], strides = [1, 1]} : vector<8x128xf32> to vector<8x32xf32>
    %216 = math.tanh %215 : vector<8x32xf32>
    %217 = vector.extract_strided_slice %214 {offsets = [0, 32], sizes = [8, 32], strides = [1, 1]} : vector<8x96xf32> to vector<8x32xf32>
    %218 = arith.mulf %217, %164 : vector<8x32xf32>
    %219 = vector.extract_strided_slice %214 {offsets = [0, 0], sizes = [8, 32], strides = [1, 1]} : vector<8x96xf32> to vector<8x32xf32>
    %220 = arith.mulf %219, %216 : vector<8x32xf32>
    %221 = arith.addf %218, %220 : vector<8x32xf32>
    %222 = vector.extract_strided_slice %214 {offsets = [0, 64], sizes = [8, 32], strides = [1, 1]} : vector<8x96xf32> to vector<8x32xf32>
    %223 = math.tanh %221 : vector<8x32xf32>
    %224 = arith.mulf %222, %223 : vector<8x32xf32>
    %225 = arith.truncf %208 : vector<8x32xf32> to vector<8x32xbf16>
    %226 = arith.index_cast %c3_i32 : i32 to index
    %c0_56 = arith.constant 0 : index
    %c0_57 = arith.constant 0 : index
    %227 = vector.load %arg4[%226, %c0_56, %c0_57] : memref<8x8x32xbf16, #tpu.memory_space<vmem>>, vector<1x8x32xbf16>
    %228 = vector.shape_cast %227 : vector<1x8x32xbf16> to vector<8x32xbf16>
    %229 = vector.shape_cast %225 : vector<8x32xbf16> to vector<1x8x32xbf16>
    tpu.vector_store %arg4[%226, %c0_56, %c0_57], %229 {strides = array<i32>} : memref<8x8x32xbf16, #tpu.memory_space<vmem>>, vector<1x8x32xbf16>,
    %230 = arith.truncf %224 : vector<8x32xf32> to vector<8x32xbf16>
    %c7_i32_58 = arith.constant 7 : i32
    %231 = arith.subi %c7_i32_58, %c3_i32 : i32
    %232 = arith.index_cast %231 : i32 to index
    %c0_59 = arith.constant 0 : index
    %c0_60 = arith.constant 0 : index
    %233 = vector.load %arg5[%232, %c0_59, %c0_60] : memref<8x8x32xbf16, #tpu.memory_space<vmem>>, vector<1x8x32xbf16>
    %234 = vector.shape_cast %233 : vector<1x8x32xbf16> to vector<8x32xbf16>
    %235 = vector.shape_cast %230 : vector<8x32xbf16> to vector<1x8x32xbf16>
    tpu.vector_store %arg5[%232, %c0_59, %c0_60], %235 {strides = array<i32>} : memref<8x8x32xbf16, #tpu.memory_space<vmem>>, vector<1x8x32xbf16>,
    %c4_i32 = arith.constant 4 : i32
    %236 = tpu.concatenate %208, %224 in 1 : vector<8x32xf32>, vector<8x32xf32> -> vector<8x64xf32>
    %237 = arith.truncf %236 : vector<8x64xf32> to vector<8x64xbf16>
    %cst_61 = arith.constant dense<0.000000e+00> : vector<8x256xf32>
    %238 = tpu.matmul %237, %3, %cst_61 {dimension_numbers = #tpu.dot_dimension_numbers<[1], [0], [0], [1], [0, 0, 1, 1], [], []>} : vector<8x64xbf16>, vector<64x256xbf16>, vector<8x256xf32> -> vector<8x256xf32>
    %239 = arith.index_cast %c4_i32 : i32 to index
    %c0_62 = arith.constant 0 : index
    %c0_63 = arith.constant 0 : index
    %240 = vector.load %arg1[%239, %c0_62, %c0_63] : memref<8x8x128xf32, #tpu.memory_space<vmem>>, vector<1x8x128xf32>
    %241 = vector.shape_cast %240 : vector<1x8x128xf32> to vector<8x128xf32>
    %242 = vector.extract_strided_slice %238 {offsets = [0, 0], sizes = [8, 128], strides = [1, 1]} : vector<8x256xf32> to vector<8x128xf32>
    %243 = arith.addf %241, %242 : vector<8x128xf32>
    %c7_i32_64 = arith.constant 7 : i32
    %244 = arith.subi %c7_i32_64, %c4_i32 : i32
    %245 = arith.index_cast %244 : i32 to index
    %c0_65 = arith.constant 0 : index
    %c0_66 = arith.constant 0 : index
    %246 = vector.load %arg2[%245, %c0_65, %c0_66] : memref<8x8x128xf32, #tpu.memory_space<vmem>>, vector<1x8x128xf32>
    %247 = vector.shape_cast %246 : vector<1x8x128xf32> to vector<8x128xf32>
    %248 = vector.extract_strided_slice %238 {offsets = [0, 128], sizes = [8, 128], strides = [1, 1]} : vector<8x256xf32> to vector<8x128xf32>
    %249 = arith.addf %247, %248 : vector<8x128xf32>
    %250 = vector.extract_strided_slice %243 {offsets = [0, 0], sizes = [8, 96], strides = [1, 1]} : vector<8x128xf32> to vector<8x96xf32>
    %251 = arith.negf %250 : vector<8x96xf32>
    %252 = math.exp %251 : vector<8x96xf32>
    %cst_67 = arith.constant 1.000000e+00 : f32
    %253 = vector.broadcast %cst_67 : f32 to vector<8x96xf32>
    %254 = arith.addf %253, %252 : vector<8x96xf32>
    %255 = arith.divf %253, %254 : vector<8x96xf32>
    %256 = vector.extract_strided_slice %243 {offsets = [0, 96], sizes = [8, 32], strides = [1, 1]} : vector<8x128xf32> to vector<8x32xf32>
    %257 = math.tanh %256 : vector<8x32xf32>
    %258 = vector.extract_strided_slice %255 {offsets = [0, 32], sizes = [8, 32], strides = [1, 1]} : vector<8x96xf32> to vector<8x32xf32>
    %259 = arith.mulf %258, %205 : vector<8x32xf32>
    %260 = vector.extract_strided_slice %255 {offsets = [0, 0], sizes = [8, 32], strides = [1, 1]} : vector<8x96xf32> to vector<8x32xf32>
    %261 = arith.mulf %260, %257 : vector<8x32xf32>
    %262 = arith.addf %259, %261 : vector<8x32xf32>
    %263 = vector.extract_strided_slice %255 {offsets = [0, 64], sizes = [8, 32], strides = [1, 1]} : vector<8x96xf32> to vector<8x32xf32>
    %264 = math.tanh %262 : vector<8x32xf32>
    %265 = arith.mulf %263, %264 : vector<8x32xf32>
    %266 = vector.extract_strided_slice %249 {offsets = [0, 0], sizes = [8, 96], strides = [1, 1]} : vector<8x128xf32> to vector<8x96xf32>
    %267 = arith.negf %266 : vector<8x96xf32>
    %268 = math.exp %267 : vector<8x96xf32>
    %cst_68 = arith.constant 1.000000e+00 : f32
    %269 = vector.broadcast %cst_68 : f32 to vector<8x96xf32>
    %270 = arith.addf %269, %268 : vector<8x96xf32>
    %271 = arith.divf %269, %270 : vector<8x96xf32>
    %272 = vector.extract_strided_slice %249 {offsets = [0, 96], sizes = [8, 32], strides = [1, 1]} : vector<8x128xf32> to vector<8x32xf32>
    %273 = math.tanh %272 : vector<8x32xf32>
    %274 = vector.extract_strided_slice %271 {offsets = [0, 32], sizes = [8, 32], strides = [1, 1]} : vector<8x96xf32> to vector<8x32xf32>
    %275 = arith.mulf %274, %221 : vector<8x32xf32>
    %276 = vector.extract_strided_slice %271 {offsets = [0, 0], sizes = [8, 32], strides = [1, 1]} : vector<8x96xf32> to vector<8x32xf32>
    %277 = arith.mulf %276, %273 : vector<8x32xf32>
    %278 = arith.addf %275, %277 : vector<8x32xf32>
    %279 = vector.extract_strided_slice %271 {offsets = [0, 64], sizes = [8, 32], strides = [1, 1]} : vector<8x96xf32> to vector<8x32xf32>
    %280 = math.tanh %278 : vector<8x32xf32>
    %281 = arith.mulf %279, %280 : vector<8x32xf32>
    %282 = arith.truncf %265 : vector<8x32xf32> to vector<8x32xbf16>
    %283 = arith.index_cast %c4_i32 : i32 to index
    %c0_69 = arith.constant 0 : index
    %c0_70 = arith.constant 0 : index
    %284 = vector.load %arg4[%283, %c0_69, %c0_70] : memref<8x8x32xbf16, #tpu.memory_space<vmem>>, vector<1x8x32xbf16>
    %285 = vector.shape_cast %284 : vector<1x8x32xbf16> to vector<8x32xbf16>
    %286 = vector.shape_cast %282 : vector<8x32xbf16> to vector<1x8x32xbf16>
    tpu.vector_store %arg4[%283, %c0_69, %c0_70], %286 {strides = array<i32>} : memref<8x8x32xbf16, #tpu.memory_space<vmem>>, vector<1x8x32xbf16>,
    %287 = arith.truncf %281 : vector<8x32xf32> to vector<8x32xbf16>
    %c7_i32_71 = arith.constant 7 : i32
    %288 = arith.subi %c7_i32_71, %c4_i32 : i32
    %289 = arith.index_cast %288 : i32 to index
    %c0_72 = arith.constant 0 : index
    %c0_73 = arith.constant 0 : index
    %290 = vector.load %arg5[%289, %c0_72, %c0_73] : memref<8x8x32xbf16, #tpu.memory_space<vmem>>, vector<1x8x32xbf16>
    %291 = vector.shape_cast %290 : vector<1x8x32xbf16> to vector<8x32xbf16>
    %292 = vector.shape_cast %287 : vector<8x32xbf16> to vector<1x8x32xbf16>
    tpu.vector_store %arg5[%289, %c0_72, %c0_73], %292 {strides = array<i32>} : memref<8x8x32xbf16, #tpu.memory_space<vmem>>, vector<1x8x32xbf16>,
    %c5_i32 = arith.constant 5 : i32
    %293 = tpu.concatenate %265, %281 in 1 : vector<8x32xf32>, vector<8x32xf32> -> vector<8x64xf32>
    %294 = arith.truncf %293 : vector<8x64xf32> to vector<8x64xbf16>
    %cst_74 = arith.constant dense<0.000000e+00> : vector<8x256xf32>
    %295 = tpu.matmul %294, %3, %cst_74 {dimension_numbers = #tpu.dot_dimension_numbers<[1], [0], [0], [1], [0, 0, 1, 1], [], []>} : vector<8x64xbf16>, vector<64x256xbf16>, vector<8x256xf32> -> vector<8x256xf32>
    %296 = arith.index_cast %c5_i32 : i32 to index
    %c0_75 = arith.constant 0 : index
    %c0_76 = arith.constant 0 : index
    %297 = vector.load %arg1[%296, %c0_75, %c0_76] : memref<8x8x128xf32, #tpu.memory_space<vmem>>, vector<1x8x128xf32>
    %298 = vector.shape_cast %297 : vector<1x8x128xf32> to vector<8x128xf32>
    %299 = vector.extract_strided_slice %295 {offsets = [0, 0], sizes = [8, 128], strides = [1, 1]} : vector<8x256xf32> to vector<8x128xf32>
    %300 = arith.addf %298, %299 : vector<8x128xf32>
    %c7_i32_77 = arith.constant 7 : i32
    %301 = arith.subi %c7_i32_77, %c5_i32 : i32
    %302 = arith.index_cast %301 : i32 to index
    %c0_78 = arith.constant 0 : index
    %c0_79 = arith.constant 0 : index
    %303 = vector.load %arg2[%302, %c0_78, %c0_79] : memref<8x8x128xf32, #tpu.memory_space<vmem>>, vector<1x8x128xf32>
    %304 = vector.shape_cast %303 : vector<1x8x128xf32> to vector<8x128xf32>
    %305 = vector.extract_strided_slice %295 {offsets = [0, 128], sizes = [8, 128], strides = [1, 1]} : vector<8x256xf32> to vector<8x128xf32>
    %306 = arith.addf %304, %305 : vector<8x128xf32>
    %307 = vector.extract_strided_slice %300 {offsets = [0, 0], sizes = [8, 96], strides = [1, 1]} : vector<8x128xf32> to vector<8x96xf32>
    %308 = arith.negf %307 : vector<8x96xf32>
    %309 = math.exp %308 : vector<8x96xf32>
    %cst_80 = arith.constant 1.000000e+00 : f32
    %310 = vector.broadcast %cst_80 : f32 to vector<8x96xf32>
    %311 = arith.addf %310, %309 : vector<8x96xf32>
    %312 = arith.divf %310, %311 : vector<8x96xf32>
    %313 = vector.extract_strided_slice %300 {offsets = [0, 96], sizes = [8, 32], strides = [1, 1]} : vector<8x128xf32> to vector<8x32xf32>
    %314 = math.tanh %313 : vector<8x32xf32>
    %315 = vector.extract_strided_slice %312 {offsets = [0, 32], sizes = [8, 32], strides = [1, 1]} : vector<8x96xf32> to vector<8x32xf32>
    %316 = arith.mulf %315, %262 : vector<8x32xf32>
    %317 = vector.extract_strided_slice %312 {offsets = [0, 0], sizes = [8, 32], strides = [1, 1]} : vector<8x96xf32> to vector<8x32xf32>
    %318 = arith.mulf %317, %314 : vector<8x32xf32>
    %319 = arith.addf %316, %318 : vector<8x32xf32>
    %320 = vector.extract_strided_slice %312 {offsets = [0, 64], sizes = [8, 32], strides = [1, 1]} : vector<8x96xf32> to vector<8x32xf32>
    %321 = math.tanh %319 : vector<8x32xf32>
    %322 = arith.mulf %320, %321 : vector<8x32xf32>
    %323 = vector.extract_strided_slice %306 {offsets = [0, 0], sizes = [8, 96], strides = [1, 1]} : vector<8x128xf32> to vector<8x96xf32>
    %324 = arith.negf %323 : vector<8x96xf32>
    %325 = math.exp %324 : vector<8x96xf32>
    %cst_81 = arith.constant 1.000000e+00 : f32
    %326 = vector.broadcast %cst_81 : f32 to vector<8x96xf32>
    %327 = arith.addf %326, %325 : vector<8x96xf32>
    %328 = arith.divf %326, %327 : vector<8x96xf32>
    %329 = vector.extract_strided_slice %306 {offsets = [0, 96], sizes = [8, 32], strides = [1, 1]} : vector<8x128xf32> to vector<8x32xf32>
    %330 = math.tanh %329 : vector<8x32xf32>
    %331 = vector.extract_strided_slice %328 {offsets = [0, 32], sizes = [8, 32], strides = [1, 1]} : vector<8x96xf32> to vector<8x32xf32>
    %332 = arith.mulf %331, %278 : vector<8x32xf32>
    %333 = vector.extract_strided_slice %328 {offsets = [0, 0], sizes = [8, 32], strides = [1, 1]} : vector<8x96xf32> to vector<8x32xf32>
    %334 = arith.mulf %333, %330 : vector<8x32xf32>
    %335 = arith.addf %332, %334 : vector<8x32xf32>
    %336 = vector.extract_strided_slice %328 {offsets = [0, 64], sizes = [8, 32], strides = [1, 1]} : vector<8x96xf32> to vector<8x32xf32>
    %337 = math.tanh %335 : vector<8x32xf32>
    %338 = arith.mulf %336, %337 : vector<8x32xf32>
    %339 = arith.truncf %322 : vector<8x32xf32> to vector<8x32xbf16>
    %340 = arith.index_cast %c5_i32 : i32 to index
    %c0_82 = arith.constant 0 : index
    %c0_83 = arith.constant 0 : index
    %341 = vector.load %arg4[%340, %c0_82, %c0_83] : memref<8x8x32xbf16, #tpu.memory_space<vmem>>, vector<1x8x32xbf16>
    %342 = vector.shape_cast %341 : vector<1x8x32xbf16> to vector<8x32xbf16>
    %343 = vector.shape_cast %339 : vector<8x32xbf16> to vector<1x8x32xbf16>
    tpu.vector_store %arg4[%340, %c0_82, %c0_83], %343 {strides = array<i32>} : memref<8x8x32xbf16, #tpu.memory_space<vmem>>, vector<1x8x32xbf16>,
    %344 = arith.truncf %338 : vector<8x32xf32> to vector<8x32xbf16>
    %c7_i32_84 = arith.constant 7 : i32
    %345 = arith.subi %c7_i32_84, %c5_i32 : i32
    %346 = arith.index_cast %345 : i32 to index
    %c0_85 = arith.constant 0 : index
    %c0_86 = arith.constant 0 : index
    %347 = vector.load %arg5[%346, %c0_85, %c0_86] : memref<8x8x32xbf16, #tpu.memory_space<vmem>>, vector<1x8x32xbf16>
    %348 = vector.shape_cast %347 : vector<1x8x32xbf16> to vector<8x32xbf16>
    %349 = vector.shape_cast %344 : vector<8x32xbf16> to vector<1x8x32xbf16>
    tpu.vector_store %arg5[%346, %c0_85, %c0_86], %349 {strides = array<i32>} : memref<8x8x32xbf16, #tpu.memory_space<vmem>>, vector<1x8x32xbf16>,
    %c6_i32 = arith.constant 6 : i32
    %350 = tpu.concatenate %322, %338 in 1 : vector<8x32xf32>, vector<8x32xf32> -> vector<8x64xf32>
    %351 = arith.truncf %350 : vector<8x64xf32> to vector<8x64xbf16>
    %cst_87 = arith.constant dense<0.000000e+00> : vector<8x256xf32>
    %352 = tpu.matmul %351, %3, %cst_87 {dimension_numbers = #tpu.dot_dimension_numbers<[1], [0], [0], [1], [0, 0, 1, 1], [], []>} : vector<8x64xbf16>, vector<64x256xbf16>, vector<8x256xf32> -> vector<8x256xf32>
    %353 = arith.index_cast %c6_i32 : i32 to index
    %c0_88 = arith.constant 0 : index
    %c0_89 = arith.constant 0 : index
    %354 = vector.load %arg1[%353, %c0_88, %c0_89] : memref<8x8x128xf32, #tpu.memory_space<vmem>>, vector<1x8x128xf32>
    %355 = vector.shape_cast %354 : vector<1x8x128xf32> to vector<8x128xf32>
    %356 = vector.extract_strided_slice %352 {offsets = [0, 0], sizes = [8, 128], strides = [1, 1]} : vector<8x256xf32> to vector<8x128xf32>
    %357 = arith.addf %355, %356 : vector<8x128xf32>
    %c7_i32_90 = arith.constant 7 : i32
    %358 = arith.subi %c7_i32_90, %c6_i32 : i32
    %359 = arith.index_cast %358 : i32 to index
    %c0_91 = arith.constant 0 : index
    %c0_92 = arith.constant 0 : index
    %360 = vector.load %arg2[%359, %c0_91, %c0_92] : memref<8x8x128xf32, #tpu.memory_space<vmem>>, vector<1x8x128xf32>
    %361 = vector.shape_cast %360 : vector<1x8x128xf32> to vector<8x128xf32>
    %362 = vector.extract_strided_slice %352 {offsets = [0, 128], sizes = [8, 128], strides = [1, 1]} : vector<8x256xf32> to vector<8x128xf32>
    %363 = arith.addf %361, %362 : vector<8x128xf32>
    %364 = vector.extract_strided_slice %357 {offsets = [0, 0], sizes = [8, 96], strides = [1, 1]} : vector<8x128xf32> to vector<8x96xf32>
    %365 = arith.negf %364 : vector<8x96xf32>
    %366 = math.exp %365 : vector<8x96xf32>
    %cst_93 = arith.constant 1.000000e+00 : f32
    %367 = vector.broadcast %cst_93 : f32 to vector<8x96xf32>
    %368 = arith.addf %367, %366 : vector<8x96xf32>
    %369 = arith.divf %367, %368 : vector<8x96xf32>
    %370 = vector.extract_strided_slice %357 {offsets = [0, 96], sizes = [8, 32], strides = [1, 1]} : vector<8x128xf32> to vector<8x32xf32>
    %371 = math.tanh %370 : vector<8x32xf32>
    %372 = vector.extract_strided_slice %369 {offsets = [0, 32], sizes = [8, 32], strides = [1, 1]} : vector<8x96xf32> to vector<8x32xf32>
    %373 = arith.mulf %372, %319 : vector<8x32xf32>
    %374 = vector.extract_strided_slice %369 {offsets = [0, 0], sizes = [8, 32], strides = [1, 1]} : vector<8x96xf32> to vector<8x32xf32>
    %375 = arith.mulf %374, %371 : vector<8x32xf32>
    %376 = arith.addf %373, %375 : vector<8x32xf32>
    %377 = vector.extract_strided_slice %369 {offsets = [0, 64], sizes = [8, 32], strides = [1, 1]} : vector<8x96xf32> to vector<8x32xf32>
    %378 = math.tanh %376 : vector<8x32xf32>
    %379 = arith.mulf %377, %378 : vector<8x32xf32>
    %380 = vector.extract_strided_slice %363 {offsets = [0, 0], sizes = [8, 96], strides = [1, 1]} : vector<8x128xf32> to vector<8x96xf32>
    %381 = arith.negf %380 : vector<8x96xf32>
    %382 = math.exp %381 : vector<8x96xf32>
    %cst_94 = arith.constant 1.000000e+00 : f32
    %383 = vector.broadcast %cst_94 : f32 to vector<8x96xf32>
    %384 = arith.addf %383, %382 : vector<8x96xf32>
    %385 = arith.divf %383, %384 : vector<8x96xf32>
    %386 = vector.extract_strided_slice %363 {offsets = [0, 96], sizes = [8, 32], strides = [1, 1]} : vector<8x128xf32> to vector<8x32xf32>
    %387 = math.tanh %386 : vector<8x32xf32>
    %388 = vector.extract_strided_slice %385 {offsets = [0, 32], sizes = [8, 32], strides = [1, 1]} : vector<8x96xf32> to vector<8x32xf32>
    %389 = arith.mulf %388, %335 : vector<8x32xf32>
    %390 = vector.extract_strided_slice %385 {offsets = [0, 0], sizes = [8, 32], strides = [1, 1]} : vector<8x96xf32> to vector<8x32xf32>
    %391 = arith.mulf %390, %387 : vector<8x32xf32>
    %392 = arith.addf %389, %391 : vector<8x32xf32>
    %393 = vector.extract_strided_slice %385 {offsets = [0, 64], sizes = [8, 32], strides = [1, 1]} : vector<8x96xf32> to vector<8x32xf32>
    %394 = math.tanh %392 : vector<8x32xf32>
    %395 = arith.mulf %393, %394 : vector<8x32xf32>
    %396 = arith.truncf %379 : vector<8x32xf32> to vector<8x32xbf16>
    %397 = arith.index_cast %c6_i32 : i32 to index
    %c0_95 = arith.constant 0 : index
    %c0_96 = arith.constant 0 : index
    %398 = vector.load %arg4[%397, %c0_95, %c0_96] : memref<8x8x32xbf16, #tpu.memory_space<vmem>>, vector<1x8x32xbf16>
    %399 = vector.shape_cast %398 : vector<1x8x32xbf16> to vector<8x32xbf16>
    %400 = vector.shape_cast %396 : vector<8x32xbf16> to vector<1x8x32xbf16>
    tpu.vector_store %arg4[%397, %c0_95, %c0_96], %400 {strides = array<i32>} : memref<8x8x32xbf16, #tpu.memory_space<vmem>>, vector<1x8x32xbf16>,
    %401 = arith.truncf %395 : vector<8x32xf32> to vector<8x32xbf16>
    %c7_i32_97 = arith.constant 7 : i32
    %402 = arith.subi %c7_i32_97, %c6_i32 : i32
    %403 = arith.index_cast %402 : i32 to index
    %c0_98 = arith.constant 0 : index
    %c0_99 = arith.constant 0 : index
    %404 = vector.load %arg5[%403, %c0_98, %c0_99] : memref<8x8x32xbf16, #tpu.memory_space<vmem>>, vector<1x8x32xbf16>
    %405 = vector.shape_cast %404 : vector<1x8x32xbf16> to vector<8x32xbf16>
    %406 = vector.shape_cast %401 : vector<8x32xbf16> to vector<1x8x32xbf16>
    tpu.vector_store %arg5[%403, %c0_98, %c0_99], %406 {strides = array<i32>} : memref<8x8x32xbf16, #tpu.memory_space<vmem>>, vector<1x8x32xbf16>,
    %c7_i32_100 = arith.constant 7 : i32
    %407 = tpu.concatenate %379, %395 in 1 : vector<8x32xf32>, vector<8x32xf32> -> vector<8x64xf32>
    %408 = arith.truncf %407 : vector<8x64xf32> to vector<8x64xbf16>
    %cst_101 = arith.constant dense<0.000000e+00> : vector<8x256xf32>
    %409 = tpu.matmul %408, %3, %cst_101 {dimension_numbers = #tpu.dot_dimension_numbers<[1], [0], [0], [1], [0, 0, 1, 1], [], []>} : vector<8x64xbf16>, vector<64x256xbf16>, vector<8x256xf32> -> vector<8x256xf32>
    %410 = arith.index_cast %c7_i32_100 : i32 to index
    %c0_102 = arith.constant 0 : index
    %c0_103 = arith.constant 0 : index
    %411 = vector.load %arg1[%410, %c0_102, %c0_103] : memref<8x8x128xf32, #tpu.memory_space<vmem>>, vector<1x8x128xf32>
    %412 = vector.shape_cast %411 : vector<1x8x128xf32> to vector<8x128xf32>
    %413 = vector.extract_strided_slice %409 {offsets = [0, 0], sizes = [8, 128], strides = [1, 1]} : vector<8x256xf32> to vector<8x128xf32>
    %414 = arith.addf %412, %413 : vector<8x128xf32>
    %c7_i32_104 = arith.constant 7 : i32
    %415 = arith.subi %c7_i32_104, %c7_i32_100 : i32
    %416 = arith.index_cast %415 : i32 to index
    %c0_105 = arith.constant 0 : index
    %c0_106 = arith.constant 0 : index
    %417 = vector.load %arg2[%416, %c0_105, %c0_106] : memref<8x8x128xf32, #tpu.memory_space<vmem>>, vector<1x8x128xf32>
    %418 = vector.shape_cast %417 : vector<1x8x128xf32> to vector<8x128xf32>
    %419 = vector.extract_strided_slice %409 {offsets = [0, 128], sizes = [8, 128], strides = [1, 1]} : vector<8x256xf32> to vector<8x128xf32>
    %420 = arith.addf %418, %419 : vector<8x128xf32>
    %421 = vector.extract_strided_slice %414 {offsets = [0, 0], sizes = [8, 96], strides = [1, 1]} : vector<8x128xf32> to vector<8x96xf32>
    %422 = arith.negf %421 : vector<8x96xf32>
    %423 = math.exp %422 : vector<8x96xf32>
    %cst_107 = arith.constant 1.000000e+00 : f32
    %424 = vector.broadcast %cst_107 : f32 to vector<8x96xf32>
    %425 = arith.addf %424, %423 : vector<8x96xf32>
    %426 = arith.divf %424, %425 : vector<8x96xf32>
    %427 = vector.extract_strided_slice %414 {offsets = [0, 96], sizes = [8, 32], strides = [1, 1]} : vector<8x128xf32> to vector<8x32xf32>
    %428 = math.tanh %427 : vector<8x32xf32>
    %429 = vector.extract_strided_slice %426 {offsets = [0, 32], sizes = [8, 32], strides = [1, 1]} : vector<8x96xf32> to vector<8x32xf32>
    %430 = arith.mulf %429, %376 : vector<8x32xf32>
    %431 = vector.extract_strided_slice %426 {offsets = [0, 0], sizes = [8, 32], strides = [1, 1]} : vector<8x96xf32> to vector<8x32xf32>
    %432 = arith.mulf %431, %428 : vector<8x32xf32>
    %433 = arith.addf %430, %432 : vector<8x32xf32>
    %434 = vector.extract_strided_slice %426 {offsets = [0, 64], sizes = [8, 32], strides = [1, 1]} : vector<8x96xf32> to vector<8x32xf32>
    %435 = math.tanh %433 : vector<8x32xf32>
    %436 = arith.mulf %434, %435 : vector<8x32xf32>
    %437 = vector.extract_strided_slice %420 {offsets = [0, 0], sizes = [8, 96], strides = [1, 1]} : vector<8x128xf32> to vector<8x96xf32>
    %438 = arith.negf %437 : vector<8x96xf32>
    %439 = math.exp %438 : vector<8x96xf32>
    %cst_108 = arith.constant 1.000000e+00 : f32
    %440 = vector.broadcast %cst_108 : f32 to vector<8x96xf32>
    %441 = arith.addf %440, %439 : vector<8x96xf32>
    %442 = arith.divf %440, %441 : vector<8x96xf32>
    %443 = vector.extract_strided_slice %420 {offsets = [0, 96], sizes = [8, 32], strides = [1, 1]} : vector<8x128xf32> to vector<8x32xf32>
    %444 = math.tanh %443 : vector<8x32xf32>
    %445 = vector.extract_strided_slice %442 {offsets = [0, 32], sizes = [8, 32], strides = [1, 1]} : vector<8x96xf32> to vector<8x32xf32>
    %446 = arith.mulf %445, %392 : vector<8x32xf32>
    %447 = vector.extract_strided_slice %442 {offsets = [0, 0], sizes = [8, 32], strides = [1, 1]} : vector<8x96xf32> to vector<8x32xf32>
    %448 = arith.mulf %447, %444 : vector<8x32xf32>
    %449 = arith.addf %446, %448 : vector<8x32xf32>
    %450 = vector.extract_strided_slice %442 {offsets = [0, 64], sizes = [8, 32], strides = [1, 1]} : vector<8x96xf32> to vector<8x32xf32>
    %451 = math.tanh %449 : vector<8x32xf32>
    %452 = arith.mulf %450, %451 : vector<8x32xf32>
    %453 = arith.truncf %436 : vector<8x32xf32> to vector<8x32xbf16>
    %454 = arith.index_cast %c7_i32_100 : i32 to index
    %c0_109 = arith.constant 0 : index
    %c0_110 = arith.constant 0 : index
    %455 = vector.load %arg4[%454, %c0_109, %c0_110] : memref<8x8x32xbf16, #tpu.memory_space<vmem>>, vector<1x8x32xbf16>
    %456 = vector.shape_cast %455 : vector<1x8x32xbf16> to vector<8x32xbf16>
    %457 = vector.shape_cast %453 : vector<8x32xbf16> to vector<1x8x32xbf16>
    tpu.vector_store %arg4[%454, %c0_109, %c0_110], %457 {strides = array<i32>} : memref<8x8x32xbf16, #tpu.memory_space<vmem>>, vector<1x8x32xbf16>,
    %458 = arith.truncf %452 : vector<8x32xf32> to vector<8x32xbf16>
    %c7_i32_111 = arith.constant 7 : i32
    %459 = arith.subi %c7_i32_111, %c7_i32_100 : i32
    %460 = arith.index_cast %459 : i32 to index
    %c0_112 = arith.constant 0 : index
    %c0_113 = arith.constant 0 : index
    %461 = vector.load %arg5[%460, %c0_112, %c0_113] : memref<8x8x32xbf16, #tpu.memory_space<vmem>>, vector<1x8x32xbf16>
    %462 = vector.shape_cast %461 : vector<1x8x32xbf16> to vector<8x32xbf16>
    %463 = vector.shape_cast %458 : vector<8x32xbf16> to vector<1x8x32xbf16>
    tpu.vector_store %arg5[%460, %c0_112, %c0_113], %463 {strides = array<i32>} : memref<8x8x32xbf16, #tpu.memory_space<vmem>>, vector<1x8x32xbf16>,
    %c8_i32 = arith.constant 8 : i32
    %c0_114 = arith.constant 0 : index
    %c0_115 = arith.constant 0 : index
    %464 = vector.load %arg6[%c0_114, %c0_115] : memref<8x32xf32, #tpu.memory_space<vmem>>, vector<8x32xf32>
    tpu.vector_store %arg6[%c0_114, %c0_115], %436 {strides = array<i32>} : memref<8x32xf32, #tpu.memory_space<vmem>>, vector<8x32xf32>,
    %c0_116 = arith.constant 0 : index
    %c0_117 = arith.constant 0 : index
    %465 = vector.load %arg7[%c0_116, %c0_117] : memref<8x32xf32, #tpu.memory_space<vmem>>, vector<8x32xf32>
    tpu.vector_store %arg7[%c0_116, %c0_117], %452 {strides = array<i32>} : memref<8x32xf32, #tpu.memory_space<vmem>>, vector<8x32xf32>,
    %c0_118 = arith.constant 0 : index
    %c0_119 = arith.constant 0 : index
    %466 = vector.load %arg8[%c0_118, %c0_119] : memref<8x32xf32, #tpu.memory_space<vmem>>, vector<8x32xf32>
    tpu.vector_store %arg8[%c0_118, %c0_119], %433 {strides = array<i32>} : memref<8x32xf32, #tpu.memory_space<vmem>>, vector<8x32xf32>,
    %c0_120 = arith.constant 0 : index
    %c0_121 = arith.constant 0 : index
    %467 = vector.load %arg9[%c0_120, %c0_121] : memref<8x32xf32, #tpu.memory_space<vmem>>, vector<8x32xf32>
    tpu.vector_store %arg9[%c0_120, %c0_121], %449 {strides = array<i32>} : memref<8x32xf32, #tpu.memory_space<vmem>>, vector<8x32xf32>,
    return
  }
  func.func @transform_0(%arg0: i32) -> (i32, i32, i32) {
    %c0_i32 = arith.constant 0 : i32
    %c0_i32_0 = arith.constant 0 : i32
    %c0_i32_1 = arith.constant 0 : i32
    return %arg0, %c0_i32, %c0_i32_0 : i32, i32, i32
  }
  func.func @transform_1(%arg0: i32) -> (i32, i32, i32) {
    %c0_i32 = arith.constant 0 : i32
    %0 = arith.subi %c0_i32, %arg0 : i32
    %c0_i32_0 = arith.constant 0 : i32
    %c1_i32 = arith.constant 1 : i32
    %c0_i32_1 = arith.constant 0 : i32
    return %0, %c0_i32_0, %c1_i32 : i32, i32, i32
  }
  func.func @transform_2(%arg0: i32) -> (i32, i32) {
    %c0_i32 = arith.constant 0 : i32
    %c0_i32_0 = arith.constant 0 : i32
    %c0_i32_1 = arith.constant 0 : i32
    return %c0_i32, %c0_i32_0 : i32, i32
  }
  func.func @transform_3(%arg0: i32) -> (i32, i32, i32) {
    %c0_i32 = arith.constant 0 : i32
    %c0_i32_0 = arith.constant 0 : i32
    %c0_i32_1 = arith.constant 0 : i32
    return %arg0, %c0_i32, %c0_i32_0 : i32, i32, i32
  }
  func.func @transform_4(%arg0: i32) -> (i32, i32, i32) {
    %c0_i32 = arith.constant 0 : i32
    %0 = arith.subi %c0_i32, %arg0 : i32
    %c0_i32_0 = arith.constant 0 : i32
    %c0_i32_1 = arith.constant 0 : i32
    %c0_i32_2 = arith.constant 0 : i32
    return %0, %c0_i32_0, %c0_i32_1 : i32, i32, i32
  }
}

module attributes {stable_mosaic.version = 11 : i64} {
  func.func @_linear_chain_kernel(%arg0: i32, %arg1: memref<64x32xbf16, #tpu.memory_space<vmem>>, %arg2: memref<64x32xbf16, #tpu.memory_space<vmem>>, %arg3: memref<32x32xbf16, #tpu.memory_space<vmem>>, %arg4: memref<32x32xbf16, #tpu.memory_space<vmem>>, %arg5: memref<1x32xf32, #tpu.memory_space<vmem>>, %arg6: memref<1x32x32xbf16, #tpu.memory_space<vmem>>, %arg7: memref<1x1x32xf32, #tpu.memory_space<vmem>>, %arg8: memref<64x32xf32, #tpu.memory_space<vmem>>) attributes {dimension_semantics = [#tpu.dimension_semantics<parallel>], iteration_bounds = array<i64: 1>, scalar_prefetch = 0 : i64, scratch_operands = 0 : i64, tpu.core_type = #tpu.core_type<tc>, window_params = [{transform_indices = @transform_0, window_bounds = array<i64: 64, 32>}, {transform_indices = @transform_1, window_bounds = array<i64: 64, 32>}, {pipeline_mode = #tpu.pipeline_mode<synchronous>, transform_indices = @transform_2, window_bounds = array<i64: 32, 32>}, {pipeline_mode = #tpu.pipeline_mode<synchronous>, transform_indices = @transform_3, window_bounds = array<i64: 32, 32>}, {pipeline_mode = #tpu.pipeline_mode<synchronous>, transform_indices = @transform_4, window_bounds = array<i64: 1, 32>}, {pipeline_mode = #tpu.pipeline_mode<synchronous>, transform_indices = @transform_5, window_bounds = array<i64: 1, 32, 32>}, {pipeline_mode = #tpu.pipeline_mode<synchronous>, transform_indices = @transform_6, window_bounds = array<i64: 1, 1, 32>}, {transform_indices = @transform_7, window_bounds = array<i64: 64, 32>}]} {
    %c0 = arith.constant 0 : index
    %c0_0 = arith.constant 0 : index
    %0 = vector.load %arg1[%c0, %c0_0] : memref<64x32xbf16, #tpu.memory_space<vmem>>, vector<64x32xbf16>
    %c0_1 = arith.constant 0 : index
    %c0_2 = arith.constant 0 : index
    %1 = vector.load %arg3[%c0_1, %c0_2] : memref<32x32xbf16, #tpu.memory_space<vmem>>, vector<32x32xbf16>
    %cst = arith.constant dense<0.000000e+00> : vector<64x32xf32>
    %2 = tpu.matmul %0, %1, %cst {dimension_numbers = #tpu.dot_dimension_numbers<[1], [0], [0], [1], [0, 0, 1, 1], [], []>} : vector<64x32xbf16>, vector<32x32xbf16>, vector<64x32xf32> -> vector<64x32xf32>
    %c0_3 = arith.constant 0 : index
    %c0_4 = arith.constant 0 : index
    %3 = vector.load %arg2[%c0_3, %c0_4] : memref<64x32xbf16, #tpu.memory_space<vmem>>, vector<64x32xbf16>
    %c0_5 = arith.constant 0 : index
    %c0_6 = arith.constant 0 : index
    %4 = vector.load %arg4[%c0_5, %c0_6] : memref<32x32xbf16, #tpu.memory_space<vmem>>, vector<32x32xbf16>
    %cst_7 = arith.constant dense<0.000000e+00> : vector<64x32xf32>
    %5 = tpu.matmul %3, %4, %cst_7 {dimension_numbers = #tpu.dot_dimension_numbers<[1], [0], [0], [1], [0, 0, 1, 1], [], []>} : vector<64x32xbf16>, vector<32x32xbf16>, vector<64x32xf32> -> vector<64x32xf32>
    %6 = arith.addf %2, %5 : vector<64x32xf32>
    %c0_8 = arith.constant 0 : index
    %c0_9 = arith.constant 0 : index
    %7 = vector.load %arg5[%c0_8, %c0_9] : memref<1x32xf32, #tpu.memory_space<vmem>>, vector<1x32xf32>
    %8 = vector.broadcast %7 : vector<1x32xf32> to vector<64x32xf32>
    %9 = arith.addf %6, %8 : vector<64x32xf32>
    %10 = arith.truncf %9 : vector<64x32xf32> to vector<64x32xbf16>
    %c0_10 = arith.constant 0 : index
    %c0_11 = arith.constant 0 : index
    %c0_12 = arith.constant 0 : index
    %11 = vector.load %arg6[%c0_10, %c0_11, %c0_12] : memref<1x32x32xbf16, #tpu.memory_space<vmem>>, vector<1x32x32xbf16>
    %12 = vector.shape_cast %11 : vector<1x32x32xbf16> to vector<32x32xbf16>
    %cst_13 = arith.constant dense<0.000000e+00> : vector<64x32xf32>
    %13 = tpu.matmul %10, %12, %cst_13 {dimension_numbers = #tpu.dot_dimension_numbers<[1], [0], [0], [1], [0, 0, 1, 1], [], []>} : vector<64x32xbf16>, vector<32x32xbf16>, vector<64x32xf32> -> vector<64x32xf32>
    %c0_14 = arith.constant 0 : index
    %c0_15 = arith.constant 0 : index
    %c0_16 = arith.constant 0 : index
    %14 = vector.load %arg7[%c0_14, %c0_15, %c0_16] : memref<1x1x32xf32, #tpu.memory_space<vmem>>, vector<1x1x32xf32>
    %15 = vector.shape_cast %14 : vector<1x1x32xf32> to vector<1x32xf32>
    %16 = vector.broadcast %15 : vector<1x32xf32> to vector<64x32xf32>
    %17 = arith.addf %13, %16 : vector<64x32xf32>
    %cst_17 = arith.constant 0.000000e+00 : f32
    %18 = vector.broadcast %cst_17 : f32 to vector<64x32xf32>
    %19 = arith.maximumf %17, %18 : vector<64x32xf32>
    %c0_18 = arith.constant 0 : index
    %c0_19 = arith.constant 0 : index
    %20 = vector.load %arg8[%c0_18, %c0_19] : memref<64x32xf32, #tpu.memory_space<vmem>>, vector<64x32xf32>
    tpu.vector_store %arg8[%c0_18, %c0_19], %19 {strides = array<i32>} : memref<64x32xf32, #tpu.memory_space<vmem>>, vector<64x32xf32>,
    return
  }
  func.func @transform_0(%arg0: i32) -> (i32, i32) {
    %c0_i32 = arith.constant 0 : i32
    %c0_i32_0 = arith.constant 0 : i32
    return %arg0, %c0_i32 : i32, i32
  }
  func.func @transform_1(%arg0: i32) -> (i32, i32) {
    %c0_i32 = arith.constant 0 : i32
    %c0_i32_0 = arith.constant 0 : i32
    return %arg0, %c0_i32 : i32, i32
  }
  func.func @transform_2(%arg0: i32) -> (i32, i32) {
    %c0_i32 = arith.constant 0 : i32
    %c0_i32_0 = arith.constant 0 : i32
    %c0_i32_1 = arith.constant 0 : i32
    return %c0_i32, %c0_i32_0 : i32, i32
  }
  func.func @transform_3(%arg0: i32) -> (i32, i32) {
    %c0_i32 = arith.constant 0 : i32
    %c0_i32_0 = arith.constant 0 : i32
    %c0_i32_1 = arith.constant 0 : i32
    return %c0_i32, %c0_i32_0 : i32, i32
  }
  func.func @transform_4(%arg0: i32) -> (i32, i32) {
    %c0_i32 = arith.constant 0 : i32
    %c0_i32_0 = arith.constant 0 : i32
    %c0_i32_1 = arith.constant 0 : i32
    return %c0_i32, %c0_i32_0 : i32, i32
  }
  func.func @transform_5(%arg0: i32) -> (i32, i32, i32) {
    %c0_i32 = arith.constant 0 : i32
    %c0_i32_0 = arith.constant 0 : i32
    %c0_i32_1 = arith.constant 0 : i32
    %c0_i32_2 = arith.constant 0 : i32
    return %c0_i32, %c0_i32_0, %c0_i32_1 : i32, i32, i32
  }
  func.func @transform_6(%arg0: i32) -> (i32, i32, i32) {
    %c0_i32 = arith.constant 0 : i32
    %c0_i32_0 = arith.constant 0 : i32
    %c0_i32_1 = arith.constant 0 : i32
    %c0_i32_2 = arith.constant 0 : i32
    return %c0_i32, %c0_i32_0, %c0_i32_1 : i32, i32, i32
  }
  func.func @transform_7(%arg0: i32) -> (i32, i32) {
    %c0_i32 = arith.constant 0 : i32
    %c0_i32_0 = arith.constant 0 : i32
    return %arg0, %c0_i32 : i32, i32
  }
}

</mosaic_0001>

<llo_original>
// kernel: bilstm_moreff_forward.5
$region0: #{bilstm_moreff_forward.5}
  #allocation0 [shape = 'u32[]', space=smem, size = 0x4, offset = 0x4, fixed_abs, tag = 'smem constant byte address 0x4 - core index']
  #allocation1 [shape = 'u32[72,128]{1,0:T(1,128)}', space=vmem, size = 0x9000, scoped, tag = 'internal scratch']
  %s0 = inlined_call_operand.vmem [shape: bf16[64,16], index: 0, kind: input, shape index: {}]
  %s1 = inlined_call_operand.hbm [shape: bf16[16,256], index: 1, kind: input, shape index: {}]
  %s2 = inlined_call_operand.hbm [shape: f32[1,256], index: 2, kind: input, shape index: {}]
  %s3 = inlined_call_operand.vmem [shape: f32[64,256], index: 3, kind: output, shape index: {}]
  %s4 = sld [smem:[#allocation0]]
  $region30: #{bilstm_moreff_forward.5} parent=0
    _
  %s6 = ssub.s32 1, %s4
  %s7 = scalar_select 0, %s6, %s4
  $region1: #{bilstm_moreff_forward.5} parent=0
    #allocation2 [shape = 'u8[8192]{0}', space=vmem, size = 0x2000, scoped, tag = 'input window, operand 1, single buffered']
    #allocation3 [shape = 's32[1]{0}', space=sflag, size = 0x4, scoped, tag = 'scoped memory for bilstm_moreff_forward.5']
    #allocation4 [shape = 'u8[1024]{0}', space=vmem, size = 0x400, scoped, tag = 'input window, operand 2, single buffered']
    #allocation5 [shape = 's32[1]{0}', space=sflag, size = 0x4, scoped, tag = 'scoped memory for bilstm_moreff_forward.5']
    %8 = vsyncpa [#allocation3], 0
    %9 = vsyncpa [#allocation5], 0
    // Predicated region
    $region2: #{bilstm_moreff_forward.5} parent=1 // pred_check
      _
    $region3: #{bilstm_moreff_forward.5} parent=1 // pred_check_branch
      %11 = sbr.rel (0) target = $region5
    $region4: #{bilstm_moreff_forward.5} parent=1 // pred_region
      _
    $region5: #{bilstm_moreff_forward.5} parent=1 // pred_fallthru
      _
    // Predicated region
    $region6: #{bilstm_moreff_forward.5} parent=1 // pred_check
      _
    $region7: #{bilstm_moreff_forward.5} parent=1 // pred_check_branch
      %13 = sbr.rel (0) target = $region9
    $region8: #{bilstm_moreff_forward.5} parent=1 // pred_region
      %15 = vsyncadd [#allocation3], 0
      %s16 = sshll.u32 %s1, 4
      %s17 = int_to_ptr.hbm [resolvable:$true] %s16
      %s18 = sshll.u32 [#allocation2], 4
      %s19 = int_to_ptr.vmem [resolvable:$true] %s18
      %24 = dma.hbm_to_vmem [thread:$0]  %s17, 256, %s19, [#allocation3], 128, 128, 8
    $region9: #{bilstm_moreff_forward.5} parent=1 // pred_fallthru
      _
    // Predicated region
    $region10: #{bilstm_moreff_forward.5} parent=1 // pred_check
      _
    $region11: #{bilstm_moreff_forward.5} parent=1 // pred_check_branch
      %26 = sbr.rel (0) target = $region13
    $region12: #{bilstm_moreff_forward.5} parent=1 // pred_region
      %28 = vsyncadd [#allocation5], 0
      %s30 = sshll.u32 %s2, 4
      %s31 = int_to_ptr.hbm [resolvable:$true] %s30
      %s32 = sshll.u32 [#allocation4], 4
      %s33 = int_to_ptr.vmem [resolvable:$true] %s32
      %35 = dma.hbm_to_vmem [thread:$0]  %s31, 32, %s33, [#allocation5]
    $region13: #{bilstm_moreff_forward.5} parent=1 // pred_fallthru
      _
    // Predicated region
    $region14: #{bilstm_moreff_forward.5} parent=1 // pred_check
      _
    $region15: #{bilstm_moreff_forward.5} parent=1 // pred_check_branch
      %37 = sbr.rel (0) target = $region17
    $region16: #{bilstm_moreff_forward.5} parent=1 // pred_region
      %39 = dma.done [#allocation3], 256
    $region17: #{bilstm_moreff_forward.5} parent=1 // pred_fallthru
      _
    // Predicated region
    $region18: #{bilstm_moreff_forward.5} parent=1 // pred_check
      _
    $region19: #{bilstm_moreff_forward.5} parent=1 // pred_check_branch
      %41 = sbr.rel (0) target = $region21
    $region20: #{bilstm_moreff_forward.5} parent=1 // pred_region
      %43 = dma.done [#allocation5], 32
    $region21: #{bilstm_moreff_forward.5} parent=1 // pred_fallthru
      _
    %v45 = vld [vmem:[%s0] sm:$0xf]
    %v46 = vld [vmem:[%s0 + $0x4] sm:$0xf]
    %v47 = vld [vmem:[%s0 + $0x8] sm:$0xf]
    %v48 = vld [vmem:[%s0 + $0xc] sm:$0xf]
    %v49 = vld [vmem:[%s0 + $0x10] sm:$0xf]
    %v50 = vld [vmem:[%s0 + $0x14] sm:$0xf]
    %v51 = vld [vmem:[%s0 + $0x18] sm:$0xf]
    %v52 = vld [vmem:[%s0 + $0x1c] sm:$0xf]
    %v53 = vld [vmem:[#allocation2] sm:$0xff]
    %v54 = vld [vmem:[#allocation2 + $0x8] sm:$0xff]
    %v55 = vld [vmem:[#allocation4] sm:$0x3]
    %v57 = vperm.slane %v55, 0
    %v58 = vperm.slane %v55, 1
    %v69 = vunpack.c.l.b16 %v45
    %v70 = vunpack.c.l.b16 %v46
    %v71 = vunpack.c.l.b16 %v47
    %v72 = vunpack.c.l.b16 %v48
    %v73 = vunpack.c.l.b16 %v49
    %v74 = vunpack.c.l.b16 %v50
    %v75 = vunpack.c.l.b16 %v51
    %v76 = vunpack.c.l.b16 %v52
    %v77 = vpack.c.b16 %v70, %v69
    %v78 = vpack.c.b16 %v72, %v71
    %v79 = vpack.c.b16 %v74, %v73
    %v80 = vpack.c.b16 %v76, %v75
    %v83 = vunpack.c.l.b16 %v53
    %v84 = vunpack.c.h.b16 %v53
    %v85 = vunpack.c.l.b16 %v54
    %v86 = vunpack.c.h.b16 %v54
    %v87 = vpack.c.b16 %v85, %v83
    %v88 = vpack.c.b16 %v86, %v84
    %vm91 = vcmask 130048
    %v93 = vsel %vm91, %v77, 0
    %v96 = vsel %vm91, %v78, 0
    %v99 = vsel %vm91, %v79, 0
    %v102 = vsel %vm91, %v80, 0
    %104 = vmatpush.bf16.msra.mxu0 0
    %105 = vmatpush.bf16.msra.mxu0 0
    %106 = vmatpush.bf16.msra.mxu0 0
    %107 = vmatpush.bf16.msra.mxu0 0
    %108 = vmatpush.bf16.msra.mxu0 0
    %109 = vmatpush.bf16.msra.mxu0 0
    %110 = vmatpush.bf16.msra.mxu0 0
    %111 = vmatpush.bf16.msra.mxu0 %v87
    %112 = vmatmul.bf16.gmra.mxu0 %v93
    %v113 = vpop.f32.mrf.mxu0
    %v114 = vadd.f32 %v57, %v113
    %v115 = vpop.f32.mrf.mxu0
    %v116 = vadd.f32 %v57, %v115
    %117 = vmatmul.bf16.gmra.mxu0 %v96
    %v118 = vpop.f32.mrf.mxu0
    %v119 = vadd.f32 %v57, %v118
    %v120 = vpop.f32.mrf.mxu0
    %v121 = vadd.f32 %v57, %v120
    %122 = vmatmul.bf16.gmra.mxu0 %v99
    %v123 = vpop.f32.mrf.mxu0
    %v124 = vadd.f32 %v57, %v123
    %v125 = vpop.f32.mrf.mxu0
    %v126 = vadd.f32 %v57, %v125
    %127 = vmatmul.bf16.gmra.mxu0 %v102
    %v128 = vpop.f32.mrf.mxu0
    %v129 = vadd.f32 %v57, %v128
    %v130 = vpop.f32.mrf.mxu0
    %v131 = vadd.f32 %v57, %v130
    %132 = vdwg.mxu0
    %133 = vmatpush.bf16.msra.mxu0 0
    %134 = vmatpush.bf16.msra.mxu0 0
    %135 = vmatpush.bf16.msra.mxu0 0
    %136 = vmatpush.bf16.msra.mxu0 0
    %137 = vmatpush.bf16.msra.mxu0 0
    %138 = vmatpush.bf16.msra.mxu0 0
    %139 = vmatpush.bf16.msra.mxu0 0
    %140 = vmatpush.bf16.msra.mxu0 %v88
    %141 = vmatmul.bf16.gmra.mxu0 %v93
    %v142 = vpop.f32.mrf.mxu0
    %v143 = vadd.f32 %v58, %v142
    %v144 = vpop.f32.mrf.mxu0
    %v145 = vadd.f32 %v58, %v144
    %146 = vmatmul.bf16.gmra.mxu0 %v96
    %v147 = vpop.f32.mrf.mxu0
    %v148 = vadd.f32 %v58, %v147
    %v149 = vpop.f32.mrf.mxu0
    %v150 = vadd.f32 %v58, %v149
    %151 = vmatmul.bf16.gmra.mxu0 %v99
    %v152 = vpop.f32.mrf.mxu0
    %v153 = vadd.f32 %v58, %v152
    %v154 = vpop.f32.mrf.mxu0
    %v155 = vadd.f32 %v58, %v154
    %156 = vmatmul.bf16.gmra.mxu0 %v102
    %v157 = vpop.f32.mrf.mxu0
    %v158 = vadd.f32 %v58, %v157
    %v159 = vpop.f32.mrf.mxu0
    %v160 = vadd.f32 %v58, %v159
    %161 = vdwg.mxu0
    %162 = vst [vmem:[%s3] sm:$0xff] %v114
    %163 = vst [vmem:[%s3 + $0x8] sm:$0xff] %v143
    %164 = vst [vmem:[%s3 + $0x10] sm:$0xff] %v116
    %165 = vst [vmem:[%s3 + $0x18] sm:$0xff] %v145
    %166 = vst [vmem:[%s3 + $0x20] sm:$0xff] %v119
    %167 = vst [vmem:[%s3 + $0x28] sm:$0xff] %v148
    %168 = vst [vmem:[%s3 + $0x30] sm:$0xff] %v121
    %169 = vst [vmem:[%s3 + $0x38] sm:$0xff] %v150
    %170 = vst [vmem:[%s3 + $0x40] sm:$0xff] %v124
    %171 = vst [vmem:[%s3 + $0x48] sm:$0xff] %v153
    %172 = vst [vmem:[%s3 + $0x50] sm:$0xff] %v126
    %173 = vst [vmem:[%s3 + $0x58] sm:$0xff] %v155
    %174 = vst [vmem:[%s3 + $0x60] sm:$0xff] %v129
    %175 = vst [vmem:[%s3 + $0x68] sm:$0xff] %v158
    %176 = vst [vmem:[%s3 + $0x70] sm:$0xff] %v131
    %177 = vst [vmem:[%s3 + $0x78] sm:$0xff] %v160
    // Predicated region
    $region22: #{bilstm_moreff_forward.5} parent=1 // pred_check
      _
    $region23: #{bilstm_moreff_forward.5} parent=1 // pred_check_branch
      %179 = sbr.rel (0) target = $region25
    $region24: #{bilstm_moreff_forward.5} parent=1 // pred_region
      _
    $region25: #{bilstm_moreff_forward.5} parent=1 // pred_fallthru
      _
    // Predicated region
    $region26: #{bilstm_moreff_forward.5} parent=1 // pred_check
      _
    $region27: #{bilstm_moreff_forward.5} parent=1 // pred_check_branch
      %181 = sbr.rel (0) target = $region29
    $region28: #{bilstm_moreff_forward.5} parent=1 // pred_region
      _
    $region29: #{bilstm_moreff_forward.5} parent=1 // pred_fallthru
      _
    %182 = vsyncpa [#allocation3], 1
    %183 = vsyncpa [#allocation5], 1

// kernel: bilstm_moreff_forward.7
$region0: #{bilstm_moreff_forward.7}
  #allocation0 [shape = 'u32[]', space=smem, size = 0x4, offset = 0x4, fixed_abs, tag = 'smem constant byte address 0x4 - core index']
  #allocation1 [shape = 'u32[72,128]{1,0:T(1,128)}', space=vmem, size = 0x9000, scoped, tag = 'internal scratch']
  %s0 = inlined_call_operand.vmem [shape: bf16[64,32], index: 0, kind: input, shape index: {}]
  %s1 = inlined_call_operand.vmem [shape: bf16[64,32], index: 1, kind: input, shape index: {}]
  %s2 = inlined_call_operand.vmem [shape: bf16[32,256], index: 2, kind: input, shape index: {}]
  %s3 = inlined_call_operand.hbm [shape: bf16[32,256], index: 3, kind: input, shape index: {}]
  %s4 = inlined_call_operand.hbm [shape: f32[1,256], index: 4, kind: input, shape index: {}]
  %s5 = inlined_call_operand.vmem [shape: f32[64,256], index: 5, kind: output, shape index: {}]
  %s6 = sld [smem:[#allocation0]]
  $region38: #{bilstm_moreff_forward.7} parent=0
    _
  %s8 = ssub.s32 1, %s6
  %s9 = scalar_select 0, %s8, %s6
  $region1: #{bilstm_moreff_forward.7} parent=0
    #allocation2 [shape = 'u8[16384]{0}', space=vmem, size = 0x4000, scoped, tag = 'input window, operand 3, single buffered']
    #allocation3 [shape = 's32[1]{0}', space=sflag, size = 0x4, scoped, tag = 'scoped memory for bilstm_moreff_forward.7']
    #allocation4 [shape = 'u8[1024]{0}', space=vmem, size = 0x400, scoped, tag = 'input window, operand 4, single buffered']
    #allocation5 [shape = 's32[1]{0}', space=sflag, size = 0x4, scoped, tag = 'scoped memory for bilstm_moreff_forward.7']
    %10 = vsyncpa [#allocation3], 0
    %11 = vsyncpa [#allocation5], 0
    // Predicated region
    $region2: #{bilstm_moreff_forward.7} parent=1 // pred_check
      _
    $region3: #{bilstm_moreff_forward.7} parent=1 // pred_check_branch
      %13 = sbr.rel (0) target = $region5
    $region4: #{bilstm_moreff_forward.7} parent=1 // pred_region
      _
    $region5: #{bilstm_moreff_forward.7} parent=1 // pred_fallthru
      _
    // Predicated region
    $region6: #{bilstm_moreff_forward.7} parent=1 // pred_check
      _
    $region7: #{bilstm_moreff_forward.7} parent=1 // pred_check_branch
      %15 = sbr.rel (0) target = $region9
    $region8: #{bilstm_moreff_forward.7} parent=1 // pred_region
      _
    $region9: #{bilstm_moreff_forward.7} parent=1 // pred_fallthru
      _
    // Predicated region
    $region10: #{bilstm_moreff_forward.7} parent=1 // pred_check
      _
    $region11: #{bilstm_moreff_forward.7} parent=1 // pred_check_branch
      %17 = sbr.rel (0) target = $region13
    $region12: #{bilstm_moreff_forward.7} parent=1 // pred_region
      _
    $region13: #{bilstm_moreff_forward.7} parent=1 // pred_fallthru
      _
    // Predicated region
    $region14: #{bilstm_moreff_forward.7} parent=1 // pred_check
      _
    $region15: #{bilstm_moreff_forward.7} parent=1 // pred_check_branch
      %19 = sbr.rel (0) target = $region17
    $region16: #{bilstm_moreff_forward.7} parent=1 // pred_region
      %21 = vsyncadd [#allocation3], 0
      %s22 = sshll.u32 %s3, 4
      %s23 = int_to_ptr.hbm [resolvable:$true] %s22
      %s24 = sshll.u32 [#allocation2], 4
      %s25 = int_to_ptr.vmem [resolvable:$true] %s24
      %30 = dma.hbm_to_vmem [thread:$0]  %s23, 512, %s25, [#allocation3], 128, 128, 8
    $region17: #{bilstm_moreff_forward.7} parent=1 // pred_fallthru
      _
    // Predicated region
    $region18: #{bilstm_moreff_forward.7} parent=1 // pred_check
      _
    $region19: #{bilstm_moreff_forward.7} parent=1 // pred_check_branch
      %32 = sbr.rel (0) target = $region21
    $region20: #{bilstm_moreff_forward.7} parent=1 // pred_region
      %34 = vsyncadd [#allocation5], 0
      %s36 = sshll.u32 %s4, 4
      %s37 = int_to_ptr.hbm [resolvable:$true] %s36
      %s38 = sshll.u32 [#allocation4], 4
      %s39 = int_to_ptr.vmem [resolvable:$true] %s38
      %41 = dma.hbm_to_vmem [thread:$0]  %s37, 32, %s39, [#allocation5]
    $region21: #{bilstm_moreff_forward.7} parent=1 // pred_fallthru
      _
    // Predicated region
    $region22: #{bilstm_moreff_forward.7} parent=1 // pred_check
      _
    $region23: #{bilstm_moreff_forward.7} parent=1 // pred_check_branch
      %43 = sbr.rel (0) target = $region25
    $region24: #{bilstm_moreff_forward.7} parent=1 // pred_region
      %45 = dma.done [#allocation3], 512
    $region25: #{bilstm_moreff_forward.7} parent=1 // pred_fallthru
      _
    // Predicated region
    $region26: #{bilstm_moreff_forward.7} parent=1 // pred_check
      _
    $region27: #{bilstm_moreff_forward.7} parent=1 // pred_check_branch
      %47 = sbr.rel (0) target = $region29
    $region28: #{bilstm_moreff_forward.7} parent=1 // pred_region
      %49 = dma.done [#allocation5], 32
    $region29: #{bilstm_moreff_forward.7} parent=1 // pred_fallthru
      _
    %v51 = vld [vmem:[%s0] sm:$0xf]
    %v52 = vld [vmem:[%s0 + $0x4] sm:$0xf]
    %v53 = vld [vmem:[%s0 + $0x8] sm:$0xf]
    %v54 = vld [vmem:[%s0 + $0xc] sm:$0xf]
    %v55 = vld [vmem:[%s0 + $0x10] sm:$0xf]
    %v56 = vld [vmem:[%s0 + $0x14] sm:$0xf]
    %v57 = vld [vmem:[%s0 + $0x18] sm:$0xf]
    %v58 = vld [vmem:[%s0 + $0x1c] sm:$0xf]
    %v59 = vld [vmem:[%s2] sm:$0xff]
    %v60 = vld [vmem:[%s2 + $0x8] sm:$0xff]
    %v61 = vld [vmem:[%s2 + $0x10] sm:$0xff]
    %v62 = vld [vmem:[%s2 + $0x18] sm:$0xff]
    %v63 = vld [vmem:[%s1] sm:$0xf]
    %v64 = vld [vmem:[%s1 + $0x4] sm:$0xf]
    %v65 = vld [vmem:[%s1 + $0x8] sm:$0xf]
    %v66 = vld [vmem:[%s1 + $0xc] sm:$0xf]
    %v67 = vld [vmem:[%s1 + $0x10] sm:$0xf]
    %v68 = vld [vmem:[%s1 + $0x14] sm:$0xf]
    %v69 = vld [vmem:[%s1 + $0x18] sm:$0xf]
    %v70 = vld [vmem:[%s1 + $0x1c] sm:$0xf]
    %v71 = vld [vmem:[#allocation2] sm:$0xff]
    %v72 = vld [vmem:[#allocation2 + $0x8] sm:$0xff]
    %v73 = vld [vmem:[#allocation2 + $0x10] sm:$0xff]
    %v74 = vld [vmem:[#allocation2 + $0x18] sm:$0xff]
    %v83 = vunpack.c.l.b16 %v63
    %v84 = vunpack.c.l.b16 %v64
    %v85 = vunpack.c.l.b16 %v65
    %v86 = vunpack.c.l.b16 %v66
    %v87 = vunpack.c.l.b16 %v67
    %v88 = vunpack.c.l.b16 %v68
    %v89 = vunpack.c.l.b16 %v69
    %v90 = vunpack.c.l.b16 %v70
    %v91 = vpack.c.b16 %v84, %v83
    %v92 = vpack.c.b16 %v86, %v85
    %v93 = vpack.c.b16 %v88, %v87
    %v94 = vpack.c.b16 %v90, %v89
    %v99 = vunpack.c.l.b16 %v71
    %v100 = vunpack.c.h.b16 %v71
    %v101 = vunpack.c.l.b16 %v72
    %v102 = vunpack.c.h.b16 %v72
    %v103 = vunpack.c.l.b16 %v73
    %v104 = vunpack.c.h.b16 %v73
    %v105 = vunpack.c.l.b16 %v74
    %v106 = vunpack.c.h.b16 %v74
    %v107 = vpack.c.b16 %v101, %v99
    %v108 = vpack.c.b16 %v102, %v100
    %v109 = vpack.c.b16 %v105, %v103
    %v110 = vpack.c.b16 %v106, %v104
    %vm115 = vcmask 261120
    %v117 = vsel %vm115, %v91, 0
    %v120 = vsel %vm115, %v92, 0
    %v123 = vsel %vm115, %v93, 0
    %v126 = vsel %vm115, %v94, 0
    %128 = vmatpush.bf16.msra.mxu0 0
    %129 = vmatpush.bf16.msra.mxu0 0
    %130 = vmatpush.bf16.msra.mxu0 0
    %131 = vmatpush.bf16.msra.mxu0 0
    %132 = vmatpush.bf16.msra.mxu0 0
    %133 = vmatpush.bf16.msra.mxu0 0
    %134 = vmatpush.bf16.msra.mxu0 %v109
    %135 = vmatpush.bf16.msra.mxu0 %v107
    %136 = vmatmul.bf16.gmra.mxu0 %v117
    %v137 = vpop.f32.mrf.mxu0
    %v138 = vadd.f32 0.0, %v137
    %v139 = vpop.f32.mrf.mxu0
    %v140 = vadd.f32 0.0, %v139
    %141 = vmatmul.bf16.gmra.mxu0 %v120
    %v142 = vpop.f32.mrf.mxu0
    %v143 = vadd.f32 0.0, %v142
    %v144 = vpop.f32.mrf.mxu0
    %v145 = vadd.f32 0.0, %v144
    %146 = vmatmul.bf16.gmra.mxu0 %v123
    %v147 = vpop.f32.mrf.mxu0
    %v148 = vadd.f32 0.0, %v147
    %v149 = vpop.f32.mrf.mxu0
    %v150 = vadd.f32 0.0, %v149
    %151 = vmatmul.bf16.gmra.mxu0 %v126
    %v152 = vpop.f32.mrf.mxu0
    %v153 = vadd.f32 0.0, %v152
    %v154 = vpop.f32.mrf.mxu0
    %v155 = vadd.f32 0.0, %v154
    %156 = vdwg.mxu0
    %157 = vmatpush.bf16.msra.mxu0 0
    %158 = vmatpush.bf16.msra.mxu0 0
    %159 = vmatpush.bf16.msra.mxu0 0
    %160 = vmatpush.bf16.msra.mxu0 0
    %161 = vmatpush.bf16.msra.mxu0 0
    %162 = vmatpush.bf16.msra.mxu0 0
    %163 = vmatpush.bf16.msra.mxu0 %v110
    %164 = vmatpush.bf16.msra.mxu0 %v108
    %165 = vmatmul.bf16.gmra.mxu0 %v117
    %v166 = vpop.f32.mrf.mxu0
    %v167 = vadd.f32 0.0, %v166
    %v168 = vpop.f32.mrf.mxu0
    %v169 = vadd.f32 0.0, %v168
    %170 = vmatmul.bf16.gmra.mxu0 %v120
    %v171 = vpop.f32.mrf.mxu0
    %v172 = vadd.f32 0.0, %v171
    %v173 = vpop.f32.mrf.mxu0
    %v174 = vadd.f32 0.0, %v173
    %175 = vmatmul.bf16.gmra.mxu0 %v123
    %v176 = vpop.f32.mrf.mxu0
    %v177 = vadd.f32 0.0, %v176
    %v178 = vpop.f32.mrf.mxu0
    %v179 = vadd.f32 0.0, %v178
    %180 = vmatmul.bf16.gmra.mxu0 %v126
    %v181 = vpop.f32.mrf.mxu0
    %v182 = vadd.f32 0.0, %v181
    %v183 = vpop.f32.mrf.mxu0
    %v184 = vadd.f32 0.0, %v183
    %185 = vdwg.mxu0
    %v194 = vunpack.c.l.b16 %v51
    %v195 = vunpack.c.l.b16 %v52
    %v196 = vunpack.c.l.b16 %v53
    %v197 = vunpack.c.l.b16 %v54
    %v198 = vunpack.c.l.b16 %v55
    %v199 = vunpack.c.l.b16 %v56
    %v200 = vunpack.c.l.b16 %v57
    %v201 = vunpack.c.l.b16 %v58
    %v202 = vpack.c.b16 %v195, %v194
    %v203 = vpack.c.b16 %v197, %v196
    %v204 = vpack.c.b16 %v199, %v198
    %v205 = vpack.c.b16 %v201, %v200
    %v210 = vunpack.c.l.b16 %v59
    %v211 = vunpack.c.h.b16 %v59
    %v212 = vunpack.c.l.b16 %v60
    %v213 = vunpack.c.h.b16 %v60
    %v214 = vunpack.c.l.b16 %v61
    %v215 = vunpack.c.h.b16 %v61
    %v216 = vunpack.c.l.b16 %v62
    %v217 = vunpack.c.h.b16 %v62
    %v218 = vpack.c.b16 %v212, %v210
    %v219 = vpack.c.b16 %v213, %v211
    %v220 = vpack.c.b16 %v216, %v214
    %v221 = vpack.c.b16 %v217, %v215
    %v227 = vsel %vm115, %v202, 0
    %v230 = vsel %vm115, %v203, 0
    %v233 = vsel %vm115, %v204, 0
    %v236 = vsel %vm115, %v205, 0
    %238 = vmatpush.bf16.msra.mxu0 0
    %239 = vmatpush.bf16.msra.mxu0 0
    %240 = vmatpush.bf16.msra.mxu0 0
    %241 = vmatpush.bf16.msra.mxu0 0
    %242 = vmatpush.bf16.msra.mxu0 0
    %243 = vmatpush.bf16.msra.mxu0 0
    %244 = vmatpush.bf16.msra.mxu0 %v220
    %245 = vmatpush.bf16.msra.mxu0 %v218
    %246 = vmatmul.bf16.gmra.mxu0 %v227
    %v247 = vpop.f32.mrf.mxu0
    %v248 = vadd.f32 %v138, %v247
    %v249 = vpop.f32.mrf.mxu0
    %v250 = vadd.f32 %v140, %v249
    %251 = vmatmul.bf16.gmra.mxu0 %v230
    %v252 = vpop.f32.mrf.mxu0
    %v253 = vadd.f32 %v143, %v252
    %v254 = vpop.f32.mrf.mxu0
    %v255 = vadd.f32 %v145, %v254
    %256 = vmatmul.bf16.gmra.mxu0 %v233
    %v257 = vpop.f32.mrf.mxu0
    %v258 = vadd.f32 %v148, %v257
    %v259 = vpop.f32.mrf.mxu0
    %v260 = vadd.f32 %v150, %v259
    %261 = vmatmul.bf16.gmra.mxu0 %v236
    %v262 = vpop.f32.mrf.mxu0
    %v263 = vadd.f32 %v153, %v262
    %v264 = vpop.f32.mrf.mxu0
    %v265 = vadd.f32 %v155, %v264
    %266 = vdwg.mxu0
    %267 = vmatpush.bf16.msra.mxu0 0
    %268 = vmatpush.bf16.msra.mxu0 0
    %269 = vmatpush.bf16.msra.mxu0 0
    %270 = vmatpush.bf16.msra.mxu0 0
    %271 = vmatpush.bf16.msra.mxu0 0
    %272 = vmatpush.bf16.msra.mxu0 0
    %273 = vmatpush.bf16.msra.mxu0 %v221
    %274 = vmatpush.bf16.msra.mxu0 %v219
    %275 = vmatmul.bf16.gmra.mxu0 %v227
    %v276 = vpop.f32.mrf.mxu0
    %v277 = vadd.f32 %v167, %v276
    %v278 = vpop.f32.mrf.mxu0
    %v279 = vadd.f32 %v169, %v278
    %280 = vmatmul.bf16.gmra.mxu0 %v230
    %v281 = vpop.f32.mrf.mxu0
    %v282 = vadd.f32 %v172, %v281
    %v283 = vpop.f32.mrf.mxu0
    %v284 = vadd.f32 %v174, %v283
    %285 = vmatmul.bf16.gmra.mxu0 %v233
    %v286 = vpop.f32.mrf.mxu0
    %v287 = vadd.f32 %v177, %v286
    %v288 = vpop.f32.mrf.mxu0
    %v289 = vadd.f32 %v179, %v288
    %290 = vmatmul.bf16.gmra.mxu0 %v236
    %v291 = vpop.f32.mrf.mxu0
    %v292 = vadd.f32 %v182, %v291
    %v293 = vpop.f32.mrf.mxu0
    %v294 = vadd.f32 %v184, %v293
    %295 = vdwg.mxu0
    %v296 = vld [vmem:[#allocation4] sm:$0x3]
    %v298 = vperm.slane %v296, 0
    %v299 = vperm.slane %v296, 1
    %v302 = vadd.f32 %v248, %v298
    %v303 = vadd.f32 %v277, %v299
    %v304 = vadd.f32 %v250, %v298
    %v305 = vadd.f32 %v279, %v299
    %v306 = vadd.f32 %v253, %v298
    %v307 = vadd.f32 %v282, %v299
    %v308 = vadd.f32 %v255, %v298
    %v309 = vadd.f32 %v284, %v299
    %v310 = vadd.f32 %v258, %v298
    %v311 = vadd.f32 %v287, %v299
    %v312 = vadd.f32 %v260, %v298
    %v313 = vadd.f32 %v289, %v299
    %v314 = vadd.f32 %v263, %v298
    %v315 = vadd.f32 %v292, %v299
    %v316 = vadd.f32 %v265, %v298
    %v317 = vadd.f32 %v294, %v299
    %318 = vst [vmem:[%s5] sm:$0xff] %v302
    %319 = vst [vmem:[%s5 + $0x8] sm:$0xff] %v303
    %320 = vst [vmem:[%s5 + $0x10] sm:$0xff] %v304
    %321 = vst [vmem:[%s5 + $0x18] sm:$0xff] %v305
    %322 = vst [vmem:[%s5 + $0x20] sm:$0xff] %v306
    %323 = vst [vmem:[%s5 + $0x28] sm:$0xff] %v307
    %324 = vst [vmem:[%s5 + $0x30] sm:$0xff] %v308
    %325 = vst [vmem:[%s5 + $0x38] sm:$0xff] %v309
    %326 = vst [vmem:[%s5 + $0x40] sm:$0xff] %v310
    %327 = vst [vmem:[%s5 + $0x48] sm:$0xff] %v311
    %328 = vst [vmem:[%s5 + $0x50] sm:$0xff] %v312
    %329 = vst [vmem:[%s5 + $0x58] sm:$0xff] %v313
    %330 = vst [vmem:[%s5 + $0x60] sm:$0xff] %v314
    %331 = vst [vmem:[%s5 + $0x68] sm:$0xff] %v315
    %332 = vst [vmem:[%s5 + $0x70] sm:$0xff] %v316
    %333 = vst [vmem:[%s5 + $0x78] sm:$0xff] %v317
    // Predicated region
    $region30: #{bilstm_moreff_forward.7} parent=1 // pred_check
      _
    $region31: #{bilstm_moreff_forward.7} parent=1 // pred_check_branch
      %335 = sbr.rel (0) target = $region33
    $region32: #{bilstm_moreff_forward.7} parent=1 // pred_region
      _
    $region33: #{bilstm_moreff_forward.7} parent=1 // pred_fallthru
      _
    // Predicated region
    $region34: #{bilstm_moreff_forward.7} parent=1 // pred_check
      _
    $region35: #{bilstm_moreff_forward.7} parent=1 // pred_check_branch
      %337 = sbr.rel (0) target = $region37
    $region36: #{bilstm_moreff_forward.7} parent=1 // pred_region
      _
    $region37: #{bilstm_moreff_forward.7} parent=1 // pred_fallthru
      _
    %338 = vsyncpa [#allocation3], 1
    %339 = vsyncpa [#allocation5], 1

// kernel: bilstm_moreff_forward.6
$region0: #{bilstm_moreff_forward.6}
  #allocation0 [shape = 'u32[]', space=smem, size = 0x4, offset = 0x4, fixed_abs, tag = 'smem constant byte address 0x4 - core index']
  #allocation1 [shape = 'u32[72,128]{1,0:T(1,128)}', space=vmem, size = 0x9000, scoped, tag = 'internal scratch']
  #allocation2 [shape = 'f32[8,32]{1,0:T(8,128)}', space=vmem, size = 0x1000, scoped, tag = 'scratch operand']
  #allocation3 [shape = 'f32[8,32]{1,0:T(8,128)}', space=vmem, size = 0x1000, scoped, tag = 'scratch operand']
  #allocation4 [shape = 'f32[8,32]{1,0:T(8,128)}', space=vmem, size = 0x1000, scoped, tag = 'scratch operand']
  #allocation5 [shape = 'f32[8,32]{1,0:T(8,128)}', space=vmem, size = 0x1000, scoped, tag = 'scratch operand']
  %s0 = inlined_call_operand.vmem [shape: f32[8,8,256], index: 0, kind: input, shape index: {}, may-alias: {0,1}]
  %s1 = inlined_call_operand.vmem [shape: f32[8,8,256], index: 1, kind: input, shape index: {}, may-alias: {0,1}]
  %s2 = inlined_call_operand.vmem [shape: bf16[64,256], index: 2, kind: input, shape index: {}]
  %s3 = inlined_call_operand.vmem [shape: bf16[8,8,32], index: 3, kind: output, shape index: {0}]
  %s4 = inlined_call_operand.vmem [shape: bf16[8,8,32], index: 4, kind: output, shape index: {1}]
  %5 = xla_tuple %s3, %s4
  %s6 = sld [smem:[#allocation0]]
  $region110: #{bilstm_moreff_forward.6} parent=0
    _
  %s8 = ssub.s32 1, %s6
  %s9 = scalar_select 0, %s8, %s6
  $region1: #{bilstm_moreff_forward.6} parent=0
    #allocation6 [shape = 'u8[32768]{0}', space=vmem, size = 0x8000, scoped, tag = 'input window, operand 0, single buffered']
    #allocation7 [shape = 'u8[32768]{0}', space=vmem, size = 0x8000, scoped, tag = 'input window, operand 1, single buffered']
    // Predicated region
    $region2: #{bilstm_moreff_forward.6} parent=1 // pred_check
      _
    $region3: #{bilstm_moreff_forward.6} parent=1 // pred_check_branch
      %11 = sbr.rel (0) target = $region5
    $region4: #{bilstm_moreff_forward.6} parent=1 // pred_region
      // Predicated region
      $region6: #{bilstm_moreff_forward.6} parent=4 // pred_check
        _
      $region7: #{bilstm_moreff_forward.6} parent=4 // pred_check_branch
        %13 = sbr.rel (0) target = $region9
      $region8: #{bilstm_moreff_forward.6} parent=4 // pred_region
        // Predicated region
        $region10: #{bilstm_moreff_forward.6} parent=8 // pred_check
          _
        $region11: #{bilstm_moreff_forward.6} parent=8 // pred_check_branch
          %15 = sbr.rel (0) target = $region13
        $region12: #{bilstm_moreff_forward.6} parent=8 // pred_region
          // Predicated region
          $region25: #{bilstm_moreff_forward.6} parent=12 // pred_check
            _
          $region26: #{bilstm_moreff_forward.6} parent=12 // pred_check_branch
            %45 = sbr.rel (0) target = $region28
          $region27: #{bilstm_moreff_forward.6} parent=12 // pred_region
            loop: start=0, step=1, limit=1
            $region29: #{bilstm_moreff_forward.6} parent=27 // loop_pre_header
              _
            $region30: #{bilstm_moreff_forward.6} parent=27 // loop_header
              %s47 = sphi 0, %s51
              %p48 = scmp.ge.s32.totalorder %s47, 1
              %s52 = sphi %s0, %s0
              %s53 = sphi [#allocation6], [#allocation6]
            $region31: #{bilstm_moreff_forward.6} parent=27 // loop_header_branch
              %50 = sbr.rel (%p48) target = $region35
            $region32: #{bilstm_moreff_forward.6} parent=27 // loop_body
              %v54 = vld [vmem:[%s52] sm:$0xff]
              %55 = vst [vmem:[%s53] sm:$0xff] %v54
              %v56 = vld [vmem:[%s52 + $0x10] sm:$0xff]
              %57 = vst [vmem:[%s53 + $0x8] sm:$0xff] %v56
              %v58 = vld [vmem:[%s52 + $0x20] sm:$0xff]
              %59 = vst [vmem:[%s53 + $0x10] sm:$0xff] %v58
              %v60 = vld [vmem:[%s52 + $0x30] sm:$0xff]
              %61 = vst [vmem:[%s53 + $0x18] sm:$0xff] %v60
              %v62 = vld [vmem:[%s52 + $0x40] sm:$0xff]
              %63 = vst [vmem:[%s53 + $0x20] sm:$0xff] %v62
              %v64 = vld [vmem:[%s52 + $0x50] sm:$0xff]
              %65 = vst [vmem:[%s53 + $0x28] sm:$0xff] %v64
              %v66 = vld [vmem:[%s52 + $0x60] sm:$0xff]
              %67 = vst [vmem:[%s53 + $0x30] sm:$0xff] %v66
              %v68 = vld [vmem:[%s52 + $0x70] sm:$0xff]
              %69 = vst [vmem:[%s53 + $0x38] sm:$0xff] %v68
            $region33: #{bilstm_moreff_forward.6} parent=27 // loop_footer
              %s51 = sadd.s32 1, %s47
            $region34: #{bilstm_moreff_forward.6} parent=27 // loop_footer_branch
              %46 = sbr.rel target = $region30
            $region35: #{bilstm_moreff_forward.6} parent=27 // loop_exit
              _
          $region28: #{bilstm_moreff_forward.6} parent=12 // pred_fallthru
            _
          // Predicated region
          $region36: #{bilstm_moreff_forward.6} parent=12 // pred_check
            _
          $region37: #{bilstm_moreff_forward.6} parent=12 // pred_check_branch
            %71 = sbr.rel target = $region39
          $region38: #{bilstm_moreff_forward.6} parent=12 // pred_region
            _
          $region39: #{bilstm_moreff_forward.6} parent=12 // pred_fallthru
            _
        $region13: #{bilstm_moreff_forward.6} parent=8 // pred_fallthru
          _
        // Predicated region
        $region14: #{bilstm_moreff_forward.6} parent=8 // pred_check
          _
        $region15: #{bilstm_moreff_forward.6} parent=8 // pred_check_branch
          %17 = sbr.rel target = $region17
        $region16: #{bilstm_moreff_forward.6} parent=8 // pred_region
          %s19 = ssub.s32 256, 1
          loop: start=0, step=1, limit=1
          $region18: #{bilstm_moreff_forward.6} parent=16 // loop_pre_header
            _
          $region19: #{bilstm_moreff_forward.6} parent=16 // loop_header
            %s21 = sphi 0, %s25
            %p22 = scmp.ge.s32.totalorder %s21, 1
            %s26 = sphi %s0, %s0
            %s27 = sphi [#allocation6], [#allocation6]
          $region20: #{bilstm_moreff_forward.6} parent=16 // loop_header_branch
            %24 = sbr.rel (%p22) target = $region24
          $region21: #{bilstm_moreff_forward.6} parent=16 // loop_body
            %v28 = vld [vmem:[%s26] sm:%s19]
            %29 = vst [vmem:[%s27] sm:%s19] %v28
            %v30 = vld [vmem:[%s26 + $0x10] sm:%s19]
            %31 = vst [vmem:[%s27 + $0x8] sm:%s19] %v30
            %v32 = vld [vmem:[%s26 + $0x20] sm:%s19]
            %33 = vst [vmem:[%s27 + $0x10] sm:%s19] %v32
            %v34 = vld [vmem:[%s26 + $0x30] sm:%s19]
            %35 = vst [vmem:[%s27 + $0x18] sm:%s19] %v34
            %v36 = vld [vmem:[%s26 + $0x40] sm:%s19]
            %37 = vst [vmem:[%s27 + $0x20] sm:%s19] %v36
            %v38 = vld [vmem:[%s26 + $0x50] sm:%s19]
            %39 = vst [vmem:[%s27 + $0x28] sm:%s19] %v38
            %v40 = vld [vmem:[%s26 + $0x60] sm:%s19]
            %41 = vst [vmem:[%s27 + $0x30] sm:%s19] %v40
            %v42 = vld [vmem:[%s26 + $0x70] sm:%s19]
            %43 = vst [vmem:[%s27 + $0x38] sm:%s19] %v42
          $region22: #{bilstm_moreff_forward.6} parent=16 // loop_footer
            %s25 = sadd.s32 1, %s21
          $region23: #{bilstm_moreff_forward.6} parent=16 // loop_footer_branch
            %20 = sbr.rel target = $region19
          $region24: #{bilstm_moreff_forward.6} parent=16 // loop_exit
            _
        $region17: #{bilstm_moreff_forward.6} parent=8 // pred_fallthru
          _
      $region9: #{bilstm_moreff_forward.6} parent=4 // pred_fallthru
        _
      %72 = vnop
    $region5: #{bilstm_moreff_forward.6} parent=1 // pred_fallthru
      _
    // Predicated region
    $region40: #{bilstm_moreff_forward.6} parent=1 // pred_check
      _
    $region41: #{bilstm_moreff_forward.6} parent=1 // pred_check_branch
      %74 = sbr.rel (0) target = $region43
    $region42: #{bilstm_moreff_forward.6} parent=1 // pred_region
      %s75 = ssub.s32 0, 0
      %s76 = smul.u32 8, %s75
      %s77 = smul.addr %s76, 2
      %s78 = sadd.s32 1, %s77
      %s79 = smul.addr %s78, 8
      %s80 = scalar_lea.vmem %s1, %s79
      // Predicated region
      $region44: #{bilstm_moreff_forward.6} parent=42 // pred_check
        _
      $region45: #{bilstm_moreff_forward.6} parent=42 // pred_check_branch
        %82 = sbr.rel (0) target = $region47
      $region46: #{bilstm_moreff_forward.6} parent=42 // pred_region
        // Predicated region
        $region48: #{bilstm_moreff_forward.6} parent=46 // pred_check
          _
        $region49: #{bilstm_moreff_forward.6} parent=46 // pred_check_branch
          %84 = sbr.rel (0) target = $region51
        $region50: #{bilstm_moreff_forward.6} parent=46 // pred_region
          // Predicated region
          $region63: #{bilstm_moreff_forward.6} parent=50 // pred_check
            _
          $region64: #{bilstm_moreff_forward.6} parent=50 // pred_check_branch
            %114 = sbr.rel (0) target = $region66
          $region65: #{bilstm_moreff_forward.6} parent=50 // pred_region
            loop: start=0, step=1, limit=1
            $region67: #{bilstm_moreff_forward.6} parent=65 // loop_pre_header
              _
            $region68: #{bilstm_moreff_forward.6} parent=65 // loop_header
              %s116 = sphi 0, %s120
              %p117 = scmp.ge.s32.totalorder %s116, 1
              %s121 = sphi %s80, %s80
              %s122 = sphi [#allocation7], [#allocation7]
            $region69: #{bilstm_moreff_forward.6} parent=65 // loop_header_branch
              %119 = sbr.rel (%p117) target = $region73
            $region70: #{bilstm_moreff_forward.6} parent=65 // loop_body
              %v123 = vld [vmem:[%s121] sm:$0xff]
              %124 = vst [vmem:[%s122] sm:$0xff] %v123
              %v125 = vld [vmem:[%s121 + $0x10] sm:$0xff]
              %126 = vst [vmem:[%s122 + $0x8] sm:$0xff] %v125
              %v127 = vld [vmem:[%s121 + $0x20] sm:$0xff]
              %128 = vst [vmem:[%s122 + $0x10] sm:$0xff] %v127
              %v129 = vld [vmem:[%s121 + $0x30] sm:$0xff]
              %130 = vst [vmem:[%s122 + $0x18] sm:$0xff] %v129
              %v131 = vld [vmem:[%s121 + $0x40] sm:$0xff]
              %132 = vst [vmem:[%s122 + $0x20] sm:$0xff] %v131
              %v133 = vld [vmem:[%s121 + $0x50] sm:$0xff]
              %134 = vst [vmem:[%s122 + $0x28] sm:$0xff] %v133
              %v135 = vld [vmem:[%s121 + $0x60] sm:$0xff]
              %136 = vst [vmem:[%s122 + $0x30] sm:$0xff] %v135
              %v137 = vld [vmem:[%s121 + $0x70] sm:$0xff]
              %138 = vst [vmem:[%s122 + $0x38] sm:$0xff] %v137
            $region71: #{bilstm_moreff_forward.6} parent=65 // loop_footer
              %s120 = sadd.s32 1, %s116
            $region72: #{bilstm_moreff_forward.6} parent=65 // loop_footer_branch
              %115 = sbr.rel target = $region68
            $region73: #{bilstm_moreff_forward.6} parent=65 // loop_exit
              _
          $region66: #{bilstm_moreff_forward.6} parent=50 // pred_fallthru
            _
          // Predicated region
          $region74: #{bilstm_moreff_forward.6} parent=50 // pred_check
            _
          $region75: #{bilstm_moreff_forward.6} parent=50 // pred_check_branch
            %140 = sbr.rel target = $region77
          $region76: #{bilstm_moreff_forward.6} parent=50 // pred_region
            _
          $region77: #{bilstm_moreff_forward.6} parent=50 // pred_fallthru
            _
        $region51: #{bilstm_moreff_forward.6} parent=46 // pred_fallthru
          _
        // Predicated region
        $region52: #{bilstm_moreff_forward.6} parent=46 // pred_check
          _
        $region53: #{bilstm_moreff_forward.6} parent=46 // pred_check_branch
          %86 = sbr.rel target = $region55
        $region54: #{bilstm_moreff_forward.6} parent=46 // pred_region
          %s88 = ssub.s32 256, 1
          loop: start=0, step=1, limit=1
          $region56: #{bilstm_moreff_forward.6} parent=54 // loop_pre_header
            _
          $region57: #{bilstm_moreff_forward.6} parent=54 // loop_header
            %s90 = sphi 0, %s94
            %p91 = scmp.ge.s32.totalorder %s90, 1
            %s95 = sphi %s80, %s80
            %s96 = sphi [#allocation7], [#allocation7]
          $region58: #{bilstm_moreff_forward.6} parent=54 // loop_header_branch
            %93 = sbr.rel (%p91) target = $region62
          $region59: #{bilstm_moreff_forward.6} parent=54 // loop_body
            %v97 = vld [vmem:[%s95] sm:%s88]
            %98 = vst [vmem:[%s96] sm:%s88] %v97
            %v99 = vld [vmem:[%s95 + $0x10] sm:%s88]
            %100 = vst [vmem:[%s96 + $0x8] sm:%s88] %v99
            %v101 = vld [vmem:[%s95 + $0x20] sm:%s88]
            %102 = vst [vmem:[%s96 + $0x10] sm:%s88] %v101
            %v103 = vld [vmem:[%s95 + $0x30] sm:%s88]
            %104 = vst [vmem:[%s96 + $0x18] sm:%s88] %v103
            %v105 = vld [vmem:[%s95 + $0x40] sm:%s88]
            %106 = vst [vmem:[%s96 + $0x20] sm:%s88] %v105
            %v107 = vld [vmem:[%s95 + $0x50] sm:%s88]
            %108 = vst [vmem:[%s96 + $0x28] sm:%s88] %v107
            %v109 = vld [vmem:[%s95 + $0x60] sm:%s88]
            %110 = vst [vmem:[%s96 + $0x30] sm:%s88] %v109
            %v111 = vld [vmem:[%s95 + $0x70] sm:%s88]
            %112 = vst [vmem:[%s96 + $0x38] sm:%s88] %v111
          $region60: #{bilstm_moreff_forward.6} parent=54 // loop_footer
            %s94 = sadd.s32 1, %s90
          $region61: #{bilstm_moreff_forward.6} parent=54 // loop_footer_branch
            %89 = sbr.rel target = $region57
          $region62: #{bilstm_moreff_forward.6} parent=54 // loop_exit
            _
        $region55: #{bilstm_moreff_forward.6} parent=46 // pred_fallthru
          _
      $region47: #{bilstm_moreff_forward.6} parent=42 // pred_fallthru
        _
      %141 = vnop
    $region43: #{bilstm_moreff_forward.6} parent=1 // pred_fallthru
      _
    // Predicated region
    $region78: #{bilstm_moreff_forward.6} parent=1 // pred_check
      _
    $region79: #{bilstm_moreff_forward.6} parent=1 // pred_check_branch
      %143 = sbr.rel (0) target = $region81
    $region80: #{bilstm_moreff_forward.6} parent=1 // pred_region
      _
    $region81: #{bilstm_moreff_forward.6} parent=1 // pred_fallthru
      _
    // Predicated region
    $region82: #{bilstm_moreff_forward.6} parent=1 // pred_check
      _
    $region83: #{bilstm_moreff_forward.6} parent=1 // pred_check_branch
      %145 = sbr.rel (0) target = $region85
    $region84: #{bilstm_moreff_forward.6} parent=1 // pred_region
      _
    $region85: #{bilstm_moreff_forward.6} parent=1 // pred_fallthru
      _
    // Predicated region
    $region86: #{bilstm_moreff_forward.6} parent=1 // pred_check
      _
    $region87: #{bilstm_moreff_forward.6} parent=1 // pred_check_branch
      %147 = sbr.rel (0) target = $region89
    $region88: #{bilstm_moreff_forward.6} parent=1 // pred_region
      _
    $region89: #{bilstm_moreff_forward.6} parent=1 // pred_fallthru
      _
    %s148 = ssub.s32 0, 0
    %s149 = smul.u32 8, %s148
    %p150 = scmp.lt.s32.totalorder %s149, 7
    %s151 = scalar_select %p150, %s149, 7
    %s152 = smul.addr %s151, 4
    %s153 = scalar_lea.vmem %s4, %s152
    %s154 = ssub.s32 0, 0
    %s155 = smul.u32 8, %s154
    %s156 = ssub.s32 0, 0
    %s157 = smul.u32 8, %s156
    %p158 = scmp.lt.s32.totalorder %s157, 7
    %s159 = scalar_select %p158, %s157, 7
    %s160 = smul.addr %s159, 4
    %s161 = scalar_lea.vmem %s4, %s160
    %s162 = ssub.s32 0, 0
    %s163 = smul.u32 8, %s162
    %p165 = scmp.eq.s32.totalorder 0, 0
    // Predicated region
    $region90: #{bilstm_moreff_forward.6} parent=1 // pred_check
      %p166 = pneg %p165
    $region91: #{bilstm_moreff_forward.6} parent=1 // pred_check_branch
      %168 = sbr.rel (%p166) target = $region93
    $region92: #{bilstm_moreff_forward.6} parent=1 // pred_region
      %vm169 = vcmask 261120
      %170 = vst.msk [vmem:[#allocation2] sm:$0xff] %vm169, 0.0
      %171 = vst.msk [vmem:[#allocation3] sm:$0xff] %vm169, 0.0
      %172 = vst.msk [vmem:[#allocation4] sm:$0xff] %vm169, 0.0
      %173 = vst.msk [vmem:[#allocation5] sm:$0xff] %vm169, 0.0
    $region93: #{bilstm_moreff_forward.6} parent=1 // pred_fallthru
      _
    %v174 = vld [vmem:[%s2] sm:$0xff]
    %v175 = vld [vmem:[%s2 + $0x8] sm:$0xff]
    %v176 = vld [vmem:[%s2 + $0x10] sm:$0xff]
    %v177 = vld [vmem:[%s2 + $0x18] sm:$0xff]
    %v178 = vld [vmem:[%s2 + $0x20] sm:$0xff]
    %v179 = vld [vmem:[%s2 + $0x28] sm:$0xff]
    %v180 = vld [vmem:[%s2 + $0x30] sm:$0xff]
    %v181 = vld [vmem:[%s2 + $0x38] sm:$0xff]
    %v182 = vld [vmem:[#allocation2] sm:$0xff]
    %v183 = vld [vmem:[#allocation3] sm:$0xff]
    %v184 = vld [vmem:[#allocation4] sm:$0xff]
    %v185 = vld [vmem:[#allocation5] sm:$0xff]
    %187 = vrot.lane.b32.xlu0 %v183, 32
    %v188 = vpop.permute.xlu0 %187
    %vm190 = vcmask 261120
    %v191 = vsel %vm190, %v182, %v188
    %v192 = vpack.c.bf16 %v191, %v191
    %v201 = vunpack.c.l.b16 %v174
    %v202 = vunpack.c.h.b16 %v174
    %v203 = vunpack.c.l.b16 %v175
    %v204 = vunpack.c.h.b16 %v175
    %v205 = vunpack.c.l.b16 %v176
    %v206 = vunpack.c.h.b16 %v176
    %v207 = vunpack.c.l.b16 %v177
    %v208 = vunpack.c.h.b16 %v177
    %v209 = vunpack.c.l.b16 %v178
    %v210 = vunpack.c.h.b16 %v178
    %v211 = vunpack.c.l.b16 %v179
    %v212 = vunpack.c.h.b16 %v179
    %v213 = vunpack.c.l.b16 %v180
    %v214 = vunpack.c.h.b16 %v180
    %v215 = vunpack.c.l.b16 %v181
    %v216 = vunpack.c.h.b16 %v181
    %v217 = vpack.c.b16 %v203, %v201
    %v218 = vpack.c.b16 %v204, %v202
    %v219 = vpack.c.b16 %v207, %v205
    %v220 = vpack.c.b16 %v208, %v206
    %v221 = vpack.c.b16 %v211, %v209
    %v222 = vpack.c.b16 %v212, %v210
    %v223 = vpack.c.b16 %v215, %v213
    %v224 = vpack.c.b16 %v216, %v214
    %vm233 = vcmask 523264
    %v235 = vsel %vm233, %v192, 0
    %237 = vmatpush.bf16.msra.mxu0 0
    %238 = vmatpush.bf16.msra.mxu0 0
    %239 = vmatpush.bf16.msra.mxu0 0
    %240 = vmatpush.bf16.msra.mxu0 0
    %241 = vmatpush.bf16.msra.mxu0 %v223
    %242 = vmatpush.bf16.msra.mxu0 %v221
    %243 = vmatpush.bf16.msra.mxu0 %v219
    %244 = vmatpush.bf16.msra.mxu0 %v217
    %245 = vmatmul.bf16.gmra.mxu0 %v235
    %v246 = vpop.f32.mrf.mxu0
    %v247 = vadd.f32 0.0, %v246
    %v248 = vpop.f32.mrf.mxu0
    %249 = vdwg.mxu0
    %250 = vmatpush.bf16.msra.mxu0 0
    %251 = vmatpush.bf16.msra.mxu0 0
    %252 = vmatpush.bf16.msra.mxu0 0
    %253 = vmatpush.bf16.msra.mxu0 0
    %254 = vmatpush.bf16.msra.mxu0 %v224
    %255 = vmatpush.bf16.msra.mxu0 %v222
    %256 = vmatpush.bf16.msra.mxu0 %v220
    %257 = vmatpush.bf16.msra.mxu0 %v218
    %258 = vmatmul.bf16.gmra.mxu0 %v235
    %v259 = vpop.f32.mrf.mxu0
    %v260 = vadd.f32 0.0, %v259
    %v261 = vpop.f32.mrf.mxu0
    %262 = vdwg.mxu0
    %v263 = vld [vmem:[#allocation6] sm:$0xff]
    %v264 = vadd.f32 %v263, %v247
    %s265 = scalar_lea.vmem [#allocation7], 56
    %v266 = vld [vmem:[%s265] sm:$0xff]
    %v267 = vadd.f32 %v266, %v260
    %v268 = vxor.u32 %v264, 2147483648
    %v269 = vmul.f32 %v268, 1.442695
    %v270 = vpow.pop %v269
    %v271 = vadd.f32 %v270, 1.0
    %v272 = vrcp.pop %v271
    %v273 = vmul.f32 %v271, %v272
    %v274 = vsub.f32 1.0, %v273
    %v275 = vmul.f32 %v272, %v274
    %v276 = vadd.f32 %v272, %v275
    %vm277 = vweird.f32 %v271
    %vm278 = vweird.f32 %v272
    %vm279 = vmor %vm277, %vm278
    %v280 = vsel %vm279, %v272, %v276
    %v281 = vand.u32 2147483647, %v271
    %vm282 = vcmp.eq.f32.partialorder %v281, 8.507059e+37
    %v283 = vand.u32 %v271, 2147483648
    %v284 = vor.u32 1.1754944e-38, %v283
    %v285 = vsel %vm282, %v284, %v280
    %v286 = vmul.f32 1.0, %v285
    %v287 = vtanh.pop %v264
    %289 = vrot.lane.b32.xlu0 %v184, 32
    %v290 = vpop.permute.xlu0 %289
    %v292 = vmul.f32 %v286, %v290
    %294 = vrot.lane.b32.xlu0 %v287, 32
    %v295 = vpop.permute.xlu0 %294
    %v297 = vmul.f32 %v286, %v295
    %299 = vrot.lane.b32.xlu0 %v297, 32
    %v300 = vpop.permute.xlu0 %299
    %v302 = vadd.f32 %v292, %v300
    %v303 = vtanh.pop %v302
    %305 = vrot.lane.b32.xlu0 %v303, 32
    %v306 = vpop.permute.xlu0 %305
    %v308 = vmul.f32 %v286, %v306
    %v309 = vxor.u32 %v267, 2147483648
    %v310 = vmul.f32 %v309, 1.442695
    %v311 = vpow.pop %v310
    %v312 = vadd.f32 %v311, 1.0
    %v313 = vrcp.pop %v312
    %v314 = vmul.f32 %v312, %v313
    %v315 = vsub.f32 1.0, %v314
    %v316 = vmul.f32 %v313, %v315
    %v317 = vadd.f32 %v313, %v316
    %vm318 = vweird.f32 %v312
    %vm319 = vweird.f32 %v313
    %vm320 = vmor %vm318, %vm319
    %v321 = vsel %vm320, %v313, %v317
    %v322 = vand.u32 2147483647, %v312
    %vm323 = vcmp.eq.f32.partialorder %v322, 8.507059e+37
    %v324 = vand.u32 %v312, 2147483648
    %v325 = vor.u32 1.1754944e-38, %v324
    %v326 = vsel %vm323, %v325, %v321
    %v327 = vmul.f32 1.0, %v326
    %v328 = vtanh.pop %v267
    %330 = vrot.lane.b32.xlu0 %v185, 32
    %v331 = vpop.permute.xlu0 %330
    %v333 = vmul.f32 %v327, %v331
    %335 = vrot.lane.b32.xlu0 %v328, 32
    %v336 = vpop.permute.xlu0 %335
    %v338 = vmul.f32 %v327, %v336
    %340 = vrot.lane.b32.xlu0 %v338, 32
    %v341 = vpop.permute.xlu0 %340
    %v343 = vadd.f32 %v333, %v341
    %v344 = vtanh.pop %v343
    %346 = vrot.lane.b32.xlu0 %v344, 32
    %v347 = vpop.permute.xlu0 %346
    %v349 = vmul.f32 %v327, %v347
    %v350 = vpack.c.bf16 %v308, %v308
    %352 = vrot.lane.b32.xlu0 %v350, 64
    %v353 = vpop.permute.xlu0 %352
    %vm355 = vcmask 257024
    %356 = vst.msk [vmem:[%s3] sm:$0xf] %vm355, %v353
    %v357 = vpack.c.bf16 %v349, %v349
    %359 = vrot.lane.b32.xlu0 %v357, 64
    %v360 = vpop.permute.xlu0 %359
    %s362 = scalar_lea.vmem %s161, 28
    %363 = vst.msk [vmem:[%s362] sm:$0xf] %vm355, %v360
    %365 = vrot.lane.b32.xlu0 %v308, 64
    %v366 = vpop.permute.xlu0 %365
    %369 = vrot.lane.b32.xlu0 %v349, 96
    %v370 = vpop.permute.xlu0 %369
    %v372 = vsel %vm190, %v366, %v370
    %v373 = vpack.c.bf16 %v372, %v372
    %v375 = vsel %vm233, %v373, 0
    %377 = vmatpush.bf16.msra.mxu0 0
    %378 = vmatpush.bf16.msra.mxu0 0
    %379 = vmatpush.bf16.msra.mxu0 0
    %380 = vmatpush.bf16.msra.mxu0 0
    %381 = vmatpush.bf16.msra.mxu0 %v223
    %382 = vmatpush.bf16.msra.mxu0 %v221
    %383 = vmatpush.bf16.msra.mxu0 %v219
    %384 = vmatpush.bf16.msra.mxu0 %v217
    %385 = vmatmul.bf16.gmra.mxu0 %v375
    %v386 = vpop.f32.mrf.mxu0
    %v387 = vadd.f32 0.0, %v386
    %v388 = vpop.f32.mrf.mxu0
    %389 = vdwg.mxu0
    %390 = vmatpush.bf16.msra.mxu0 0
    %391 = vmatpush.bf16.msra.mxu0 0
    %392 = vmatpush.bf16.msra.mxu0 0
    %393 = vmatpush.bf16.msra.mxu0 0
    %394 = vmatpush.bf16.msra.mxu0 %v224
    %395 = vmatpush.bf16.msra.mxu0 %v222
    %396 = vmatpush.bf16.msra.mxu0 %v220
    %397 = vmatpush.bf16.msra.mxu0 %v218
    %398 = vmatmul.bf16.gmra.mxu0 %v375
    %v399 = vpop.f32.mrf.mxu0
    %v400 = vadd.f32 0.0, %v399
    %v401 = vpop.f32.mrf.mxu0
    %402 = vdwg.mxu0
    %s403 = scalar_lea.vmem [#allocation6], 8
    %v404 = vld [vmem:[%s403] sm:$0xff]
    %v405 = vadd.f32 %v404, %v387
    %s406 = scalar_lea.vmem [#allocation7], 48
    %v407 = vld [vmem:[%s406] sm:$0xff]
    %v408 = vadd.f32 %v407, %v400
    %v409 = vxor.u32 %v405, 2147483648
    %v410 = vmul.f32 %v409, 1.442695
    %v411 = vpow.pop %v410
    %v412 = vadd.f32 %v411, 1.0
    %v413 = vrcp.pop %v412
    %v414 = vmul.f32 %v412, %v413
    %v415 = vsub.f32 1.0, %v414
    %v416 = vmul.f32 %v413, %v415
    %v417 = vadd.f32 %v413, %v416
    %vm418 = vweird.f32 %v412
    %vm419 = vweird.f32 %v413
    %vm420 = vmor %vm418, %vm419
    %v421 = vsel %vm420, %v413, %v417
    %v422 = vand.u32 2147483647, %v412
    %vm423 = vcmp.eq.f32.partialorder %v422, 8.507059e+37
    %v424 = vand.u32 %v412, 2147483648
    %v425 = vor.u32 1.1754944e-38, %v424
    %v426 = vsel %vm423, %v425, %v421
    %v427 = vmul.f32 1.0, %v426
    %v428 = vtanh.pop %v405
    %v429 = vmul.f32 %v427, %v302
    %431 = vrot.lane.b32.xlu0 %v428, 32
    %v432 = vpop.permute.xlu0 %431
    %v434 = vmul.f32 %v427, %v432
    %436 = vrot.lane.b32.xlu0 %v434, 32
    %v437 = vpop.permute.xlu0 %436
    %v439 = vadd.f32 %v429, %v437
    %v440 = vtanh.pop %v439
    %442 = vrot.lane.b32.xlu0 %v440, 32
    %v443 = vpop.permute.xlu0 %442
    %v445 = vmul.f32 %v427, %v443
    %v446 = vxor.u32 %v408, 2147483648
    %v447 = vmul.f32 %v446, 1.442695
    %v448 = vpow.pop %v447
    %v449 = vadd.f32 %v448, 1.0
    %v450 = vrcp.pop %v449
    %v451 = vmul.f32 %v449, %v450
    %v452 = vsub.f32 1.0, %v451
    %v453 = vmul.f32 %v450, %v452
    %v454 = vadd.f32 %v450, %v453
    %vm455 = vweird.f32 %v449
    %vm456 = vweird.f32 %v450
    %vm457 = vmor %vm455, %vm456
    %v458 = vsel %vm457, %v450, %v454
    %v459 = vand.u32 2147483647, %v449
    %vm460 = vcmp.eq.f32.partialorder %v459, 8.507059e+37
    %v461 = vand.u32 %v449, 2147483648
    %v462 = vor.u32 1.1754944e-38, %v461
    %v463 = vsel %vm460, %v462, %v458
    %v464 = vmul.f32 1.0, %v463
    %v465 = vtanh.pop %v408
    %v466 = vmul.f32 %v464, %v343
    %468 = vrot.lane.b32.xlu0 %v465, 32
    %v469 = vpop.permute.xlu0 %468
    %v471 = vmul.f32 %v464, %v469
    %473 = vrot.lane.b32.xlu0 %v471, 32
    %v474 = vpop.permute.xlu0 %473
    %v476 = vadd.f32 %v466, %v474
    %v477 = vtanh.pop %v476
    %479 = vrot.lane.b32.xlu0 %v477, 32
    %v480 = vpop.permute.xlu0 %479
    %v482 = vmul.f32 %v464, %v480
    %v483 = vpack.c.bf16 %v445, %v445
    %485 = vrot.lane.b32.xlu0 %v483, 64
    %v486 = vpop.permute.xlu0 %485
    %s488 = scalar_lea.vmem %s3, 4
    %489 = vst.msk [vmem:[%s488] sm:$0xf] %vm355, %v486
    %v490 = vpack.c.bf16 %v482, %v482
    %492 = vrot.lane.b32.xlu0 %v490, 64
    %v493 = vpop.permute.xlu0 %492
    %s495 = scalar_lea.vmem %s161, 24
    %496 = vst.msk [vmem:[%s495] sm:$0xf] %vm355, %v493
    %498 = vrot.lane.b32.xlu0 %v445, 64
    %v499 = vpop.permute.xlu0 %498
    %502 = vrot.lane.b32.xlu0 %v482, 96
    %v503 = vpop.permute.xlu0 %502
    %v505 = vsel %vm190, %v499, %v503
    %v506 = vpack.c.bf16 %v505, %v505
    %v508 = vsel %vm233, %v506, 0
    %510 = vmatpush.bf16.msra.mxu0 0
    %511 = vmatpush.bf16.msra.mxu0 0
    %512 = vmatpush.bf16.msra.mxu0 0
    %513 = vmatpush.bf16.msra.mxu0 0
    %514 = vmatpush.bf16.msra.mxu0 %v223
    %515 = vmatpush.bf16.msra.mxu0 %v221
    %516 = vmatpush.bf16.msra.mxu0 %v219
    %517 = vmatpush.bf16.msra.mxu0 %v217
    %518 = vmatmul.bf16.gmra.mxu0 %v508
    %v519 = vpop.f32.mrf.mxu0
    %v520 = vadd.f32 0.0, %v519
    %v521 = vpop.f32.mrf.mxu0
    %522 = vdwg.mxu0
    %523 = vmatpush.bf16.msra.mxu0 0
    %524 = vmatpush.bf16.msra.mxu0 0
    %525 = vmatpush.bf16.msra.mxu0 0
    %526 = vmatpush.bf16.msra.mxu0 0
    %527 = vmatpush.bf16.msra.mxu0 %v224
    %528 = vmatpush.bf16.msra.mxu0 %v222
    %529 = vmatpush.bf16.msra.mxu0 %v220
    %530 = vmatpush.bf16.msra.mxu0 %v218
    %531 = vmatmul.bf16.gmra.mxu0 %v508
    %v532 = vpop.f32.mrf.mxu0
    %v533 = vadd.f32 0.0, %v532
    %v534 = vpop.f32.mrf.mxu0
    %535 = vdwg.mxu0
    %s536 = scalar_lea.vmem [#allocation6], 16
    %v537 = vld [vmem:[%s536] sm:$0xff]
    %v538 = vadd.f32 %v537, %v520
    %s539 = scalar_lea.vmem [#allocation7], 40
    %v540 = vld [vmem:[%s539] sm:$0xff]
    %v541 = vadd.f32 %v540, %v533
    %v542 = vxor.u32 %v538, 2147483648
    %v543 = vmul.f32 %v542, 1.442695
    %v544 = vpow.pop %v543
    %v545 = vadd.f32 %v544, 1.0
    %v546 = vrcp.pop %v545
    %v547 = vmul.f32 %v545, %v546
    %v548 = vsub.f32 1.0, %v547
    %v549 = vmul.f32 %v546, %v548
    %v550 = vadd.f32 %v546, %v549
    %vm551 = vweird.f32 %v545
    %vm552 = vweird.f32 %v546
    %vm553 = vmor %vm551, %vm552
    %v554 = vsel %vm553, %v546, %v550
    %v555 = vand.u32 2147483647, %v545
    %vm556 = vcmp.eq.f32.partialorder %v555, 8.507059e+37
    %v557 = vand.u32 %v545, 2147483648
    %v558 = vor.u32 1.1754944e-38, %v557
    %v559 = vsel %vm556, %v558, %v554
    %v560 = vmul.f32 1.0, %v559
    %v561 = vtanh.pop %v538
    %v562 = vmul.f32 %v560, %v439
    %564 = vrot.lane.b32.xlu0 %v561, 32
    %v565 = vpop.permute.xlu0 %564
    %v567 = vmul.f32 %v560, %v565
    %569 = vrot.lane.b32.xlu0 %v567, 32
    %v570 = vpop.permute.xlu0 %569
    %v572 = vadd.f32 %v562, %v570
    %v573 = vtanh.pop %v572
    %575 = vrot.lane.b32.xlu0 %v573, 32
    %v576 = vpop.permute.xlu0 %575
    %v578 = vmul.f32 %v560, %v576
    %v579 = vxor.u32 %v541, 2147483648
    %v580 = vmul.f32 %v579, 1.442695
    %v581 = vpow.pop %v580
    %v582 = vadd.f32 %v581, 1.0
    %v583 = vrcp.pop %v582
    %v584 = vmul.f32 %v582, %v583
    %v585 = vsub.f32 1.0, %v584
    %v586 = vmul.f32 %v583, %v585
    %v587 = vadd.f32 %v583, %v586
    %vm588 = vweird.f32 %v582
    %vm589 = vweird.f32 %v583
    %vm590 = vmor %vm588, %vm589
    %v591 = vsel %vm590, %v583, %v587
    %v592 = vand.u32 2147483647, %v582
    %vm593 = vcmp.eq.f32.partialorder %v592, 8.507059e+37
    %v594 = vand.u32 %v582, 2147483648
    %v595 = vor.u32 1.1754944e-38, %v594
    %v596 = vsel %vm593, %v595, %v591
    %v597 = vmul.f32 1.0, %v596
    %v598 = vtanh.pop %v541
    %v599 = vmul.f32 %v597, %v476
    %601 = vrot.lane.b32.xlu0 %v598, 32
    %v602 = vpop.permute.xlu0 %601
    %v604 = vmul.f32 %v597, %v602
    %606 = vrot.lane.b32.xlu0 %v604, 32
    %v607 = vpop.permute.xlu0 %606
    %v609 = vadd.f32 %v599, %v607
    %v610 = vtanh.pop %v609
    %612 = vrot.lane.b32.xlu0 %v610, 32
    %v613 = vpop.permute.xlu0 %612
    %v615 = vmul.f32 %v597, %v613
    %v616 = vpack.c.bf16 %v578, %v578
    %618 = vrot.lane.b32.xlu0 %v616, 64
    %v619 = vpop.permute.xlu0 %618
    %s621 = scalar_lea.vmem %s3, 8
    %622 = vst.msk [vmem:[%s621] sm:$0xf] %vm355, %v619
    %v623 = vpack.c.bf16 %v615, %v615
    %625 = vrot.lane.b32.xlu0 %v623, 64
    %v626 = vpop.permute.xlu0 %625
    %s628 = scalar_lea.vmem %s161, 20
    %629 = vst.msk [vmem:[%s628] sm:$0xf] %vm355, %v626
    %631 = vrot.lane.b32.xlu0 %v578, 64
    %v632 = vpop.permute.xlu0 %631
    %635 = vrot.lane.b32.xlu0 %v615, 96
    %v636 = vpop.permute.xlu0 %635
    %v638 = vsel %vm190, %v632, %v636
    %v639 = vpack.c.bf16 %v638, %v638
    %v641 = vsel %vm233, %v639, 0
    %643 = vmatpush.bf16.msra.mxu0 0
    %644 = vmatpush.bf16.msra.mxu0 0
    %645 = vmatpush.bf16.msra.mxu0 0
    %646 = vmatpush.bf16.msra.mxu0 0
    %647 = vmatpush.bf16.msra.mxu0 %v223
    %648 = vmatpush.bf16.msra.mxu0 %v221
    %649 = vmatpush.bf16.msra.mxu0 %v219
    %650 = vmatpush.bf16.msra.mxu0 %v217
    %651 = vmatmul.bf16.gmra.mxu0 %v641
    %v652 = vpop.f32.mrf.mxu0
    %v653 = vadd.f32 0.0, %v652
    %v654 = vpop.f32.mrf.mxu0
    %655 = vdwg.mxu0
    %656 = vmatpush.bf16.msra.mxu0 0
    %657 = vmatpush.bf16.msra.mxu0 0
    %658 = vmatpush.bf16.msra.mxu0 0
    %659 = vmatpush.bf16.msra.mxu0 0
    %660 = vmatpush.bf16.msra.mxu0 %v224
    %661 = vmatpush.bf16.msra.mxu0 %v222
    %662 = vmatpush.bf16.msra.mxu0 %v220
    %663 = vmatpush.bf16.msra.mxu0 %v218
    %664 = vmatmul.bf16.gmra.mxu0 %v641
    %v665 = vpop.f32.mrf.mxu0
    %v666 = vadd.f32 0.0, %v665
    %v667 = vpop.f32.mrf.mxu0
    %668 = vdwg.mxu0
    %s669 = scalar_lea.vmem [#allocation6], 24
    %v670 = vld [vmem:[%s669] sm:$0xff]
    %v671 = vadd.f32 %v670, %v653
    %s672 = scalar_lea.vmem [#allocation7], 32
    %v673 = vld [vmem:[%s672] sm:$0xff]
    %v674 = vadd.f32 %v673, %v666
    %v675 = vxor.u32 %v671, 2147483648
    %v676 = vmul.f32 %v675, 1.442695
    %v677 = vpow.pop %v676
    %v678 = vadd.f32 %v677, 1.0
    %v679 = vrcp.pop %v678
    %v680 = vmul.f32 %v678, %v679
    %v681 = vsub.f32 1.0, %v680
    %v682 = vmul.f32 %v679, %v681
    %v683 = vadd.f32 %v679, %v682
    %vm684 = vweird.f32 %v678
    %vm685 = vweird.f32 %v679
    %vm686 = vmor %vm684, %vm685
    %v687 = vsel %vm686, %v679, %v683
    %v688 = vand.u32 2147483647, %v678
    %vm689 = vcmp.eq.f32.partialorder %v688, 8.507059e+37
    %v690 = vand.u32 %v678, 2147483648
    %v691 = vor.u32 1.1754944e-38, %v690
    %v692 = vsel %vm689, %v691, %v687
    %v693 = vmul.f32 1.0, %v692
    %v694 = vtanh.pop %v671
    %v695 = vmul.f32 %v693, %v572
    %697 = vrot.lane.b32.xlu0 %v694, 32
    %v698 = vpop.permute.xlu0 %697
    %v700 = vmul.f32 %v693, %v698
    %702 = vrot.lane.b32.xlu0 %v700, 32
    %v703 = vpop.permute.xlu0 %702
    %v705 = vadd.f32 %v695, %v703
    %v706 = vtanh.pop %v705
    %708 = vrot.lane.b32.xlu0 %v706, 32
    %v709 = vpop.permute.xlu0 %708
    %v711 = vmul.f32 %v693, %v709
    %v712 = vxor.u32 %v674, 2147483648
    %v713 = vmul.f32 %v712, 1.442695
    %v714 = vpow.pop %v713
    %v715 = vadd.f32 %v714, 1.0
    %v716 = vrcp.pop %v715
    %v717 = vmul.f32 %v715, %v716
    %v718 = vsub.f32 1.0, %v717
    %v719 = vmul.f32 %v716, %v718
    %v720 = vadd.f32 %v716, %v719
    %vm721 = vweird.f32 %v715
    %vm722 = vweird.f32 %v716
    %vm723 = vmor %vm721, %vm722
    %v724 = vsel %vm723, %v716, %v720
    %v725 = vand.u32 2147483647, %v715
    %vm726 = vcmp.eq.f32.partialorder %v725, 8.507059e+37
    %v727 = vand.u32 %v715, 2147483648
    %v728 = vor.u32 1.1754944e-38, %v727
    %v729 = vsel %vm726, %v728, %v724
    %v730 = vmul.f32 1.0, %v729
    %v731 = vtanh.pop %v674
    %v732 = vmul.f32 %v730, %v609
    %734 = vrot.lane.b32.xlu0 %v731, 32
    %v735 = vpop.permute.xlu0 %734
    %v737 = vmul.f32 %v730, %v735
    %739 = vrot.lane.b32.xlu0 %v737, 32
    %v740 = vpop.permute.xlu0 %739
    %v742 = vadd.f32 %v732, %v740
    %v743 = vtanh.pop %v742
    %745 = vrot.lane.b32.xlu0 %v743, 32
    %v746 = vpop.permute.xlu0 %745
    %v748 = vmul.f32 %v730, %v746
    %v749 = vpack.c.bf16 %v711, %v711
    %751 = vrot.lane.b32.xlu0 %v749, 64
    %v752 = vpop.permute.xlu0 %751
    %s754 = scalar_lea.vmem %s3, 12
    %755 = vst.msk [vmem:[%s754] sm:$0xf] %vm355, %v752
    %v756 = vpack.c.bf16 %v748, %v748
    %758 = vrot.lane.b32.xlu0 %v756, 64
    %v759 = vpop.permute.xlu0 %758
    %s761 = scalar_lea.vmem %s161, 16
    %762 = vst.msk [vmem:[%s761] sm:$0xf] %vm355, %v759
    %764 = vrot.lane.b32.xlu0 %v711, 64
    %v765 = vpop.permute.xlu0 %764
    %768 = vrot.lane.b32.xlu0 %v748, 96
    %v769 = vpop.permute.xlu0 %768
    %v771 = vsel %vm190, %v765, %v769
    %v772 = vpack.c.bf16 %v771, %v771
    %v774 = vsel %vm233, %v772, 0
    %776 = vmatpush.bf16.msra.mxu0 0
    %777 = vmatpush.bf16.msra.mxu0 0
    %778 = vmatpush.bf16.msra.mxu0 0
    %779 = vmatpush.bf16.msra.mxu0 0
    %780 = vmatpush.bf16.msra.mxu0 %v223
    %781 = vmatpush.bf16.msra.mxu0 %v221
    %782 = vmatpush.bf16.msra.mxu0 %v219
    %783 = vmatpush.bf16.msra.mxu0 %v217
    %784 = vmatmul.bf16.gmra.mxu0 %v774
    %v785 = vpop.f32.mrf.mxu0
    %v786 = vadd.f32 0.0, %v785
    %v787 = vpop.f32.mrf.mxu0
    %788 = vdwg.mxu0
    %789 = vmatpush.bf16.msra.mxu0 0
    %790 = vmatpush.bf16.msra.mxu0 0
    %791 = vmatpush.bf16.msra.mxu0 0
    %792 = vmatpush.bf16.msra.mxu0 0
    %793 = vmatpush.bf16.msra.mxu0 %v224
    %794 = vmatpush.bf16.msra.mxu0 %v222
    %795 = vmatpush.bf16.msra.mxu0 %v220
    %796 = vmatpush.bf16.msra.mxu0 %v218
    %797 = vmatmul.bf16.gmra.mxu0 %v774
    %v798 = vpop.f32.mrf.mxu0
    %v799 = vadd.f32 0.0, %v798
    %v800 = vpop.f32.mrf.mxu0
    %801 = vdwg.mxu0
    %s802 = scalar_lea.vmem [#allocation6], 32
    %v803 = vld [vmem:[%s802] sm:$0xff]
    %v804 = vadd.f32 %v803, %v786
    %s805 = scalar_lea.vmem [#allocation7], 24
    %v806 = vld [vmem:[%s805] sm:$0xff]
    %v807 = vadd.f32 %v806, %v799
    %v808 = vxor.u32 %v804, 2147483648
    %v809 = vmul.f32 %v808, 1.442695
    %v810 = vpow.pop %v809
    %v811 = vadd.f32 %v810, 1.0
    %v812 = vrcp.pop %v811
    %v813 = vmul.f32 %v811, %v812
    %v814 = vsub.f32 1.0, %v813
    %v815 = vmul.f32 %v812, %v814
    %v816 = vadd.f32 %v812, %v815
    %vm817 = vweird.f32 %v811
    %vm818 = vweird.f32 %v812
    %vm819 = vmor %vm817, %vm818
    %v820 = vsel %vm819, %v812, %v816
    %v821 = vand.u32 2147483647, %v811
    %vm822 = vcmp.eq.f32.partialorder %v821, 8.507059e+37
    %v823 = vand.u32 %v811, 2147483648
    %v824 = vor.u32 1.1754944e-38, %v823
    %v825 = vsel %vm822, %v824, %v820
    %v826 = vmul.f32 1.0, %v825
    %v827 = vtanh.pop %v804
    %v828 = vmul.f32 %v826, %v705
    %830 = vrot.lane.b32.xlu0 %v827, 32
    %v831 = vpop.permute.xlu0 %830
    %v833 = vmul.f32 %v826, %v831
    %835 = vrot.lane.b32.xlu0 %v833, 32
    %v836 = vpop.permute.xlu0 %835
    %v838 = vadd.f32 %v828, %v836
    %v839 = vtanh.pop %v838
    %841 = vrot.lane.b32.xlu0 %v839, 32
    %v842 = vpop.permute.xlu0 %841
    %v844 = vmul.f32 %v826, %v842
    %v845 = vxor.u32 %v807, 2147483648
    %v846 = vmul.f32 %v845, 1.442695
    %v847 = vpow.pop %v846
    %v848 = vadd.f32 %v847, 1.0
    %v849 = vrcp.pop %v848
    %v850 = vmul.f32 %v848, %v849
    %v851 = vsub.f32 1.0, %v850
    %v852 = vmul.f32 %v849, %v851
    %v853 = vadd.f32 %v849, %v852
    %vm854 = vweird.f32 %v848
    %vm855 = vweird.f32 %v849
    %vm856 = vmor %vm854, %vm855
    %v857 = vsel %vm856, %v849, %v853
    %v858 = vand.u32 2147483647, %v848
    %vm859 = vcmp.eq.f32.partialorder %v858, 8.507059e+37
    %v860 = vand.u32 %v848, 2147483648
    %v861 = vor.u32 1.1754944e-38, %v860
    %v862 = vsel %vm859, %v861, %v857
    %v863 = vmul.f32 1.0, %v862
    %v864 = vtanh.pop %v807
    %v865 = vmul.f32 %v863, %v742
    %867 = vrot.lane.b32.xlu0 %v864, 32
    %v868 = vpop.permute.xlu0 %867
    %v870 = vmul.f32 %v863, %v868
    %872 = vrot.lane.b32.xlu0 %v870, 32
    %v873 = vpop.permute.xlu0 %872
    %v875 = vadd.f32 %v865, %v873
    %v876 = vtanh.pop %v875
    %878 = vrot.lane.b32.xlu0 %v876, 32
    %v879 = vpop.permute.xlu0 %878
    %v881 = vmul.f32 %v863, %v879
    %v882 = vpack.c.bf16 %v844, %v844
    %884 = vrot.lane.b32.xlu0 %v882, 64
    %v885 = vpop.permute.xlu0 %884
    %s887 = scalar_lea.vmem %s3, 16
    %888 = vst.msk [vmem:[%s887] sm:$0xf] %vm355, %v885
    %v889 = vpack.c.bf16 %v881, %v881
    %891 = vrot.lane.b32.xlu0 %v889, 64
    %v892 = vpop.permute.xlu0 %891
    %s894 = scalar_lea.vmem %s161, 12
    %895 = vst.msk [vmem:[%s894] sm:$0xf] %vm355, %v892
    %897 = vrot.lane.b32.xlu0 %v844, 64
    %v898 = vpop.permute.xlu0 %897
    %901 = vrot.lane.b32.xlu0 %v881, 96
    %v902 = vpop.permute.xlu0 %901
    %v904 = vsel %vm190, %v898, %v902
    %v905 = vpack.c.bf16 %v904, %v904
    %v907 = vsel %vm233, %v905, 0
    %909 = vmatpush.bf16.msra.mxu0 0
    %910 = vmatpush.bf16.msra.mxu0 0
    %911 = vmatpush.bf16.msra.mxu0 0
    %912 = vmatpush.bf16.msra.mxu0 0
    %913 = vmatpush.bf16.msra.mxu0 %v223
    %914 = vmatpush.bf16.msra.mxu0 %v221
    %915 = vmatpush.bf16.msra.mxu0 %v219
    %916 = vmatpush.bf16.msra.mxu0 %v217
    %917 = vmatmul.bf16.gmra.mxu0 %v907
    %v918 = vpop.f32.mrf.mxu0
    %v919 = vadd.f32 0.0, %v918
    %v920 = vpop.f32.mrf.mxu0
    %921 = vdwg.mxu0
    %922 = vmatpush.bf16.msra.mxu0 0
    %923 = vmatpush.bf16.msra.mxu0 0
    %924 = vmatpush.bf16.msra.mxu0 0
    %925 = vmatpush.bf16.msra.mxu0 0
    %926 = vmatpush.bf16.msra.mxu0 %v224
    %927 = vmatpush.bf16.msra.mxu0 %v222
    %928 = vmatpush.bf16.msra.mxu0 %v220
    %929 = vmatpush.bf16.msra.mxu0 %v218
    %930 = vmatmul.bf16.gmra.mxu0 %v907
    %v931 = vpop.f32.mrf.mxu0
    %v932 = vadd.f32 0.0, %v931
    %v933 = vpop.f32.mrf.mxu0
    %934 = vdwg.mxu0
    %s935 = scalar_lea.vmem [#allocation6], 40
    %v936 = vld [vmem:[%s935] sm:$0xff]
    %v937 = vadd.f32 %v936, %v919
    %s938 = scalar_lea.vmem [#allocation7], 16
    %v939 = vld [vmem:[%s938] sm:$0xff]
    %v940 = vadd.f32 %v939, %v932
    %v941 = vxor.u32 %v937, 2147483648
    %v942 = vmul.f32 %v941, 1.442695
    %v943 = vpow.pop %v942
    %v944 = vadd.f32 %v943, 1.0
    %v945 = vrcp.pop %v944
    %v946 = vmul.f32 %v944, %v945
    %v947 = vsub.f32 1.0, %v946
    %v948 = vmul.f32 %v945, %v947
    %v949 = vadd.f32 %v945, %v948
    %vm950 = vweird.f32 %v944
    %vm951 = vweird.f32 %v945
    %vm952 = vmor %vm950, %vm951
    %v953 = vsel %vm952, %v945, %v949
    %v954 = vand.u32 2147483647, %v944
    %vm955 = vcmp.eq.f32.partialorder %v954, 8.507059e+37
    %v956 = vand.u32 %v944, 2147483648
    %v957 = vor.u32 1.1754944e-38, %v956
    %v958 = vsel %vm955, %v957, %v953
    %v959 = vmul.f32 1.0, %v958
    %v960 = vtanh.pop %v937
    %v961 = vmul.f32 %v959, %v838
    %963 = vrot.lane.b32.xlu0 %v960, 32
    %v964 = vpop.permute.xlu0 %963
    %v966 = vmul.f32 %v959, %v964
    %968 = vrot.lane.b32.xlu0 %v966, 32
    %v969 = vpop.permute.xlu0 %968
    %v971 = vadd.f32 %v961, %v969
    %v972 = vtanh.pop %v971
    %974 = vrot.lane.b32.xlu0 %v972, 32
    %v975 = vpop.permute.xlu0 %974
    %v977 = vmul.f32 %v959, %v975
    %v978 = vxor.u32 %v940, 2147483648
    %v979 = vmul.f32 %v978, 1.442695
    %v980 = vpow.pop %v979
    %v981 = vadd.f32 %v980, 1.0
    %v982 = vrcp.pop %v981
    %v983 = vmul.f32 %v981, %v982
    %v984 = vsub.f32 1.0, %v983
    %v985 = vmul.f32 %v982, %v984
    %v986 = vadd.f32 %v982, %v985
    %vm987 = vweird.f32 %v981
    %vm988 = vweird.f32 %v982
    %vm989 = vmor %vm987, %vm988
    %v990 = vsel %vm989, %v982, %v986
    %v991 = vand.u32 2147483647, %v981
    %vm992 = vcmp.eq.f32.partialorder %v991, 8.507059e+37
    %v993 = vand.u32 %v981, 2147483648
    %v994 = vor.u32 1.1754944e-38, %v993
    %v995 = vsel %vm992, %v994, %v990
    %v996 = vmul.f32 1.0, %v995
    %v997 = vtanh.pop %v940
    %v998 = vmul.f32 %v996, %v875
    %1000 = vrot.lane.b32.xlu0 %v997, 32
    %v1001 = vpop.permute.xlu0 %1000
    %v1003 = vmul.f32 %v996, %v1001
    %1005 = vrot.lane.b32.xlu0 %v1003, 32
    %v1006 = vpop.permute.xlu0 %1005
    %v1008 = vadd.f32 %v998, %v1006
    %v1009 = vtanh.pop %v1008
    %1011 = vrot.lane.b32.xlu0 %v1009, 32
    %v1012 = vpop.permute.xlu0 %1011
    %v1014 = vmul.f32 %v996, %v1012
    %v1015 = vpack.c.bf16 %v977, %v977
    %1017 = vrot.lane.b32.xlu0 %v1015, 64
    %v1018 = vpop.permute.xlu0 %1017
    %s1020 = scalar_lea.vmem %s3, 20
    %1021 = vst.msk [vmem:[%s1020] sm:$0xf] %vm355, %v1018
    %v1022 = vpack.c.bf16 %v1014, %v1014
    %1024 = vrot.lane.b32.xlu0 %v1022, 64
    %v1025 = vpop.permute.xlu0 %1024
    %s1027 = scalar_lea.vmem %s161, 8
    %1028 = vst.msk [vmem:[%s1027] sm:$0xf] %vm355, %v1025
    %1030 = vrot.lane.b32.xlu0 %v977, 64
    %v1031 = vpop.permute.xlu0 %1030
    %1034 = vrot.lane.b32.xlu0 %v1014, 96
    %v1035 = vpop.permute.xlu0 %1034
    %v1037 = vsel %vm190, %v1031, %v1035
    %v1038 = vpack.c.bf16 %v1037, %v1037
    %v1040 = vsel %vm233, %v1038, 0
    %1042 = vmatpush.bf16.msra.mxu0 0
    %1043 = vmatpush.bf16.msra.mxu0 0
    %1044 = vmatpush.bf16.msra.mxu0 0
    %1045 = vmatpush.bf16.msra.mxu0 0
    %1046 = vmatpush.bf16.msra.mxu0 %v223
    %1047 = vmatpush.bf16.msra.mxu0 %v221
    %1048 = vmatpush.bf16.msra.mxu0 %v219
    %1049 = vmatpush.bf16.msra.mxu0 %v217
    %1050 = vmatmul.bf16.gmra.mxu0 %v1040
    %v1051 = vpop.f32.mrf.mxu0
    %v1052 = vadd.f32 0.0, %v1051
    %v1053 = vpop.f32.mrf.mxu0
    %1054 = vdwg.mxu0
    %1055 = vmatpush.bf16.msra.mxu0 0
    %1056 = vmatpush.bf16.msra.mxu0 0
    %1057 = vmatpush.bf16.msra.mxu0 0
    %1058 = vmatpush.bf16.msra.mxu0 0
    %1059 = vmatpush.bf16.msra.mxu0 %v224
    %1060 = vmatpush.bf16.msra.mxu0 %v222
    %1061 = vmatpush.bf16.msra.mxu0 %v220
    %1062 = vmatpush.bf16.msra.mxu0 %v218
    %1063 = vmatmul.bf16.gmra.mxu0 %v1040
    %v1064 = vpop.f32.mrf.mxu0
    %v1065 = vadd.f32 0.0, %v1064
    %v1066 = vpop.f32.mrf.mxu0
    %1067 = vdwg.mxu0
    %s1068 = scalar_lea.vmem [#allocation6], 48
    %v1069 = vld [vmem:[%s1068] sm:$0xff]
    %v1070 = vadd.f32 %v1069, %v1052
    %s1071 = scalar_lea.vmem [#allocation7], 8
    %v1072 = vld [vmem:[%s1071] sm:$0xff]
    %v1073 = vadd.f32 %v1072, %v1065
    %v1074 = vxor.u32 %v1070, 2147483648
    %v1075 = vmul.f32 %v1074, 1.442695
    %v1076 = vpow.pop %v1075
    %v1077 = vadd.f32 %v1076, 1.0
    %v1078 = vrcp.pop %v1077
    %v1079 = vmul.f32 %v1077, %v1078
    %v1080 = vsub.f32 1.0, %v1079
    %v1081 = vmul.f32 %v1078, %v1080
    %v1082 = vadd.f32 %v1078, %v1081
    %vm1083 = vweird.f32 %v1077
    %vm1084 = vweird.f32 %v1078
    %vm1085 = vmor %vm1083, %vm1084
    %v1086 = vsel %vm1085, %v1078, %v1082
    %v1087 = vand.u32 2147483647, %v1077
    %vm1088 = vcmp.eq.f32.partialorder %v1087, 8.507059e+37
    %v1089 = vand.u32 %v1077, 2147483648
    %v1090 = vor.u32 1.1754944e-38, %v1089
    %v1091 = vsel %vm1088, %v1090, %v1086
    %v1092 = vmul.f32 1.0, %v1091
    %v1093 = vtanh.pop %v1070
    %v1094 = vmul.f32 %v1092, %v971
    %1096 = vrot.lane.b32.xlu0 %v1093, 32
    %v1097 = vpop.permute.xlu0 %1096
    %v1099 = vmul.f32 %v1092, %v1097
    %1101 = vrot.lane.b32.xlu0 %v1099, 32
    %v1102 = vpop.permute.xlu0 %1101
    %v1104 = vadd.f32 %v1094, %v1102
    %v1105 = vtanh.pop %v1104
    %1107 = vrot.lane.b32.xlu0 %v1105, 32
    %v1108 = vpop.permute.xlu0 %1107
    %v1110 = vmul.f32 %v1092, %v1108
    %v1111 = vxor.u32 %v1073, 2147483648
    %v1112 = vmul.f32 %v1111, 1.442695
    %v1113 = vpow.pop %v1112
    %v1114 = vadd.f32 %v1113, 1.0
    %v1115 = vrcp.pop %v1114
    %v1116 = vmul.f32 %v1114, %v1115
    %v1117 = vsub.f32 1.0, %v1116
    %v1118 = vmul.f32 %v1115, %v1117
    %v1119 = vadd.f32 %v1115, %v1118
    %vm1120 = vweird.f32 %v1114
    %vm1121 = vweird.f32 %v1115
    %vm1122 = vmor %vm1120, %vm1121
    %v1123 = vsel %vm1122, %v1115, %v1119
    %v1124 = vand.u32 2147483647, %v1114
    %vm1125 = vcmp.eq.f32.partialorder %v1124, 8.507059e+37
    %v1126 = vand.u32 %v1114, 2147483648
    %v1127 = vor.u32 1.1754944e-38, %v1126
    %v1128 = vsel %vm1125, %v1127, %v1123
    %v1129 = vmul.f32 1.0, %v1128
    %v1130 = vtanh.pop %v1073
    %v1131 = vmul.f32 %v1129, %v1008
    %1133 = vrot.lane.b32.xlu0 %v1130, 32
    %v1134 = vpop.permute.xlu0 %1133
    %v1136 = vmul.f32 %v1129, %v1134
    %1138 = vrot.lane.b32.xlu0 %v1136, 32
    %v1139 = vpop.permute.xlu0 %1138
    %v1141 = vadd.f32 %v1131, %v1139
    %v1142 = vtanh.pop %v1141
    %1144 = vrot.lane.b32.xlu0 %v1142, 32
    %v1145 = vpop.permute.xlu0 %1144
    %v1147 = vmul.f32 %v1129, %v1145
    %v1148 = vpack.c.bf16 %v1110, %v1110
    %1150 = vrot.lane.b32.xlu0 %v1148, 64
    %v1151 = vpop.permute.xlu0 %1150
    %s1153 = scalar_lea.vmem %s3, 24
    %1154 = vst.msk [vmem:[%s1153] sm:$0xf] %vm355, %v1151
    %v1155 = vpack.c.bf16 %v1147, %v1147
    %1157 = vrot.lane.b32.xlu0 %v1155, 64
    %v1158 = vpop.permute.xlu0 %1157
    %s1160 = scalar_lea.vmem %s161, 4
    %1161 = vst.msk [vmem:[%s1160] sm:$0xf] %vm355, %v1158
    %1163 = vrot.lane.b32.xlu0 %v1110, 64
    %v1164 = vpop.permute.xlu0 %1163
    %1167 = vrot.lane.b32.xlu0 %v1147, 96
    %v1168 = vpop.permute.xlu0 %1167
    %v1170 = vsel %vm190, %v1164, %v1168
    %v1171 = vpack.c.bf16 %v1170, %v1170
    %v1173 = vsel %vm233, %v1171, 0
    %1175 = vmatpush.bf16.msra.mxu0 0
    %1176 = vmatpush.bf16.msra.mxu0 0
    %1177 = vmatpush.bf16.msra.mxu0 0
    %1178 = vmatpush.bf16.msra.mxu0 0
    %1179 = vmatpush.bf16.msra.mxu0 %v223
    %1180 = vmatpush.bf16.msra.mxu0 %v221
    %1181 = vmatpush.bf16.msra.mxu0 %v219
    %1182 = vmatpush.bf16.msra.mxu0 %v217
    %1183 = vmatmul.bf16.gmra.mxu0 %v1173
    %v1184 = vpop.f32.mrf.mxu0
    %v1185 = vadd.f32 0.0, %v1184
    %v1186 = vpop.f32.mrf.mxu0
    %1187 = vdwg.mxu0
    %1188 = vmatpush.bf16.msra.mxu0 0
    %1189 = vmatpush.bf16.msra.mxu0 0
    %1190 = vmatpush.bf16.msra.mxu0 0
    %1191 = vmatpush.bf16.msra.mxu0 0
    %1192 = vmatpush.bf16.msra.mxu0 %v224
    %1193 = vmatpush.bf16.msra.mxu0 %v222
    %1194 = vmatpush.bf16.msra.mxu0 %v220
    %1195 = vmatpush.bf16.msra.mxu0 %v218
    %1196 = vmatmul.bf16.gmra.mxu0 %v1173
    %v1197 = vpop.f32.mrf.mxu0
    %v1198 = vadd.f32 0.0, %v1197
    %v1199 = vpop.f32.mrf.mxu0
    %1200 = vdwg.mxu0
    %s1201 = scalar_lea.vmem [#allocation6], 56
    %v1202 = vld [vmem:[%s1201] sm:$0xff]
    %v1203 = vadd.f32 %v1202, %v1185
    %v1204 = vld [vmem:[#allocation7] sm:$0xff]
    %v1205 = vadd.f32 %v1204, %v1198
    %v1206 = vxor.u32 %v1203, 2147483648
    %v1207 = vmul.f32 %v1206, 1.442695
    %v1208 = vpow.pop %v1207
    %v1209 = vadd.f32 %v1208, 1.0
    %v1210 = vrcp.pop %v1209
    %v1211 = vmul.f32 %v1209, %v1210
    %v1212 = vsub.f32 1.0, %v1211
    %v1213 = vmul.f32 %v1210, %v1212
    %v1214 = vadd.f32 %v1210, %v1213
    %vm1215 = vweird.f32 %v1209
    %vm1216 = vweird.f32 %v1210
    %vm1217 = vmor %vm1215, %vm1216
    %v1218 = vsel %vm1217, %v1210, %v1214
    %v1219 = vand.u32 2147483647, %v1209
    %vm1220 = vcmp.eq.f32.partialorder %v1219, 8.507059e+37
    %v1221 = vand.u32 %v1209, 2147483648
    %v1222 = vor.u32 1.1754944e-38, %v1221
    %v1223 = vsel %vm1220, %v1222, %v1218
    %v1224 = vmul.f32 1.0, %v1223
    %v1225 = vtanh.pop %v1203
    %v1226 = vmul.f32 %v1224, %v1104
    %1228 = vrot.lane.b32.xlu0 %v1225, 32
    %v1229 = vpop.permute.xlu0 %1228
    %v1231 = vmul.f32 %v1224, %v1229
    %1233 = vrot.lane.b32.xlu0 %v1231, 32
    %v1234 = vpop.permute.xlu0 %1233
    %v1236 = vadd.f32 %v1226, %v1234
    %v1237 = vtanh.pop %v1236
    %1239 = vrot.lane.b32.xlu0 %v1237, 32
    %v1240 = vpop.permute.xlu0 %1239
    %v1242 = vmul.f32 %v1224, %v1240
    %v1243 = vxor.u32 %v1205, 2147483648
    %v1244 = vmul.f32 %v1243, 1.442695
    %v1245 = vpow.pop %v1244
    %v1246 = vadd.f32 %v1245, 1.0
    %v1247 = vrcp.pop %v1246
    %v1248 = vmul.f32 %v1246, %v1247
    %v1249 = vsub.f32 1.0, %v1248
    %v1250 = vmul.f32 %v1247, %v1249
    %v1251 = vadd.f32 %v1247, %v1250
    %vm1252 = vweird.f32 %v1246
    %vm1253 = vweird.f32 %v1247
    %vm1254 = vmor %vm1252, %vm1253
    %v1255 = vsel %vm1254, %v1247, %v1251
    %v1256 = vand.u32 2147483647, %v1246
    %vm1257 = vcmp.eq.f32.partialorder %v1256, 8.507059e+37
    %v1258 = vand.u32 %v1246, 2147483648
    %v1259 = vor.u32 1.1754944e-38, %v1258
    %v1260 = vsel %vm1257, %v1259, %v1255
    %v1261 = vmul.f32 1.0, %v1260
    %v1262 = vtanh.pop %v1205
    %v1263 = vmul.f32 %v1261, %v1141
    %1265 = vrot.lane.b32.xlu0 %v1262, 32
    %v1266 = vpop.permute.xlu0 %1265
    %v1268 = vmul.f32 %v1261, %v1266
    %1270 = vrot.lane.b32.xlu0 %v1268, 32
    %v1271 = vpop.permute.xlu0 %1270
    %v1273 = vadd.f32 %v1263, %v1271
    %v1274 = vtanh.pop %v1273
    %1276 = vrot.lane.b32.xlu0 %v1274, 32
    %v1277 = vpop.permute.xlu0 %1276
    %v1279 = vmul.f32 %v1261, %v1277
    %v1280 = vpack.c.bf16 %v1242, %v1242
    %1282 = vrot.lane.b32.xlu0 %v1280, 64
    %v1283 = vpop.permute.xlu0 %1282
    %s1285 = scalar_lea.vmem %s3, 28
    %1286 = vst.msk [vmem:[%s1285] sm:$0xf] %vm355, %v1283
    %v1287 = vpack.c.bf16 %v1279, %v1279
    %1289 = vrot.lane.b32.xlu0 %v1287, 64
    %v1290 = vpop.permute.xlu0 %1289
    %1292 = vst.msk [vmem:[%s161] sm:$0xf] %vm355, %v1290
    %1294 = vrot.lane.b32.xlu0 %v1242, 64
    %v1295 = vpop.permute.xlu0 %1294
    %1297 = vst.msk [vmem:[#allocation2] sm:$0xff] %vm190, %v1295
    %1299 = vrot.lane.b32.xlu0 %v1279, 64
    %v1300 = vpop.permute.xlu0 %1299
    %1302 = vst.msk [vmem:[#allocation3] sm:$0xff] %vm190, %v1300
    %1304 = vrot.lane.b32.xlu0 %v1236, 96
    %v1305 = vpop.permute.xlu0 %1304
    %1307 = vst.msk [vmem:[#allocation4] sm:$0xff] %vm190, %v1305
    %1309 = vrot.lane.b32.xlu0 %v1273, 96
    %v1310 = vpop.permute.xlu0 %1309
    %1312 = vst.msk [vmem:[#allocation5] sm:$0xff] %vm190, %v1310
    %s1313 = ssub.s32 0, 0
    %s1314 = smul.u32 8, %s1313
    %p1315 = scmp.lt.s32.totalorder %s1314, 7
    %s1316 = scalar_select %p1315, %s1314, 7
    %s1317 = smul.addr %s1316, 4
    %s1318 = scalar_lea.vmem %s4, %s1317
    // Predicated region
    $region94: #{bilstm_moreff_forward.6} parent=1 // pred_check
      _
    $region95: #{bilstm_moreff_forward.6} parent=1 // pred_check_branch
      %1320 = sbr.rel (0) target = $region97
    $region96: #{bilstm_moreff_forward.6} parent=1 // pred_region
      _
    $region97: #{bilstm_moreff_forward.6} parent=1 // pred_fallthru
      _
    // Predicated region
    $region98: #{bilstm_moreff_forward.6} parent=1 // pred_check
      _
    $region99: #{bilstm_moreff_forward.6} parent=1 // pred_check_branch
      %1322 = sbr.rel (0) target = $region101
    $region100: #{bilstm_moreff_forward.6} parent=1 // pred_region
      %s1323 = ssub.s32 0, 0
      %s1324 = smul.u32 8, %s1323
    $region101: #{bilstm_moreff_forward.6} parent=1 // pred_fallthru
      _
    // Predicated region
    $region102: #{bilstm_moreff_forward.6} parent=1 // pred_check
      _
    $region103: #{bilstm_moreff_forward.6} parent=1 // pred_check_branch
      %1326 = sbr.rel (0) target = $region105
    $region104: #{bilstm_moreff_forward.6} parent=1 // pred_region
      _
    $region105: #{bilstm_moreff_forward.6} parent=1 // pred_fallthru
      _
    // Predicated region
    $region106: #{bilstm_moreff_forward.6} parent=1 // pred_check
      _
    $region107: #{bilstm_moreff_forward.6} parent=1 // pred_check_branch
      %1328 = sbr.rel (0) target = $region109
    $region108: #{bilstm_moreff_forward.6} parent=1 // pred_region
      %s1329 = ssub.s32 0, 0
      %s1330 = smul.u32 8, %s1329
      %p1331 = scmp.lt.s32.totalorder %s1330, 7
      %s1332 = scalar_select %p1331, %s1330, 7
      %s1333 = smul.addr %s1332, 4
      %s1334 = scalar_lea.vmem %s4, %s1333
    $region109: #{bilstm_moreff_forward.6} parent=1 // pred_fallthru
      _

// kernel: bilstm_moreff_forward.8
$region0: #{bilstm_moreff_forward.8}
  #allocation0 [shape = 'u32[]', space=smem, size = 0x4, offset = 0x4, fixed_abs, tag = 'smem constant byte address 0x4 - core index']
  #allocation1 [shape = 'u32[72,128]{1,0:T(1,128)}', space=vmem, size = 0x9000, scoped, tag = 'internal scratch']
  #allocation2 [shape = 'f32[8,32]{1,0:T(8,128)}', space=vmem, size = 0x1000, scoped, tag = 'scratch operand']
  #allocation3 [shape = 'f32[8,32]{1,0:T(8,128)}', space=vmem, size = 0x1000, scoped, tag = 'scratch operand']
  #allocation4 [shape = 'f32[8,32]{1,0:T(8,128)}', space=vmem, size = 0x1000, scoped, tag = 'scratch operand']
  #allocation5 [shape = 'f32[8,32]{1,0:T(8,128)}', space=vmem, size = 0x1000, scoped, tag = 'scratch operand']
  %s0 = inlined_call_operand.vmem [shape: f32[8,8,256], index: 0, kind: input, shape index: {}, may-alias: {0,1}]
  %s1 = inlined_call_operand.vmem [shape: f32[8,8,256], index: 1, kind: input, shape index: {}, may-alias: {0,1}]
  %s2 = inlined_call_operand.hbm [shape: bf16[64,256], index: 2, kind: input, shape index: {}]
  %s3 = inlined_call_operand.vmem [shape: bf16[8,8,32], index: 3, kind: output, shape index: {0}]
  %s4 = inlined_call_operand.vmem [shape: bf16[8,8,32], index: 4, kind: output, shape index: {1}]
  %5 = xla_tuple %s3, %s4
  %s6 = sld [smem:[#allocation0]]
  $region114: #{bilstm_moreff_forward.8} parent=0
    _
  %s8 = ssub.s32 1, %s6
  %s9 = scalar_select 0, %s8, %s6
  $region1: #{bilstm_moreff_forward.8} parent=0
    #allocation6 [shape = 'u8[32768]{0}', space=vmem, size = 0x8000, scoped, tag = 'input window, operand 0, single buffered']
    #allocation7 [shape = 'u8[32768]{0}', space=vmem, size = 0x8000, scoped, tag = 'input window, operand 1, single buffered']
    #allocation8 [shape = 'u8[32768]{0}', space=vmem, size = 0x8000, scoped, tag = 'input window, operand 2, single buffered']
    #allocation9 [shape = 's32[1]{0}', space=sflag, size = 0x4, scoped, tag = 'scoped memory for bilstm_moreff_forward.8']
    %10 = vsyncpa [#allocation9], 0
    // Predicated region
    $region2: #{bilstm_moreff_forward.8} parent=1 // pred_check
      _
    $region3: #{bilstm_moreff_forward.8} parent=1 // pred_check_branch
      %12 = sbr.rel (0) target = $region5
    $region4: #{bilstm_moreff_forward.8} parent=1 // pred_region
      // Predicated region
      $region6: #{bilstm_moreff_forward.8} parent=4 // pred_check
        _
      $region7: #{bilstm_moreff_forward.8} parent=4 // pred_check_branch
        %14 = sbr.rel (0) target = $region9
      $region8: #{bilstm_moreff_forward.8} parent=4 // pred_region
        // Predicated region
        $region10: #{bilstm_moreff_forward.8} parent=8 // pred_check
          _
        $region11: #{bilstm_moreff_forward.8} parent=8 // pred_check_branch
          %16 = sbr.rel (0) target = $region13
        $region12: #{bilstm_moreff_forward.8} parent=8 // pred_region
          // Predicated region
          $region25: #{bilstm_moreff_forward.8} parent=12 // pred_check
            _
          $region26: #{bilstm_moreff_forward.8} parent=12 // pred_check_branch
            %46 = sbr.rel (0) target = $region28
          $region27: #{bilstm_moreff_forward.8} parent=12 // pred_region
            loop: start=0, step=1, limit=1
            $region29: #{bilstm_moreff_forward.8} parent=27 // loop_pre_header
              _
            $region30: #{bilstm_moreff_forward.8} parent=27 // loop_header
              %s48 = sphi 0, %s52
              %p49 = scmp.ge.s32.totalorder %s48, 1
              %s53 = sphi %s0, %s0
              %s54 = sphi [#allocation6], [#allocation6]
            $region31: #{bilstm_moreff_forward.8} parent=27 // loop_header_branch
              %51 = sbr.rel (%p49) target = $region35
            $region32: #{bilstm_moreff_forward.8} parent=27 // loop_body
              %v55 = vld [vmem:[%s53] sm:$0xff]
              %56 = vst [vmem:[%s54] sm:$0xff] %v55
              %v57 = vld [vmem:[%s53 + $0x10] sm:$0xff]
              %58 = vst [vmem:[%s54 + $0x8] sm:$0xff] %v57
              %v59 = vld [vmem:[%s53 + $0x20] sm:$0xff]
              %60 = vst [vmem:[%s54 + $0x10] sm:$0xff] %v59
              %v61 = vld [vmem:[%s53 + $0x30] sm:$0xff]
              %62 = vst [vmem:[%s54 + $0x18] sm:$0xff] %v61
              %v63 = vld [vmem:[%s53 + $0x40] sm:$0xff]
              %64 = vst [vmem:[%s54 + $0x20] sm:$0xff] %v63
              %v65 = vld [vmem:[%s53 + $0x50] sm:$0xff]
              %66 = vst [vmem:[%s54 + $0x28] sm:$0xff] %v65
              %v67 = vld [vmem:[%s53 + $0x60] sm:$0xff]
              %68 = vst [vmem:[%s54 + $0x30] sm:$0xff] %v67
              %v69 = vld [vmem:[%s53 + $0x70] sm:$0xff]
              %70 = vst [vmem:[%s54 + $0x38] sm:$0xff] %v69
            $region33: #{bilstm_moreff_forward.8} parent=27 // loop_footer
              %s52 = sadd.s32 1, %s48
            $region34: #{bilstm_moreff_forward.8} parent=27 // loop_footer_branch
              %47 = sbr.rel target = $region30
            $region35: #{bilstm_moreff_forward.8} parent=27 // loop_exit
              _
          $region28: #{bilstm_moreff_forward.8} parent=12 // pred_fallthru
            _
          // Predicated region
          $region36: #{bilstm_moreff_forward.8} parent=12 // pred_check
            _
          $region37: #{bilstm_moreff_forward.8} parent=12 // pred_check_branch
            %72 = sbr.rel target = $region39
          $region38: #{bilstm_moreff_forward.8} parent=12 // pred_region
            _
          $region39: #{bilstm_moreff_forward.8} parent=12 // pred_fallthru
            _
        $region13: #{bilstm_moreff_forward.8} parent=8 // pred_fallthru
          _
        // Predicated region
        $region14: #{bilstm_moreff_forward.8} parent=8 // pred_check
          _
        $region15: #{bilstm_moreff_forward.8} parent=8 // pred_check_branch
          %18 = sbr.rel target = $region17
        $region16: #{bilstm_moreff_forward.8} parent=8 // pred_region
          %s20 = ssub.s32 256, 1
          loop: start=0, step=1, limit=1
          $region18: #{bilstm_moreff_forward.8} parent=16 // loop_pre_header
            _
          $region19: #{bilstm_moreff_forward.8} parent=16 // loop_header
            %s22 = sphi 0, %s26
            %p23 = scmp.ge.s32.totalorder %s22, 1
            %s27 = sphi %s0, %s0
            %s28 = sphi [#allocation6], [#allocation6]
          $region20: #{bilstm_moreff_forward.8} parent=16 // loop_header_branch
            %25 = sbr.rel (%p23) target = $region24
          $region21: #{bilstm_moreff_forward.8} parent=16 // loop_body
            %v29 = vld [vmem:[%s27] sm:%s20]
            %30 = vst [vmem:[%s28] sm:%s20] %v29
            %v31 = vld [vmem:[%s27 + $0x10] sm:%s20]
            %32 = vst [vmem:[%s28 + $0x8] sm:%s20] %v31
            %v33 = vld [vmem:[%s27 + $0x20] sm:%s20]
            %34 = vst [vmem:[%s28 + $0x10] sm:%s20] %v33
            %v35 = vld [vmem:[%s27 + $0x30] sm:%s20]
            %36 = vst [vmem:[%s28 + $0x18] sm:%s20] %v35
            %v37 = vld [vmem:[%s27 + $0x40] sm:%s20]
            %38 = vst [vmem:[%s28 + $0x20] sm:%s20] %v37
            %v39 = vld [vmem:[%s27 + $0x50] sm:%s20]
            %40 = vst [vmem:[%s28 + $0x28] sm:%s20] %v39
            %v41 = vld [vmem:[%s27 + $0x60] sm:%s20]
            %42 = vst [vmem:[%s28 + $0x30] sm:%s20] %v41
            %v43 = vld [vmem:[%s27 + $0x70] sm:%s20]
            %44 = vst [vmem:[%s28 + $0x38] sm:%s20] %v43
          $region22: #{bilstm_moreff_forward.8} parent=16 // loop_footer
            %s26 = sadd.s32 1, %s22
          $region23: #{bilstm_moreff_forward.8} parent=16 // loop_footer_branch
            %21 = sbr.rel target = $region19
          $region24: #{bilstm_moreff_forward.8} parent=16 // loop_exit
            _
        $region17: #{bilstm_moreff_forward.8} parent=8 // pred_fallthru
          _
      $region9: #{bilstm_moreff_forward.8} parent=4 // pred_fallthru
        _
      %73 = vnop
    $region5: #{bilstm_moreff_forward.8} parent=1 // pred_fallthru
      _
    // Predicated region
    $region40: #{bilstm_moreff_forward.8} parent=1 // pred_check
      _
    $region41: #{bilstm_moreff_forward.8} parent=1 // pred_check_branch
      %75 = sbr.rel (0) target = $region43
    $region42: #{bilstm_moreff_forward.8} parent=1 // pred_region
      %s76 = ssub.s32 0, 0
      %s77 = smul.u32 8, %s76
      %s78 = smul.addr %s77, 2
      %s79 = sadd.s32 1, %s78
      %s80 = smul.addr %s79, 8
      %s81 = scalar_lea.vmem %s1, %s80
      // Predicated region
      $region44: #{bilstm_moreff_forward.8} parent=42 // pred_check
        _
      $region45: #{bilstm_moreff_forward.8} parent=42 // pred_check_branch
        %83 = sbr.rel (0) target = $region47
      $region46: #{bilstm_moreff_forward.8} parent=42 // pred_region
        // Predicated region
        $region48: #{bilstm_moreff_forward.8} parent=46 // pred_check
          _
        $region49: #{bilstm_moreff_forward.8} parent=46 // pred_check_branch
          %85 = sbr.rel (0) target = $region51
        $region50: #{bilstm_moreff_forward.8} parent=46 // pred_region
          // Predicated region
          $region63: #{bilstm_moreff_forward.8} parent=50 // pred_check
            _
          $region64: #{bilstm_moreff_forward.8} parent=50 // pred_check_branch
            %115 = sbr.rel (0) target = $region66
          $region65: #{bilstm_moreff_forward.8} parent=50 // pred_region
            loop: start=0, step=1, limit=1
            $region67: #{bilstm_moreff_forward.8} parent=65 // loop_pre_header
              _
            $region68: #{bilstm_moreff_forward.8} parent=65 // loop_header
              %s117 = sphi 0, %s121
              %p118 = scmp.ge.s32.totalorder %s117, 1
              %s122 = sphi %s81, %s81
              %s123 = sphi [#allocation7], [#allocation7]
            $region69: #{bilstm_moreff_forward.8} parent=65 // loop_header_branch
              %120 = sbr.rel (%p118) target = $region73
            $region70: #{bilstm_moreff_forward.8} parent=65 // loop_body
              %v124 = vld [vmem:[%s122] sm:$0xff]
              %125 = vst [vmem:[%s123] sm:$0xff] %v124
              %v126 = vld [vmem:[%s122 + $0x10] sm:$0xff]
              %127 = vst [vmem:[%s123 + $0x8] sm:$0xff] %v126
              %v128 = vld [vmem:[%s122 + $0x20] sm:$0xff]
              %129 = vst [vmem:[%s123 + $0x10] sm:$0xff] %v128
              %v130 = vld [vmem:[%s122 + $0x30] sm:$0xff]
              %131 = vst [vmem:[%s123 + $0x18] sm:$0xff] %v130
              %v132 = vld [vmem:[%s122 + $0x40] sm:$0xff]
              %133 = vst [vmem:[%s123 + $0x20] sm:$0xff] %v132
              %v134 = vld [vmem:[%s122 + $0x50] sm:$0xff]
              %135 = vst [vmem:[%s123 + $0x28] sm:$0xff] %v134
              %v136 = vld [vmem:[%s122 + $0x60] sm:$0xff]
              %137 = vst [vmem:[%s123 + $0x30] sm:$0xff] %v136
              %v138 = vld [vmem:[%s122 + $0x70] sm:$0xff]
              %139 = vst [vmem:[%s123 + $0x38] sm:$0xff] %v138
            $region71: #{bilstm_moreff_forward.8} parent=65 // loop_footer
              %s121 = sadd.s32 1, %s117
            $region72: #{bilstm_moreff_forward.8} parent=65 // loop_footer_branch
              %116 = sbr.rel target = $region68
            $region73: #{bilstm_moreff_forward.8} parent=65 // loop_exit
              _
          $region66: #{bilstm_moreff_forward.8} parent=50 // pred_fallthru
            _
          // Predicated region
          $region74: #{bilstm_moreff_forward.8} parent=50 // pred_check
            _
          $region75: #{bilstm_moreff_forward.8} parent=50 // pred_check_branch
            %141 = sbr.rel target = $region77
          $region76: #{bilstm_moreff_forward.8} parent=50 // pred_region
            _
          $region77: #{bilstm_moreff_forward.8} parent=50 // pred_fallthru
            _
        $region51: #{bilstm_moreff_forward.8} parent=46 // pred_fallthru
          _
        // Predicated region
        $region52: #{bilstm_moreff_forward.8} parent=46 // pred_check
          _
        $region53: #{bilstm_moreff_forward.8} parent=46 // pred_check_branch
          %87 = sbr.rel target = $region55
        $region54: #{bilstm_moreff_forward.8} parent=46 // pred_region
          %s89 = ssub.s32 256, 1
          loop: start=0, step=1, limit=1
          $region56: #{bilstm_moreff_forward.8} parent=54 // loop_pre_header
            _
          $region57: #{bilstm_moreff_forward.8} parent=54 // loop_header
            %s91 = sphi 0, %s95
            %p92 = scmp.ge.s32.totalorder %s91, 1
            %s96 = sphi %s81, %s81
            %s97 = sphi [#allocation7], [#allocation7]
          $region58: #{bilstm_moreff_forward.8} parent=54 // loop_header_branch
            %94 = sbr.rel (%p92) target = $region62
          $region59: #{bilstm_moreff_forward.8} parent=54 // loop_body
            %v98 = vld [vmem:[%s96] sm:%s89]
            %99 = vst [vmem:[%s97] sm:%s89] %v98
            %v100 = vld [vmem:[%s96 + $0x10] sm:%s89]
            %101 = vst [vmem:[%s97 + $0x8] sm:%s89] %v100
            %v102 = vld [vmem:[%s96 + $0x20] sm:%s89]
            %103 = vst [vmem:[%s97 + $0x10] sm:%s89] %v102
            %v104 = vld [vmem:[%s96 + $0x30] sm:%s89]
            %105 = vst [vmem:[%s97 + $0x18] sm:%s89] %v104
            %v106 = vld [vmem:[%s96 + $0x40] sm:%s89]
            %107 = vst [vmem:[%s97 + $0x20] sm:%s89] %v106
            %v108 = vld [vmem:[%s96 + $0x50] sm:%s89]
            %109 = vst [vmem:[%s97 + $0x28] sm:%s89] %v108
            %v110 = vld [vmem:[%s96 + $0x60] sm:%s89]
            %111 = vst [vmem:[%s97 + $0x30] sm:%s89] %v110
            %v112 = vld [vmem:[%s96 + $0x70] sm:%s89]
            %113 = vst [vmem:[%s97 + $0x38] sm:%s89] %v112
          $region60: #{bilstm_moreff_forward.8} parent=54 // loop_footer
            %s95 = sadd.s32 1, %s91
          $region61: #{bilstm_moreff_forward.8} parent=54 // loop_footer_branch
            %90 = sbr.rel target = $region57
          $region62: #{bilstm_moreff_forward.8} parent=54 // loop_exit
            _
        $region55: #{bilstm_moreff_forward.8} parent=46 // pred_fallthru
          _
      $region47: #{bilstm_moreff_forward.8} parent=42 // pred_fallthru
        _
      %142 = vnop
    $region43: #{bilstm_moreff_forward.8} parent=1 // pred_fallthru
      _
    // Predicated region
    $region78: #{bilstm_moreff_forward.8} parent=1 // pred_check
      _
    $region79: #{bilstm_moreff_forward.8} parent=1 // pred_check_branch
      %144 = sbr.rel (0) target = $region81
    $region80: #{bilstm_moreff_forward.8} parent=1 // pred_region
      %146 = vsyncadd [#allocation9], 0
      %s147 = sshll.u32 %s2, 4
      %s148 = int_to_ptr.hbm [resolvable:$true] %s147
      %s149 = sshll.u32 [#allocation8], 4
      %s150 = int_to_ptr.vmem [resolvable:$true] %s149
      %155 = dma.hbm_to_vmem [thread:$0]  %s148, 1024, %s150, [#allocation9], 128, 128, 8
    $region81: #{bilstm_moreff_forward.8} parent=1 // pred_fallthru
      _
    // Predicated region
    $region82: #{bilstm_moreff_forward.8} parent=1 // pred_check
      _
    $region83: #{bilstm_moreff_forward.8} parent=1 // pred_check_branch
      %157 = sbr.rel (0) target = $region85
    $region84: #{bilstm_moreff_forward.8} parent=1 // pred_region
      _
    $region85: #{bilstm_moreff_forward.8} parent=1 // pred_fallthru
      _
    // Predicated region
    $region86: #{bilstm_moreff_forward.8} parent=1 // pred_check
      _
    $region87: #{bilstm_moreff_forward.8} parent=1 // pred_check_branch
      %159 = sbr.rel (0) target = $region89
    $region88: #{bilstm_moreff_forward.8} parent=1 // pred_region
      _
    $region89: #{bilstm_moreff_forward.8} parent=1 // pred_fallthru
      _
    // Predicated region
    $region90: #{bilstm_moreff_forward.8} parent=1 // pred_check
      _
    $region91: #{bilstm_moreff_forward.8} parent=1 // pred_check_branch
      %161 = sbr.rel (0) target = $region93
    $region92: #{bilstm_moreff_forward.8} parent=1 // pred_region
      %163 = dma.done [#allocation9], 1024
    $region93: #{bilstm_moreff_forward.8} parent=1 // pred_fallthru
      _
    %s164 = ssub.s32 0, 0
    %s165 = smul.u32 8, %s164
    %p166 = scmp.lt.s32.totalorder %s165, 7
    %s167 = scalar_select %p166, %s165, 7
    %s168 = smul.addr %s167, 4
    %s169 = scalar_lea.vmem %s4, %s168
    %s170 = ssub.s32 0, 0
    %s171 = smul.u32 8, %s170
    %s172 = ssub.s32 0, 0
    %s173 = smul.u32 8, %s172
    %p174 = scmp.lt.s32.totalorder %s173, 7
    %s175 = scalar_select %p174, %s173, 7
    %s176 = smul.addr %s175, 4
    %s177 = scalar_lea.vmem %s4, %s176
    %s178 = ssub.s32 0, 0
    %s179 = smul.u32 8, %s178
    %p181 = scmp.eq.s32.totalorder 0, 0
    // Predicated region
    $region94: #{bilstm_moreff_forward.8} parent=1 // pred_check
      %p182 = pneg %p181
    $region95: #{bilstm_moreff_forward.8} parent=1 // pred_check_branch
      %184 = sbr.rel (%p182) target = $region97
    $region96: #{bilstm_moreff_forward.8} parent=1 // pred_region
      %vm185 = vcmask 261120
      %186 = vst.msk [vmem:[#allocation2] sm:$0xff] %vm185, 0.0
      %187 = vst.msk [vmem:[#allocation3] sm:$0xff] %vm185, 0.0
      %188 = vst.msk [vmem:[#allocation4] sm:$0xff] %vm185, 0.0
      %189 = vst.msk [vmem:[#allocation5] sm:$0xff] %vm185, 0.0
    $region97: #{bilstm_moreff_forward.8} parent=1 // pred_fallthru
      _
    %v190 = vld [vmem:[#allocation8] sm:$0xff]
    %v191 = vld [vmem:[#allocation8 + $0x8] sm:$0xff]
    %v192 = vld [vmem:[#allocation8 + $0x10] sm:$0xff]
    %v193 = vld [vmem:[#allocation8 + $0x18] sm:$0xff]
    %v194 = vld [vmem:[#allocation8 + $0x20] sm:$0xff]
    %v195 = vld [vmem:[#allocation8 + $0x28] sm:$0xff]
    %v196 = vld [vmem:[#allocation8 + $0x30] sm:$0xff]
    %v197 = vld [vmem:[#allocation8 + $0x38] sm:$0xff]
    %v198 = vld [vmem:[#allocation2] sm:$0xff]
    %v199 = vld [vmem:[#allocation3] sm:$0xff]
    %v200 = vld [vmem:[#allocation4] sm:$0xff]
    %v201 = vld [vmem:[#allocation5] sm:$0xff]
    %203 = vrot.lane.b32.xlu0 %v199, 32
    %v204 = vpop.permute.xlu0 %203
    %vm206 = vcmask 261120
    %v207 = vsel %vm206, %v198, %v204
    %v208 = vpack.c.bf16 %v207, %v207
    %v217 = vunpack.c.l.b16 %v190
    %v218 = vunpack.c.h.b16 %v190
    %v219 = vunpack.c.l.b16 %v191
    %v220 = vunpack.c.h.b16 %v191
    %v221 = vunpack.c.l.b16 %v192
    %v222 = vunpack.c.h.b16 %v192
    %v223 = vunpack.c.l.b16 %v193
    %v224 = vunpack.c.h.b16 %v193
    %v225 = vunpack.c.l.b16 %v194
    %v226 = vunpack.c.h.b16 %v194
    %v227 = vunpack.c.l.b16 %v195
    %v228 = vunpack.c.h.b16 %v195
    %v229 = vunpack.c.l.b16 %v196
    %v230 = vunpack.c.h.b16 %v196
    %v231 = vunpack.c.l.b16 %v197
    %v232 = vunpack.c.h.b16 %v197
    %v233 = vpack.c.b16 %v219, %v217
    %v234 = vpack.c.b16 %v220, %v218
    %v235 = vpack.c.b16 %v223, %v221
    %v236 = vpack.c.b16 %v224, %v222
    %v237 = vpack.c.b16 %v227, %v225
    %v238 = vpack.c.b16 %v228, %v226
    %v239 = vpack.c.b16 %v231, %v229
    %v240 = vpack.c.b16 %v232, %v230
    %vm249 = vcmask 523264
    %v251 = vsel %vm249, %v208, 0
    %253 = vmatpush.bf16.msra.mxu0 0
    %254 = vmatpush.bf16.msra.mxu0 0
    %255 = vmatpush.bf16.msra.mxu0 0
    %256 = vmatpush.bf16.msra.mxu0 0
    %257 = vmatpush.bf16.msra.mxu0 %v239
    %258 = vmatpush.bf16.msra.mxu0 %v237
    %259 = vmatpush.bf16.msra.mxu0 %v235
    %260 = vmatpush.bf16.msra.mxu0 %v233
    %261 = vmatmul.bf16.gmra.mxu0 %v251
    %v262 = vpop.f32.mrf.mxu0
    %v263 = vadd.f32 0.0, %v262
    %v264 = vpop.f32.mrf.mxu0
    %265 = vdwg.mxu0
    %266 = vmatpush.bf16.msra.mxu0 0
    %267 = vmatpush.bf16.msra.mxu0 0
    %268 = vmatpush.bf16.msra.mxu0 0
    %269 = vmatpush.bf16.msra.mxu0 0
    %270 = vmatpush.bf16.msra.mxu0 %v240
    %271 = vmatpush.bf16.msra.mxu0 %v238
    %272 = vmatpush.bf16.msra.mxu0 %v236
    %273 = vmatpush.bf16.msra.mxu0 %v234
    %274 = vmatmul.bf16.gmra.mxu0 %v251
    %v275 = vpop.f32.mrf.mxu0
    %v276 = vadd.f32 0.0, %v275
    %v277 = vpop.f32.mrf.mxu0
    %278 = vdwg.mxu0
    %v279 = vld [vmem:[#allocation6] sm:$0xff]
    %v280 = vadd.f32 %v279, %v263
    %s281 = scalar_lea.vmem [#allocation7], 56
    %v282 = vld [vmem:[%s281] sm:$0xff]
    %v283 = vadd.f32 %v282, %v276
    %v284 = vxor.u32 %v280, 2147483648
    %v285 = vmul.f32 %v284, 1.442695
    %v286 = vpow.pop %v285
    %v287 = vadd.f32 %v286, 1.0
    %v288 = vrcp.pop %v287
    %v289 = vmul.f32 %v287, %v288
    %v290 = vsub.f32 1.0, %v289
    %v291 = vmul.f32 %v288, %v290
    %v292 = vadd.f32 %v288, %v291
    %vm293 = vweird.f32 %v287
    %vm294 = vweird.f32 %v288
    %vm295 = vmor %vm293, %vm294
    %v296 = vsel %vm295, %v288, %v292
    %v297 = vand.u32 2147483647, %v287
    %vm298 = vcmp.eq.f32.partialorder %v297, 8.507059e+37
    %v299 = vand.u32 %v287, 2147483648
    %v300 = vor.u32 1.1754944e-38, %v299
    %v301 = vsel %vm298, %v300, %v296
    %v302 = vmul.f32 1.0, %v301
    %v303 = vtanh.pop %v280
    %305 = vrot.lane.b32.xlu0 %v200, 32
    %v306 = vpop.permute.xlu0 %305
    %v308 = vmul.f32 %v302, %v306
    %310 = vrot.lane.b32.xlu0 %v303, 32
    %v311 = vpop.permute.xlu0 %310
    %v313 = vmul.f32 %v302, %v311
    %315 = vrot.lane.b32.xlu0 %v313, 32
    %v316 = vpop.permute.xlu0 %315
    %v318 = vadd.f32 %v308, %v316
    %v319 = vtanh.pop %v318
    %321 = vrot.lane.b32.xlu0 %v319, 32
    %v322 = vpop.permute.xlu0 %321
    %v324 = vmul.f32 %v302, %v322
    %v325 = vxor.u32 %v283, 2147483648
    %v326 = vmul.f32 %v325, 1.442695
    %v327 = vpow.pop %v326
    %v328 = vadd.f32 %v327, 1.0
    %v329 = vrcp.pop %v328
    %v330 = vmul.f32 %v328, %v329
    %v331 = vsub.f32 1.0, %v330
    %v332 = vmul.f32 %v329, %v331
    %v333 = vadd.f32 %v329, %v332
    %vm334 = vweird.f32 %v328
    %vm335 = vweird.f32 %v329
    %vm336 = vmor %vm334, %vm335
    %v337 = vsel %vm336, %v329, %v333
    %v338 = vand.u32 2147483647, %v328
    %vm339 = vcmp.eq.f32.partialorder %v338, 8.507059e+37
    %v340 = vand.u32 %v328, 2147483648
    %v341 = vor.u32 1.1754944e-38, %v340
    %v342 = vsel %vm339, %v341, %v337
    %v343 = vmul.f32 1.0, %v342
    %v344 = vtanh.pop %v283
    %346 = vrot.lane.b32.xlu0 %v201, 32
    %v347 = vpop.permute.xlu0 %346
    %v349 = vmul.f32 %v343, %v347
    %351 = vrot.lane.b32.xlu0 %v344, 32
    %v352 = vpop.permute.xlu0 %351
    %v354 = vmul.f32 %v343, %v352
    %356 = vrot.lane.b32.xlu0 %v354, 32
    %v357 = vpop.permute.xlu0 %356
    %v359 = vadd.f32 %v349, %v357
    %v360 = vtanh.pop %v359
    %362 = vrot.lane.b32.xlu0 %v360, 32
    %v363 = vpop.permute.xlu0 %362
    %v365 = vmul.f32 %v343, %v363
    %v366 = vpack.c.bf16 %v324, %v324
    %368 = vrot.lane.b32.xlu0 %v366, 64
    %v369 = vpop.permute.xlu0 %368
    %vm371 = vcmask 257024
    %372 = vst.msk [vmem:[%s3] sm:$0xf] %vm371, %v369
    %v373 = vpack.c.bf16 %v365, %v365
    %375 = vrot.lane.b32.xlu0 %v373, 64
    %v376 = vpop.permute.xlu0 %375
    %s378 = scalar_lea.vmem %s177, 28
    %379 = vst.msk [vmem:[%s378] sm:$0xf] %vm371, %v376
    %381 = vrot.lane.b32.xlu0 %v324, 64
    %v382 = vpop.permute.xlu0 %381
    %385 = vrot.lane.b32.xlu0 %v365, 96
    %v386 = vpop.permute.xlu0 %385
    %v388 = vsel %vm206, %v382, %v386
    %v389 = vpack.c.bf16 %v388, %v388
    %v391 = vsel %vm249, %v389, 0
    %393 = vmatpush.bf16.msra.mxu0 0
    %394 = vmatpush.bf16.msra.mxu0 0
    %395 = vmatpush.bf16.msra.mxu0 0
    %396 = vmatpush.bf16.msra.mxu0 0
    %397 = vmatpush.bf16.msra.mxu0 %v239
    %398 = vmatpush.bf16.msra.mxu0 %v237
    %399 = vmatpush.bf16.msra.mxu0 %v235
    %400 = vmatpush.bf16.msra.mxu0 %v233
    %401 = vmatmul.bf16.gmra.mxu0 %v391
    %v402 = vpop.f32.mrf.mxu0
    %v403 = vadd.f32 0.0, %v402
    %v404 = vpop.f32.mrf.mxu0
    %405 = vdwg.mxu0
    %406 = vmatpush.bf16.msra.mxu0 0
    %407 = vmatpush.bf16.msra.mxu0 0
    %408 = vmatpush.bf16.msra.mxu0 0
    %409 = vmatpush.bf16.msra.mxu0 0
    %410 = vmatpush.bf16.msra.mxu0 %v240
    %411 = vmatpush.bf16.msra.mxu0 %v238
    %412 = vmatpush.bf16.msra.mxu0 %v236
    %413 = vmatpush.bf16.msra.mxu0 %v234
    %414 = vmatmul.bf16.gmra.mxu0 %v391
    %v415 = vpop.f32.mrf.mxu0
    %v416 = vadd.f32 0.0, %v415
    %v417 = vpop.f32.mrf.mxu0
    %418 = vdwg.mxu0
    %s419 = scalar_lea.vmem [#allocation6], 8
    %v420 = vld [vmem:[%s419] sm:$0xff]
    %v421 = vadd.f32 %v420, %v403
    %s422 = scalar_lea.vmem [#allocation7], 48
    %v423 = vld [vmem:[%s422] sm:$0xff]
    %v424 = vadd.f32 %v423, %v416
    %v425 = vxor.u32 %v421, 2147483648
    %v426 = vmul.f32 %v425, 1.442695
    %v427 = vpow.pop %v426
    %v428 = vadd.f32 %v427, 1.0
    %v429 = vrcp.pop %v428
    %v430 = vmul.f32 %v428, %v429
    %v431 = vsub.f32 1.0, %v430
    %v432 = vmul.f32 %v429, %v431
    %v433 = vadd.f32 %v429, %v432
    %vm434 = vweird.f32 %v428
    %vm435 = vweird.f32 %v429
    %vm436 = vmor %vm434, %vm435
    %v437 = vsel %vm436, %v429, %v433
    %v438 = vand.u32 2147483647, %v428
    %vm439 = vcmp.eq.f32.partialorder %v438, 8.507059e+37
    %v440 = vand.u32 %v428, 2147483648
    %v441 = vor.u32 1.1754944e-38, %v440
    %v442 = vsel %vm439, %v441, %v437
    %v443 = vmul.f32 1.0, %v442
    %v444 = vtanh.pop %v421
    %v445 = vmul.f32 %v443, %v318
    %447 = vrot.lane.b32.xlu0 %v444, 32
    %v448 = vpop.permute.xlu0 %447
    %v450 = vmul.f32 %v443, %v448
    %452 = vrot.lane.b32.xlu0 %v450, 32
    %v453 = vpop.permute.xlu0 %452
    %v455 = vadd.f32 %v445, %v453
    %v456 = vtanh.pop %v455
    %458 = vrot.lane.b32.xlu0 %v456, 32
    %v459 = vpop.permute.xlu0 %458
    %v461 = vmul.f32 %v443, %v459
    %v462 = vxor.u32 %v424, 2147483648
    %v463 = vmul.f32 %v462, 1.442695
    %v464 = vpow.pop %v463
    %v465 = vadd.f32 %v464, 1.0
    %v466 = vrcp.pop %v465
    %v467 = vmul.f32 %v465, %v466
    %v468 = vsub.f32 1.0, %v467
    %v469 = vmul.f32 %v466, %v468
    %v470 = vadd.f32 %v466, %v469
    %vm471 = vweird.f32 %v465
    %vm472 = vweird.f32 %v466
    %vm473 = vmor %vm471, %vm472
    %v474 = vsel %vm473, %v466, %v470
    %v475 = vand.u32 2147483647, %v465
    %vm476 = vcmp.eq.f32.partialorder %v475, 8.507059e+37
    %v477 = vand.u32 %v465, 2147483648
    %v478 = vor.u32 1.1754944e-38, %v477
    %v479 = vsel %vm476, %v478, %v474
    %v480 = vmul.f32 1.0, %v479
    %v481 = vtanh.pop %v424
    %v482 = vmul.f32 %v480, %v359
    %484 = vrot.lane.b32.xlu0 %v481, 32
    %v485 = vpop.permute.xlu0 %484
    %v487 = vmul.f32 %v480, %v485
    %489 = vrot.lane.b32.xlu0 %v487, 32
    %v490 = vpop.permute.xlu0 %489
    %v492 = vadd.f32 %v482, %v490
    %v493 = vtanh.pop %v492
    %495 = vrot.lane.b32.xlu0 %v493, 32
    %v496 = vpop.permute.xlu0 %495
    %v498 = vmul.f32 %v480, %v496
    %v499 = vpack.c.bf16 %v461, %v461
    %501 = vrot.lane.b32.xlu0 %v499, 64
    %v502 = vpop.permute.xlu0 %501
    %s504 = scalar_lea.vmem %s3, 4
    %505 = vst.msk [vmem:[%s504] sm:$0xf] %vm371, %v502
    %v506 = vpack.c.bf16 %v498, %v498
    %508 = vrot.lane.b32.xlu0 %v506, 64
    %v509 = vpop.permute.xlu0 %508
    %s511 = scalar_lea.vmem %s177, 24
    %512 = vst.msk [vmem:[%s511] sm:$0xf] %vm371, %v509
    %514 = vrot.lane.b32.xlu0 %v461, 64
    %v515 = vpop.permute.xlu0 %514
    %518 = vrot.lane.b32.xlu0 %v498, 96
    %v519 = vpop.permute.xlu0 %518
    %v521 = vsel %vm206, %v515, %v519
    %v522 = vpack.c.bf16 %v521, %v521
    %v524 = vsel %vm249, %v522, 0
    %526 = vmatpush.bf16.msra.mxu0 0
    %527 = vmatpush.bf16.msra.mxu0 0
    %528 = vmatpush.bf16.msra.mxu0 0
    %529 = vmatpush.bf16.msra.mxu0 0
    %530 = vmatpush.bf16.msra.mxu0 %v239
    %531 = vmatpush.bf16.msra.mxu0 %v237
    %532 = vmatpush.bf16.msra.mxu0 %v235
    %533 = vmatpush.bf16.msra.mxu0 %v233
    %534 = vmatmul.bf16.gmra.mxu0 %v524
    %v535 = vpop.f32.mrf.mxu0
    %v536 = vadd.f32 0.0, %v535
    %v537 = vpop.f32.mrf.mxu0
    %538 = vdwg.mxu0
    %539 = vmatpush.bf16.msra.mxu0 0
    %540 = vmatpush.bf16.msra.mxu0 0
    %541 = vmatpush.bf16.msra.mxu0 0
    %542 = vmatpush.bf16.msra.mxu0 0
    %543 = vmatpush.bf16.msra.mxu0 %v240
    %544 = vmatpush.bf16.msra.mxu0 %v238
    %545 = vmatpush.bf16.msra.mxu0 %v236
    %546 = vmatpush.bf16.msra.mxu0 %v234
    %547 = vmatmul.bf16.gmra.mxu0 %v524
    %v548 = vpop.f32.mrf.mxu0
    %v549 = vadd.f32 0.0, %v548
    %v550 = vpop.f32.mrf.mxu0
    %551 = vdwg.mxu0
    %s552 = scalar_lea.vmem [#allocation6], 16
    %v553 = vld [vmem:[%s552] sm:$0xff]
    %v554 = vadd.f32 %v553, %v536
    %s555 = scalar_lea.vmem [#allocation7], 40
    %v556 = vld [vmem:[%s555] sm:$0xff]
    %v557 = vadd.f32 %v556, %v549
    %v558 = vxor.u32 %v554, 2147483648
    %v559 = vmul.f32 %v558, 1.442695
    %v560 = vpow.pop %v559
    %v561 = vadd.f32 %v560, 1.0
    %v562 = vrcp.pop %v561
    %v563 = vmul.f32 %v561, %v562
    %v564 = vsub.f32 1.0, %v563
    %v565 = vmul.f32 %v562, %v564
    %v566 = vadd.f32 %v562, %v565
    %vm567 = vweird.f32 %v561
    %vm568 = vweird.f32 %v562
    %vm569 = vmor %vm567, %vm568
    %v570 = vsel %vm569, %v562, %v566
    %v571 = vand.u32 2147483647, %v561
    %vm572 = vcmp.eq.f32.partialorder %v571, 8.507059e+37
    %v573 = vand.u32 %v561, 2147483648
    %v574 = vor.u32 1.1754944e-38, %v573
    %v575 = vsel %vm572, %v574, %v570
    %v576 = vmul.f32 1.0, %v575
    %v577 = vtanh.pop %v554
    %v578 = vmul.f32 %v576, %v455
    %580 = vrot.lane.b32.xlu0 %v577, 32
    %v581 = vpop.permute.xlu0 %580
    %v583 = vmul.f32 %v576, %v581
    %585 = vrot.lane.b32.xlu0 %v583, 32
    %v586 = vpop.permute.xlu0 %585
    %v588 = vadd.f32 %v578, %v586
    %v589 = vtanh.pop %v588
    %591 = vrot.lane.b32.xlu0 %v589, 32
    %v592 = vpop.permute.xlu0 %591
    %v594 = vmul.f32 %v576, %v592
    %v595 = vxor.u32 %v557, 2147483648
    %v596 = vmul.f32 %v595, 1.442695
    %v597 = vpow.pop %v596
    %v598 = vadd.f32 %v597, 1.0
    %v599 = vrcp.pop %v598
    %v600 = vmul.f32 %v598, %v599
    %v601 = vsub.f32 1.0, %v600
    %v602 = vmul.f32 %v599, %v601
    %v603 = vadd.f32 %v599, %v602
    %vm604 = vweird.f32 %v598
    %vm605 = vweird.f32 %v599
    %vm606 = vmor %vm604, %vm605
    %v607 = vsel %vm606, %v599, %v603
    %v608 = vand.u32 2147483647, %v598
    %vm609 = vcmp.eq.f32.partialorder %v608, 8.507059e+37
    %v610 = vand.u32 %v598, 2147483648
    %v611 = vor.u32 1.1754944e-38, %v610
    %v612 = vsel %vm609, %v611, %v607
    %v613 = vmul.f32 1.0, %v612
    %v614 = vtanh.pop %v557
    %v615 = vmul.f32 %v613, %v492
    %617 = vrot.lane.b32.xlu0 %v614, 32
    %v618 = vpop.permute.xlu0 %617
    %v620 = vmul.f32 %v613, %v618
    %622 = vrot.lane.b32.xlu0 %v620, 32
    %v623 = vpop.permute.xlu0 %622
    %v625 = vadd.f32 %v615, %v623
    %v626 = vtanh.pop %v625
    %628 = vrot.lane.b32.xlu0 %v626, 32
    %v629 = vpop.permute.xlu0 %628
    %v631 = vmul.f32 %v613, %v629
    %v632 = vpack.c.bf16 %v594, %v594
    %634 = vrot.lane.b32.xlu0 %v632, 64
    %v635 = vpop.permute.xlu0 %634
    %s637 = scalar_lea.vmem %s3, 8
    %638 = vst.msk [vmem:[%s637] sm:$0xf] %vm371, %v635
    %v639 = vpack.c.bf16 %v631, %v631
    %641 = vrot.lane.b32.xlu0 %v639, 64
    %v642 = vpop.permute.xlu0 %641
    %s644 = scalar_lea.vmem %s177, 20
    %645 = vst.msk [vmem:[%s644] sm:$0xf] %vm371, %v642
    %647 = vrot.lane.b32.xlu0 %v594, 64
    %v648 = vpop.permute.xlu0 %647
    %651 = vrot.lane.b32.xlu0 %v631, 96
    %v652 = vpop.permute.xlu0 %651
    %v654 = vsel %vm206, %v648, %v652
    %v655 = vpack.c.bf16 %v654, %v654
    %v657 = vsel %vm249, %v655, 0
    %659 = vmatpush.bf16.msra.mxu0 0
    %660 = vmatpush.bf16.msra.mxu0 0
    %661 = vmatpush.bf16.msra.mxu0 0
    %662 = vmatpush.bf16.msra.mxu0 0
    %663 = vmatpush.bf16.msra.mxu0 %v239
    %664 = vmatpush.bf16.msra.mxu0 %v237
    %665 = vmatpush.bf16.msra.mxu0 %v235
    %666 = vmatpush.bf16.msra.mxu0 %v233
    %667 = vmatmul.bf16.gmra.mxu0 %v657
    %v668 = vpop.f32.mrf.mxu0
    %v669 = vadd.f32 0.0, %v668
    %v670 = vpop.f32.mrf.mxu0
    %671 = vdwg.mxu0
    %672 = vmatpush.bf16.msra.mxu0 0
    %673 = vmatpush.bf16.msra.mxu0 0
    %674 = vmatpush.bf16.msra.mxu0 0
    %675 = vmatpush.bf16.msra.mxu0 0
    %676 = vmatpush.bf16.msra.mxu0 %v240
    %677 = vmatpush.bf16.msra.mxu0 %v238
    %678 = vmatpush.bf16.msra.mxu0 %v236
    %679 = vmatpush.bf16.msra.mxu0 %v234
    %680 = vmatmul.bf16.gmra.mxu0 %v657
    %v681 = vpop.f32.mrf.mxu0
    %v682 = vadd.f32 0.0, %v681
    %v683 = vpop.f32.mrf.mxu0
    %684 = vdwg.mxu0
    %s685 = scalar_lea.vmem [#allocation6], 24
    %v686 = vld [vmem:[%s685] sm:$0xff]
    %v687 = vadd.f32 %v686, %v669
    %s688 = scalar_lea.vmem [#allocation7], 32
    %v689 = vld [vmem:[%s688] sm:$0xff]
    %v690 = vadd.f32 %v689, %v682
    %v691 = vxor.u32 %v687, 2147483648
    %v692 = vmul.f32 %v691, 1.442695
    %v693 = vpow.pop %v692
    %v694 = vadd.f32 %v693, 1.0
    %v695 = vrcp.pop %v694
    %v696 = vmul.f32 %v694, %v695
    %v697 = vsub.f32 1.0, %v696
    %v698 = vmul.f32 %v695, %v697
    %v699 = vadd.f32 %v695, %v698
    %vm700 = vweird.f32 %v694
    %vm701 = vweird.f32 %v695
    %vm702 = vmor %vm700, %vm701
    %v703 = vsel %vm702, %v695, %v699
    %v704 = vand.u32 2147483647, %v694
    %vm705 = vcmp.eq.f32.partialorder %v704, 8.507059e+37
    %v706 = vand.u32 %v694, 2147483648
    %v707 = vor.u32 1.1754944e-38, %v706
    %v708 = vsel %vm705, %v707, %v703
    %v709 = vmul.f32 1.0, %v708
    %v710 = vtanh.pop %v687
    %v711 = vmul.f32 %v709, %v588
    %713 = vrot.lane.b32.xlu0 %v710, 32
    %v714 = vpop.permute.xlu0 %713
    %v716 = vmul.f32 %v709, %v714
    %718 = vrot.lane.b32.xlu0 %v716, 32
    %v719 = vpop.permute.xlu0 %718
    %v721 = vadd.f32 %v711, %v719
    %v722 = vtanh.pop %v721
    %724 = vrot.lane.b32.xlu0 %v722, 32
    %v725 = vpop.permute.xlu0 %724
    %v727 = vmul.f32 %v709, %v725
    %v728 = vxor.u32 %v690, 2147483648
    %v729 = vmul.f32 %v728, 1.442695
    %v730 = vpow.pop %v729
    %v731 = vadd.f32 %v730, 1.0
    %v732 = vrcp.pop %v731
    %v733 = vmul.f32 %v731, %v732
    %v734 = vsub.f32 1.0, %v733
    %v735 = vmul.f32 %v732, %v734
    %v736 = vadd.f32 %v732, %v735
    %vm737 = vweird.f32 %v731
    %vm738 = vweird.f32 %v732
    %vm739 = vmor %vm737, %vm738
    %v740 = vsel %vm739, %v732, %v736
    %v741 = vand.u32 2147483647, %v731
    %vm742 = vcmp.eq.f32.partialorder %v741, 8.507059e+37
    %v743 = vand.u32 %v731, 2147483648
    %v744 = vor.u32 1.1754944e-38, %v743
    %v745 = vsel %vm742, %v744, %v740
    %v746 = vmul.f32 1.0, %v745
    %v747 = vtanh.pop %v690
    %v748 = vmul.f32 %v746, %v625
    %750 = vrot.lane.b32.xlu0 %v747, 32
    %v751 = vpop.permute.xlu0 %750
    %v753 = vmul.f32 %v746, %v751
    %755 = vrot.lane.b32.xlu0 %v753, 32
    %v756 = vpop.permute.xlu0 %755
    %v758 = vadd.f32 %v748, %v756
    %v759 = vtanh.pop %v758
    %761 = vrot.lane.b32.xlu0 %v759, 32
    %v762 = vpop.permute.xlu0 %761
    %v764 = vmul.f32 %v746, %v762
    %v765 = vpack.c.bf16 %v727, %v727
    %767 = vrot.lane.b32.xlu0 %v765, 64
    %v768 = vpop.permute.xlu0 %767
    %s770 = scalar_lea.vmem %s3, 12
    %771 = vst.msk [vmem:[%s770] sm:$0xf] %vm371, %v768
    %v772 = vpack.c.bf16 %v764, %v764
    %774 = vrot.lane.b32.xlu0 %v772, 64
    %v775 = vpop.permute.xlu0 %774
    %s777 = scalar_lea.vmem %s177, 16
    %778 = vst.msk [vmem:[%s777] sm:$0xf] %vm371, %v775
    %780 = vrot.lane.b32.xlu0 %v727, 64
    %v781 = vpop.permute.xlu0 %780
    %784 = vrot.lane.b32.xlu0 %v764, 96
    %v785 = vpop.permute.xlu0 %784
    %v787 = vsel %vm206, %v781, %v785
    %v788 = vpack.c.bf16 %v787, %v787
    %v790 = vsel %vm249, %v788, 0
    %792 = vmatpush.bf16.msra.mxu0 0
    %793 = vmatpush.bf16.msra.mxu0 0
    %794 = vmatpush.bf16.msra.mxu0 0
    %795 = vmatpush.bf16.msra.mxu0 0
    %796 = vmatpush.bf16.msra.mxu0 %v239
    %797 = vmatpush.bf16.msra.mxu0 %v237
    %798 = vmatpush.bf16.msra.mxu0 %v235
    %799 = vmatpush.bf16.msra.mxu0 %v233
    %800 = vmatmul.bf16.gmra.mxu0 %v790
    %v801 = vpop.f32.mrf.mxu0
    %v802 = vadd.f32 0.0, %v801
    %v803 = vpop.f32.mrf.mxu0
    %804 = vdwg.mxu0
    %805 = vmatpush.bf16.msra.mxu0 0
    %806 = vmatpush.bf16.msra.mxu0 0
    %807 = vmatpush.bf16.msra.mxu0 0
    %808 = vmatpush.bf16.msra.mxu0 0
    %809 = vmatpush.bf16.msra.mxu0 %v240
    %810 = vmatpush.bf16.msra.mxu0 %v238
    %811 = vmatpush.bf16.msra.mxu0 %v236
    %812 = vmatpush.bf16.msra.mxu0 %v234
    %813 = vmatmul.bf16.gmra.mxu0 %v790
    %v814 = vpop.f32.mrf.mxu0
    %v815 = vadd.f32 0.0, %v814
    %v816 = vpop.f32.mrf.mxu0
    %817 = vdwg.mxu0
    %s818 = scalar_lea.vmem [#allocation6], 32
    %v819 = vld [vmem:[%s818] sm:$0xff]
    %v820 = vadd.f32 %v819, %v802
    %s821 = scalar_lea.vmem [#allocation7], 24
    %v822 = vld [vmem:[%s821] sm:$0xff]
    %v823 = vadd.f32 %v822, %v815
    %v824 = vxor.u32 %v820, 2147483648
    %v825 = vmul.f32 %v824, 1.442695
    %v826 = vpow.pop %v825
    %v827 = vadd.f32 %v826, 1.0
    %v828 = vrcp.pop %v827
    %v829 = vmul.f32 %v827, %v828
    %v830 = vsub.f32 1.0, %v829
    %v831 = vmul.f32 %v828, %v830
    %v832 = vadd.f32 %v828, %v831
    %vm833 = vweird.f32 %v827
    %vm834 = vweird.f32 %v828
    %vm835 = vmor %vm833, %vm834
    %v836 = vsel %vm835, %v828, %v832
    %v837 = vand.u32 2147483647, %v827
    %vm838 = vcmp.eq.f32.partialorder %v837, 8.507059e+37
    %v839 = vand.u32 %v827, 2147483648
    %v840 = vor.u32 1.1754944e-38, %v839
    %v841 = vsel %vm838, %v840, %v836
    %v842 = vmul.f32 1.0, %v841
    %v843 = vtanh.pop %v820
    %v844 = vmul.f32 %v842, %v721
    %846 = vrot.lane.b32.xlu0 %v843, 32
    %v847 = vpop.permute.xlu0 %846
    %v849 = vmul.f32 %v842, %v847
    %851 = vrot.lane.b32.xlu0 %v849, 32
    %v852 = vpop.permute.xlu0 %851
    %v854 = vadd.f32 %v844, %v852
    %v855 = vtanh.pop %v854
    %857 = vrot.lane.b32.xlu0 %v855, 32
    %v858 = vpop.permute.xlu0 %857
    %v860 = vmul.f32 %v842, %v858
    %v861 = vxor.u32 %v823, 2147483648
    %v862 = vmul.f32 %v861, 1.442695
    %v863 = vpow.pop %v862
    %v864 = vadd.f32 %v863, 1.0
    %v865 = vrcp.pop %v864
    %v866 = vmul.f32 %v864, %v865
    %v867 = vsub.f32 1.0, %v866
    %v868 = vmul.f32 %v865, %v867
    %v869 = vadd.f32 %v865, %v868
    %vm870 = vweird.f32 %v864
    %vm871 = vweird.f32 %v865
    %vm872 = vmor %vm870, %vm871
    %v873 = vsel %vm872, %v865, %v869
    %v874 = vand.u32 2147483647, %v864
    %vm875 = vcmp.eq.f32.partialorder %v874, 8.507059e+37
    %v876 = vand.u32 %v864, 2147483648
    %v877 = vor.u32 1.1754944e-38, %v876
    %v878 = vsel %vm875, %v877, %v873
    %v879 = vmul.f32 1.0, %v878
    %v880 = vtanh.pop %v823
    %v881 = vmul.f32 %v879, %v758
    %883 = vrot.lane.b32.xlu0 %v880, 32
    %v884 = vpop.permute.xlu0 %883
    %v886 = vmul.f32 %v879, %v884
    %888 = vrot.lane.b32.xlu0 %v886, 32
    %v889 = vpop.permute.xlu0 %888
    %v891 = vadd.f32 %v881, %v889
    %v892 = vtanh.pop %v891
    %894 = vrot.lane.b32.xlu0 %v892, 32
    %v895 = vpop.permute.xlu0 %894
    %v897 = vmul.f32 %v879, %v895
    %v898 = vpack.c.bf16 %v860, %v860
    %900 = vrot.lane.b32.xlu0 %v898, 64
    %v901 = vpop.permute.xlu0 %900
    %s903 = scalar_lea.vmem %s3, 16
    %904 = vst.msk [vmem:[%s903] sm:$0xf] %vm371, %v901
    %v905 = vpack.c.bf16 %v897, %v897
    %907 = vrot.lane.b32.xlu0 %v905, 64
    %v908 = vpop.permute.xlu0 %907
    %s910 = scalar_lea.vmem %s177, 12
    %911 = vst.msk [vmem:[%s910] sm:$0xf] %vm371, %v908
    %913 = vrot.lane.b32.xlu0 %v860, 64
    %v914 = vpop.permute.xlu0 %913
    %917 = vrot.lane.b32.xlu0 %v897, 96
    %v918 = vpop.permute.xlu0 %917
    %v920 = vsel %vm206, %v914, %v918
    %v921 = vpack.c.bf16 %v920, %v920
    %v923 = vsel %vm249, %v921, 0
    %925 = vmatpush.bf16.msra.mxu0 0
    %926 = vmatpush.bf16.msra.mxu0 0
    %927 = vmatpush.bf16.msra.mxu0 0
    %928 = vmatpush.bf16.msra.mxu0 0
    %929 = vmatpush.bf16.msra.mxu0 %v239
    %930 = vmatpush.bf16.msra.mxu0 %v237
    %931 = vmatpush.bf16.msra.mxu0 %v235
    %932 = vmatpush.bf16.msra.mxu0 %v233
    %933 = vmatmul.bf16.gmra.mxu0 %v923
    %v934 = vpop.f32.mrf.mxu0
    %v935 = vadd.f32 0.0, %v934
    %v936 = vpop.f32.mrf.mxu0
    %937 = vdwg.mxu0
    %938 = vmatpush.bf16.msra.mxu0 0
    %939 = vmatpush.bf16.msra.mxu0 0
    %940 = vmatpush.bf16.msra.mxu0 0
    %941 = vmatpush.bf16.msra.mxu0 0
    %942 = vmatpush.bf16.msra.mxu0 %v240
    %943 = vmatpush.bf16.msra.mxu0 %v238
    %944 = vmatpush.bf16.msra.mxu0 %v236
    %945 = vmatpush.bf16.msra.mxu0 %v234
    %946 = vmatmul.bf16.gmra.mxu0 %v923
    %v947 = vpop.f32.mrf.mxu0
    %v948 = vadd.f32 0.0, %v947
    %v949 = vpop.f32.mrf.mxu0
    %950 = vdwg.mxu0
    %s951 = scalar_lea.vmem [#allocation6], 40
    %v952 = vld [vmem:[%s951] sm:$0xff]
    %v953 = vadd.f32 %v952, %v935
    %s954 = scalar_lea.vmem [#allocation7], 16
    %v955 = vld [vmem:[%s954] sm:$0xff]
    %v956 = vadd.f32 %v955, %v948
    %v957 = vxor.u32 %v953, 2147483648
    %v958 = vmul.f32 %v957, 1.442695
    %v959 = vpow.pop %v958
    %v960 = vadd.f32 %v959, 1.0
    %v961 = vrcp.pop %v960
    %v962 = vmul.f32 %v960, %v961
    %v963 = vsub.f32 1.0, %v962
    %v964 = vmul.f32 %v961, %v963
    %v965 = vadd.f32 %v961, %v964
    %vm966 = vweird.f32 %v960
    %vm967 = vweird.f32 %v961
    %vm968 = vmor %vm966, %vm967
    %v969 = vsel %vm968, %v961, %v965
    %v970 = vand.u32 2147483647, %v960
    %vm971 = vcmp.eq.f32.partialorder %v970, 8.507059e+37
    %v972 = vand.u32 %v960, 2147483648
    %v973 = vor.u32 1.1754944e-38, %v972
    %v974 = vsel %vm971, %v973, %v969
    %v975 = vmul.f32 1.0, %v974
    %v976 = vtanh.pop %v953
    %v977 = vmul.f32 %v975, %v854
    %979 = vrot.lane.b32.xlu0 %v976, 32
    %v980 = vpop.permute.xlu0 %979
    %v982 = vmul.f32 %v975, %v980
    %984 = vrot.lane.b32.xlu0 %v982, 32
    %v985 = vpop.permute.xlu0 %984
    %v987 = vadd.f32 %v977, %v985
    %v988 = vtanh.pop %v987
    %990 = vrot.lane.b32.xlu0 %v988, 32
    %v991 = vpop.permute.xlu0 %990
    %v993 = vmul.f32 %v975, %v991
    %v994 = vxor.u32 %v956, 2147483648
    %v995 = vmul.f32 %v994, 1.442695
    %v996 = vpow.pop %v995
    %v997 = vadd.f32 %v996, 1.0
    %v998 = vrcp.pop %v997
    %v999 = vmul.f32 %v997, %v998
    %v1000 = vsub.f32 1.0, %v999
    %v1001 = vmul.f32 %v998, %v1000
    %v1002 = vadd.f32 %v998, %v1001
    %vm1003 = vweird.f32 %v997
    %vm1004 = vweird.f32 %v998
    %vm1005 = vmor %vm1003, %vm1004
    %v1006 = vsel %vm1005, %v998, %v1002
    %v1007 = vand.u32 2147483647, %v997
    %vm1008 = vcmp.eq.f32.partialorder %v1007, 8.507059e+37
    %v1009 = vand.u32 %v997, 2147483648
    %v1010 = vor.u32 1.1754944e-38, %v1009
    %v1011 = vsel %vm1008, %v1010, %v1006
    %v1012 = vmul.f32 1.0, %v1011
    %v1013 = vtanh.pop %v956
    %v1014 = vmul.f32 %v1012, %v891
    %1016 = vrot.lane.b32.xlu0 %v1013, 32
    %v1017 = vpop.permute.xlu0 %1016
    %v1019 = vmul.f32 %v1012, %v1017
    %1021 = vrot.lane.b32.xlu0 %v1019, 32
    %v1022 = vpop.permute.xlu0 %1021
    %v1024 = vadd.f32 %v1014, %v1022
    %v1025 = vtanh.pop %v1024
    %1027 = vrot.lane.b32.xlu0 %v1025, 32
    %v1028 = vpop.permute.xlu0 %1027
    %v1030 = vmul.f32 %v1012, %v1028
    %v1031 = vpack.c.bf16 %v993, %v993
    %1033 = vrot.lane.b32.xlu0 %v1031, 64
    %v1034 = vpop.permute.xlu0 %1033
    %s1036 = scalar_lea.vmem %s3, 20
    %1037 = vst.msk [vmem:[%s1036] sm:$0xf] %vm371, %v1034
    %v1038 = vpack.c.bf16 %v1030, %v1030
    %1040 = vrot.lane.b32.xlu0 %v1038, 64
    %v1041 = vpop.permute.xlu0 %1040
    %s1043 = scalar_lea.vmem %s177, 8
    %1044 = vst.msk [vmem:[%s1043] sm:$0xf] %vm371, %v1041
    %1046 = vrot.lane.b32.xlu0 %v993, 64
    %v1047 = vpop.permute.xlu0 %1046
    %1050 = vrot.lane.b32.xlu0 %v1030, 96
    %v1051 = vpop.permute.xlu0 %1050
    %v1053 = vsel %vm206, %v1047, %v1051
    %v1054 = vpack.c.bf16 %v1053, %v1053
    %v1056 = vsel %vm249, %v1054, 0
    %1058 = vmatpush.bf16.msra.mxu0 0
    %1059 = vmatpush.bf16.msra.mxu0 0
    %1060 = vmatpush.bf16.msra.mxu0 0
    %1061 = vmatpush.bf16.msra.mxu0 0
    %1062 = vmatpush.bf16.msra.mxu0 %v239
    %1063 = vmatpush.bf16.msra.mxu0 %v237
    %1064 = vmatpush.bf16.msra.mxu0 %v235
    %1065 = vmatpush.bf16.msra.mxu0 %v233
    %1066 = vmatmul.bf16.gmra.mxu0 %v1056
    %v1067 = vpop.f32.mrf.mxu0
    %v1068 = vadd.f32 0.0, %v1067
    %v1069 = vpop.f32.mrf.mxu0
    %1070 = vdwg.mxu0
    %1071 = vmatpush.bf16.msra.mxu0 0
    %1072 = vmatpush.bf16.msra.mxu0 0
    %1073 = vmatpush.bf16.msra.mxu0 0
    %1074 = vmatpush.bf16.msra.mxu0 0
    %1075 = vmatpush.bf16.msra.mxu0 %v240
    %1076 = vmatpush.bf16.msra.mxu0 %v238
    %1077 = vmatpush.bf16.msra.mxu0 %v236
    %1078 = vmatpush.bf16.msra.mxu0 %v234
    %1079 = vmatmul.bf16.gmra.mxu0 %v1056
    %v1080 = vpop.f32.mrf.mxu0
    %v1081 = vadd.f32 0.0, %v1080
    %v1082 = vpop.f32.mrf.mxu0
    %1083 = vdwg.mxu0
    %s1084 = scalar_lea.vmem [#allocation6], 48
    %v1085 = vld [vmem:[%s1084] sm:$0xff]
    %v1086 = vadd.f32 %v1085, %v1068
    %s1087 = scalar_lea.vmem [#allocation7], 8
    %v1088 = vld [vmem:[%s1087] sm:$0xff]
    %v1089 = vadd.f32 %v1088, %v1081
    %v1090 = vxor.u32 %v1086, 2147483648
    %v1091 = vmul.f32 %v1090, 1.442695
    %v1092 = vpow.pop %v1091
    %v1093 = vadd.f32 %v1092, 1.0
    %v1094 = vrcp.pop %v1093
    %v1095 = vmul.f32 %v1093, %v1094
    %v1096 = vsub.f32 1.0, %v1095
    %v1097 = vmul.f32 %v1094, %v1096
    %v1098 = vadd.f32 %v1094, %v1097
    %vm1099 = vweird.f32 %v1093
    %vm1100 = vweird.f32 %v1094
    %vm1101 = vmor %vm1099, %vm1100
    %v1102 = vsel %vm1101, %v1094, %v1098
    %v1103 = vand.u32 2147483647, %v1093
    %vm1104 = vcmp.eq.f32.partialorder %v1103, 8.507059e+37
    %v1105 = vand.u32 %v1093, 2147483648
    %v1106 = vor.u32 1.1754944e-38, %v1105
    %v1107 = vsel %vm1104, %v1106, %v1102
    %v1108 = vmul.f32 1.0, %v1107
    %v1109 = vtanh.pop %v1086
    %v1110 = vmul.f32 %v1108, %v987
    %1112 = vrot.lane.b32.xlu0 %v1109, 32
    %v1113 = vpop.permute.xlu0 %1112
    %v1115 = vmul.f32 %v1108, %v1113
    %1117 = vrot.lane.b32.xlu0 %v1115, 32
    %v1118 = vpop.permute.xlu0 %1117
    %v1120 = vadd.f32 %v1110, %v1118
    %v1121 = vtanh.pop %v1120
    %1123 = vrot.lane.b32.xlu0 %v1121, 32
    %v1124 = vpop.permute.xlu0 %1123
    %v1126 = vmul.f32 %v1108, %v1124
    %v1127 = vxor.u32 %v1089, 2147483648
    %v1128 = vmul.f32 %v1127, 1.442695
    %v1129 = vpow.pop %v1128
    %v1130 = vadd.f32 %v1129, 1.0
    %v1131 = vrcp.pop %v1130
    %v1132 = vmul.f32 %v1130, %v1131
    %v1133 = vsub.f32 1.0, %v1132
    %v1134 = vmul.f32 %v1131, %v1133
    %v1135 = vadd.f32 %v1131, %v1134
    %vm1136 = vweird.f32 %v1130
    %vm1137 = vweird.f32 %v1131
    %vm1138 = vmor %vm1136, %vm1137
    %v1139 = vsel %vm1138, %v1131, %v1135
    %v1140 = vand.u32 2147483647, %v1130
    %vm1141 = vcmp.eq.f32.partialorder %v1140, 8.507059e+37
    %v1142 = vand.u32 %v1130, 2147483648
    %v1143 = vor.u32 1.1754944e-38, %v1142
    %v1144 = vsel %vm1141, %v1143, %v1139
    %v1145 = vmul.f32 1.0, %v1144
    %v1146 = vtanh.pop %v1089
    %v1147 = vmul.f32 %v1145, %v1024
    %1149 = vrot.lane.b32.xlu0 %v1146, 32
    %v1150 = vpop.permute.xlu0 %1149
    %v1152 = vmul.f32 %v1145, %v1150
    %1154 = vrot.lane.b32.xlu0 %v1152, 32
    %v1155 = vpop.permute.xlu0 %1154
    %v1157 = vadd.f32 %v1147, %v1155
    %v1158 = vtanh.pop %v1157
    %1160 = vrot.lane.b32.xlu0 %v1158, 32
    %v1161 = vpop.permute.xlu0 %1160
    %v1163 = vmul.f32 %v1145, %v1161
    %v1164 = vpack.c.bf16 %v1126, %v1126
    %1166 = vrot.lane.b32.xlu0 %v1164, 64
    %v1167 = vpop.permute.xlu0 %1166
    %s1169 = scalar_lea.vmem %s3, 24
    %1170 = vst.msk [vmem:[%s1169] sm:$0xf] %vm371, %v1167
    %v1171 = vpack.c.bf16 %v1163, %v1163
    %1173 = vrot.lane.b32.xlu0 %v1171, 64
    %v1174 = vpop.permute.xlu0 %1173
    %s1176 = scalar_lea.vmem %s177, 4
    %1177 = vst.msk [vmem:[%s1176] sm:$0xf] %vm371, %v1174
    %1179 = vrot.lane.b32.xlu0 %v1126, 64
    %v1180 = vpop.permute.xlu0 %1179
    %1183 = vrot.lane.b32.xlu0 %v1163, 96
    %v1184 = vpop.permute.xlu0 %1183
    %v1186 = vsel %vm206, %v1180, %v1184
    %v1187 = vpack.c.bf16 %v1186, %v1186
    %v1189 = vsel %vm249, %v1187, 0
    %1191 = vmatpush.bf16.msra.mxu0 0
    %1192 = vmatpush.bf16.msra.mxu0 0
    %1193 = vmatpush.bf16.msra.mxu0 0
    %1194 = vmatpush.bf16.msra.mxu0 0
    %1195 = vmatpush.bf16.msra.mxu0 %v239
    %1196 = vmatpush.bf16.msra.mxu0 %v237
    %1197 = vmatpush.bf16.msra.mxu0 %v235
    %1198 = vmatpush.bf16.msra.mxu0 %v233
    %1199 = vmatmul.bf16.gmra.mxu0 %v1189
    %v1200 = vpop.f32.mrf.mxu0
    %v1201 = vadd.f32 0.0, %v1200
    %v1202 = vpop.f32.mrf.mxu0
    %1203 = vdwg.mxu0
    %1204 = vmatpush.bf16.msra.mxu0 0
    %1205 = vmatpush.bf16.msra.mxu0 0
    %1206 = vmatpush.bf16.msra.mxu0 0
    %1207 = vmatpush.bf16.msra.mxu0 0
    %1208 = vmatpush.bf16.msra.mxu0 %v240
    %1209 = vmatpush.bf16.msra.mxu0 %v238
    %1210 = vmatpush.bf16.msra.mxu0 %v236
    %1211 = vmatpush.bf16.msra.mxu0 %v234
    %1212 = vmatmul.bf16.gmra.mxu0 %v1189
    %v1213 = vpop.f32.mrf.mxu0
    %v1214 = vadd.f32 0.0, %v1213
    %v1215 = vpop.f32.mrf.mxu0
    %1216 = vdwg.mxu0
    %s1217 = scalar_lea.vmem [#allocation6], 56
    %v1218 = vld [vmem:[%s1217] sm:$0xff]
    %v1219 = vadd.f32 %v1218, %v1201
    %v1220 = vld [vmem:[#allocation7] sm:$0xff]
    %v1221 = vadd.f32 %v1220, %v1214
    %v1222 = vxor.u32 %v1219, 2147483648
    %v1223 = vmul.f32 %v1222, 1.442695
    %v1224 = vpow.pop %v1223
    %v1225 = vadd.f32 %v1224, 1.0
    %v1226 = vrcp.pop %v1225
    %v1227 = vmul.f32 %v1225, %v1226
    %v1228 = vsub.f32 1.0, %v1227
    %v1229 = vmul.f32 %v1226, %v1228
    %v1230 = vadd.f32 %v1226, %v1229
    %vm1231 = vweird.f32 %v1225
    %vm1232 = vweird.f32 %v1226
    %vm1233 = vmor %vm1231, %vm1232
    %v1234 = vsel %vm1233, %v1226, %v1230
    %v1235 = vand.u32 2147483647, %v1225
    %vm1236 = vcmp.eq.f32.partialorder %v1235, 8.507059e+37
    %v1237 = vand.u32 %v1225, 2147483648
    %v1238 = vor.u32 1.1754944e-38, %v1237
    %v1239 = vsel %vm1236, %v1238, %v1234
    %v1240 = vmul.f32 1.0, %v1239
    %v1241 = vtanh.pop %v1219
    %v1242 = vmul.f32 %v1240, %v1120
    %1244 = vrot.lane.b32.xlu0 %v1241, 32
    %v1245 = vpop.permute.xlu0 %1244
    %v1247 = vmul.f32 %v1240, %v1245
    %1249 = vrot.lane.b32.xlu0 %v1247, 32
    %v1250 = vpop.permute.xlu0 %1249
    %v1252 = vadd.f32 %v1242, %v1250
    %v1253 = vtanh.pop %v1252
    %1255 = vrot.lane.b32.xlu0 %v1253, 32
    %v1256 = vpop.permute.xlu0 %1255
    %v1258 = vmul.f32 %v1240, %v1256
    %v1259 = vxor.u32 %v1221, 2147483648
    %v1260 = vmul.f32 %v1259, 1.442695
    %v1261 = vpow.pop %v1260
    %v1262 = vadd.f32 %v1261, 1.0
    %v1263 = vrcp.pop %v1262
    %v1264 = vmul.f32 %v1262, %v1263
    %v1265 = vsub.f32 1.0, %v1264
    %v1266 = vmul.f32 %v1263, %v1265
    %v1267 = vadd.f32 %v1263, %v1266
    %vm1268 = vweird.f32 %v1262
    %vm1269 = vweird.f32 %v1263
    %vm1270 = vmor %vm1268, %vm1269
    %v1271 = vsel %vm1270, %v1263, %v1267
    %v1272 = vand.u32 2147483647, %v1262
    %vm1273 = vcmp.eq.f32.partialorder %v1272, 8.507059e+37
    %v1274 = vand.u32 %v1262, 2147483648
    %v1275 = vor.u32 1.1754944e-38, %v1274
    %v1276 = vsel %vm1273, %v1275, %v1271
    %v1277 = vmul.f32 1.0, %v1276
    %v1278 = vtanh.pop %v1221
    %v1279 = vmul.f32 %v1277, %v1157
    %1281 = vrot.lane.b32.xlu0 %v1278, 32
    %v1282 = vpop.permute.xlu0 %1281
    %v1284 = vmul.f32 %v1277, %v1282
    %1286 = vrot.lane.b32.xlu0 %v1284, 32
    %v1287 = vpop.permute.xlu0 %1286
    %v1289 = vadd.f32 %v1279, %v1287
    %v1290 = vtanh.pop %v1289
    %1292 = vrot.lane.b32.xlu0 %v1290, 32
    %v1293 = vpop.permute.xlu0 %1292
    %v1295 = vmul.f32 %v1277, %v1293
    %v1296 = vpack.c.bf16 %v1258, %v1258
    %1298 = vrot.lane.b32.xlu0 %v1296, 64
    %v1299 = vpop.permute.xlu0 %1298
    %s1301 = scalar_lea.vmem %s3, 28
    %1302 = vst.msk [vmem:[%s1301] sm:$0xf] %vm371, %v1299
    %v1303 = vpack.c.bf16 %v1295, %v1295
    %1305 = vrot.lane.b32.xlu0 %v1303, 64
    %v1306 = vpop.permute.xlu0 %1305
    %1308 = vst.msk [vmem:[%s177] sm:$0xf] %vm371, %v1306
    %1310 = vrot.lane.b32.xlu0 %v1258, 64
    %v1311 = vpop.permute.xlu0 %1310
    %1313 = vst.msk [vmem:[#allocation2] sm:$0xff] %vm206, %v1311
    %1315 = vrot.lane.b32.xlu0 %v1295, 64
    %v1316 = vpop.permute.xlu0 %1315
    %1318 = vst.msk [vmem:[#allocation3] sm:$0xff] %vm206, %v1316
    %1320 = vrot.lane.b32.xlu0 %v1252, 96
    %v1321 = vpop.permute.xlu0 %1320
    %1323 = vst.msk [vmem:[#allocation4] sm:$0xff] %vm206, %v1321
    %1325 = vrot.lane.b32.xlu0 %v1289, 96
    %v1326 = vpop.permute.xlu0 %1325
    %1328 = vst.msk [vmem:[#allocation5] sm:$0xff] %vm206, %v1326
    %s1329 = ssub.s32 0, 0
    %s1330 = smul.u32 8, %s1329
    %p1331 = scmp.lt.s32.totalorder %s1330, 7
    %s1332 = scalar_select %p1331, %s1330, 7
    %s1333 = smul.addr %s1332, 4
    %s1334 = scalar_lea.vmem %s4, %s1333
    // Predicated region
    $region98: #{bilstm_moreff_forward.8} parent=1 // pred_check
      _
    $region99: #{bilstm_moreff_forward.8} parent=1 // pred_check_branch
      %1336 = sbr.rel (0) target = $region101
    $region100: #{bilstm_moreff_forward.8} parent=1 // pred_region
      _
    $region101: #{bilstm_moreff_forward.8} parent=1 // pred_fallthru
      _
    // Predicated region
    $region102: #{bilstm_moreff_forward.8} parent=1 // pred_check
      _
    $region103: #{bilstm_moreff_forward.8} parent=1 // pred_check_branch
      %1338 = sbr.rel (0) target = $region105
    $region104: #{bilstm_moreff_forward.8} parent=1 // pred_region
      %s1339 = ssub.s32 0, 0
      %s1340 = smul.u32 8, %s1339
    $region105: #{bilstm_moreff_forward.8} parent=1 // pred_fallthru
      _
    // Predicated region
    $region106: #{bilstm_moreff_forward.8} parent=1 // pred_check
      _
    $region107: #{bilstm_moreff_forward.8} parent=1 // pred_check_branch
      %1342 = sbr.rel (0) target = $region109
    $region108: #{bilstm_moreff_forward.8} parent=1 // pred_region
      _
    $region109: #{bilstm_moreff_forward.8} parent=1 // pred_fallthru
      _
    // Predicated region
    $region110: #{bilstm_moreff_forward.8} parent=1 // pred_check
      _
    $region111: #{bilstm_moreff_forward.8} parent=1 // pred_check_branch
      %1344 = sbr.rel (0) target = $region113
    $region112: #{bilstm_moreff_forward.8} parent=1 // pred_region
      %s1345 = ssub.s32 0, 0
      %s1346 = smul.u32 8, %s1345
      %p1347 = scmp.lt.s32.totalorder %s1346, 7
      %s1348 = scalar_select %p1347, %s1346, 7
      %s1349 = smul.addr %s1348, 4
      %s1350 = scalar_lea.vmem %s4, %s1349
    $region113: #{bilstm_moreff_forward.8} parent=1 // pred_fallthru
      _
    %1351 = vsyncpa [#allocation9], 1

// kernel: bilstm_moreff_forward.9
$region0: #{bilstm_moreff_forward.9}
  #allocation0 [shape = 'u32[]', space=smem, size = 0x4, offset = 0x4, fixed_abs, tag = 'smem constant byte address 0x4 - core index']
  #allocation1 [shape = 'u32[72,128]{1,0:T(1,128)}', space=vmem, size = 0x9000, scoped, tag = 'internal scratch']
  %s0 = inlined_call_operand.vmem [shape: bf16[64,32], index: 0, kind: input, shape index: {}]
  %s1 = inlined_call_operand.vmem [shape: bf16[64,32], index: 1, kind: input, shape index: {}]
  %s2 = inlined_call_operand.vmem [shape: bf16[32,32], index: 2, kind: input, shape index: {}]
  %s3 = inlined_call_operand.hbm [shape: bf16[32,32], index: 3, kind: input, shape index: {}]
  %s4 = inlined_call_operand.vmem [shape: f32[1,32], index: 4, kind: input, shape index: {}]
  %s5 = inlined_call_operand.hbm [shape: bf16[1,32,32], index: 5, kind: input, shape index: {}]
  %s6 = inlined_call_operand.hbm [shape: f32[1,1,32], index: 6, kind: input, shape index: {}]
  %s7 = inlined_call_operand.vmem [shape: f32[64,32], index: 7, kind: output, shape index: {}]
  %s8 = sld [smem:[#allocation0]]
  $region50: #{bilstm_moreff_forward.9} parent=0
    _
  %s10 = ssub.s32 1, %s8
  %s11 = scalar_select 0, %s10, %s8
  $region1: #{bilstm_moreff_forward.9} parent=0
    #allocation2 [shape = 'u8[8192]{0}', space=vmem, size = 0x2000, scoped, tag = 'input window, operand 3, single buffered']
    #allocation3 [shape = 's32[1]{0}', space=sflag, size = 0x4, scoped, tag = 'scoped memory for bilstm_moreff_forward.9']
    #allocation4 [shape = 'u8[8192]{0}', space=vmem, size = 0x2000, scoped, tag = 'input window, operand 5, single buffered']
    #allocation5 [shape = 's32[1]{0}', space=sflag, size = 0x4, scoped, tag = 'scoped memory for bilstm_moreff_forward.9']
    #allocation6 [shape = 'u8[512]{0}', space=vmem, size = 0x400, scoped, tag = 'input window, operand 6, single buffered']
    %12 = vsyncpa [#allocation3], 0
    %13 = vsyncpa [#allocation5], 0
    // Predicated region
    $region2: #{bilstm_moreff_forward.9} parent=1 // pred_check
      _
    $region3: #{bilstm_moreff_forward.9} parent=1 // pred_check_branch
      %15 = sbr.rel (0) target = $region5
    $region4: #{bilstm_moreff_forward.9} parent=1 // pred_region
      _
    $region5: #{bilstm_moreff_forward.9} parent=1 // pred_fallthru
      _
    // Predicated region
    $region6: #{bilstm_moreff_forward.9} parent=1 // pred_check
      _
    $region7: #{bilstm_moreff_forward.9} parent=1 // pred_check_branch
      %17 = sbr.rel (0) target = $region9
    $region8: #{bilstm_moreff_forward.9} parent=1 // pred_region
      _
    $region9: #{bilstm_moreff_forward.9} parent=1 // pred_fallthru
      _
    // Predicated region
    $region10: #{bilstm_moreff_forward.9} parent=1 // pred_check
      _
    $region11: #{bilstm_moreff_forward.9} parent=1 // pred_check_branch
      %19 = sbr.rel (0) target = $region13
    $region12: #{bilstm_moreff_forward.9} parent=1 // pred_region
      _
    $region13: #{bilstm_moreff_forward.9} parent=1 // pred_fallthru
      _
    // Predicated region
    $region14: #{bilstm_moreff_forward.9} parent=1 // pred_check
      _
    $region15: #{bilstm_moreff_forward.9} parent=1 // pred_check_branch
      %21 = sbr.rel (0) target = $region17
    $region16: #{bilstm_moreff_forward.9} parent=1 // pred_region
      %23 = vsyncadd [#allocation3], 0
      %s24 = sshll.u32 %s3, 4
      %s25 = int_to_ptr.hbm [resolvable:$true] %s24
      %s26 = sshll.u32 [#allocation2], 4
      %s27 = int_to_ptr.vmem [resolvable:$true] %s26
      %32 = dma.hbm_to_vmem [thread:$0]  %s25, 256, %s27, [#allocation3], 64, 64, 4
    $region17: #{bilstm_moreff_forward.9} parent=1 // pred_fallthru
      _
    // Predicated region
    $region18: #{bilstm_moreff_forward.9} parent=1 // pred_check
      _
    $region19: #{bilstm_moreff_forward.9} parent=1 // pred_check_branch
      %34 = sbr.rel (0) target = $region21
    $region20: #{bilstm_moreff_forward.9} parent=1 // pred_region
      _
    $region21: #{bilstm_moreff_forward.9} parent=1 // pred_fallthru
      _
    // Predicated region
    $region22: #{bilstm_moreff_forward.9} parent=1 // pred_check
      _
    $region23: #{bilstm_moreff_forward.9} parent=1 // pred_check_branch
      %36 = sbr.rel (0) target = $region25
    $region24: #{bilstm_moreff_forward.9} parent=1 // pred_region
      %38 = vsyncadd [#allocation5], 0
      %s39 = sshll.u32 %s5, 4
      %s40 = int_to_ptr.hbm [resolvable:$true] %s39
      %s41 = sshll.u32 [#allocation4], 4
      %s42 = int_to_ptr.vmem [resolvable:$true] %s41
      %47 = dma.hbm_to_vmem [thread:$0]  %s40, 256, %s42, [#allocation5], 64, 64, 4
    $region25: #{bilstm_moreff_forward.9} parent=1 // pred_fallthru
      _
    // Predicated region
    $region26: #{bilstm_moreff_forward.9} parent=1 // pred_check
      _
    $region27: #{bilstm_moreff_forward.9} parent=1 // pred_check_branch
      %49 = sbr.rel (0) target = $region29
    $region28: #{bilstm_moreff_forward.9} parent=1 // pred_region
      %51 = vsyncadd [#allocation5], 0
      %s53 = sshll.u32 %s6, 4
      %s54 = int_to_ptr.hbm [resolvable:$true] %s53
      %s55 = sshll.u32 [#allocation6], 4
      %s56 = int_to_ptr.vmem [resolvable:$true] %s55
      %58 = dma.hbm_to_vmem [thread:$0]  %s54, 16, %s56, [#allocation5]
    $region29: #{bilstm_moreff_forward.9} parent=1 // pred_fallthru
      _
    // Predicated region
    $region30: #{bilstm_moreff_forward.9} parent=1 // pred_check
      _
    $region31: #{bilstm_moreff_forward.9} parent=1 // pred_check_branch
      %60 = sbr.rel (0) target = $region33
    $region32: #{bilstm_moreff_forward.9} parent=1 // pred_region
      %62 = dma.done [#allocation3], 256
    $region33: #{bilstm_moreff_forward.9} parent=1 // pred_fallthru
      _
    // Predicated region
    $region34: #{bilstm_moreff_forward.9} parent=1 // pred_check
      _
    $region35: #{bilstm_moreff_forward.9} parent=1 // pred_check_branch
      %64 = sbr.rel (0) target = $region37
    $region36: #{bilstm_moreff_forward.9} parent=1 // pred_region
      %66 = dma.done [#allocation5], 256
    $region37: #{bilstm_moreff_forward.9} parent=1 // pred_fallthru
      _
    // Predicated region
    $region38: #{bilstm_moreff_forward.9} parent=1 // pred_check
      _
    $region39: #{bilstm_moreff_forward.9} parent=1 // pred_check_branch
      %68 = sbr.rel (0) target = $region41
    $region40: #{bilstm_moreff_forward.9} parent=1 // pred_region
      %70 = dma.done [#allocation5], 16
    $region41: #{bilstm_moreff_forward.9} parent=1 // pred_fallthru
      _
    %v72 = vld [vmem:[%s0] sm:$0xf]
    %v73 = vld [vmem:[%s0 + $0x4] sm:$0xf]
    %v74 = vld [vmem:[%s0 + $0x8] sm:$0xf]
    %v75 = vld [vmem:[%s0 + $0xc] sm:$0xf]
    %v76 = vld [vmem:[%s0 + $0x10] sm:$0xf]
    %v77 = vld [vmem:[%s0 + $0x14] sm:$0xf]
    %v78 = vld [vmem:[%s0 + $0x18] sm:$0xf]
    %v79 = vld [vmem:[%s0 + $0x1c] sm:$0xf]
    %v80 = vld [vmem:[%s2] sm:$0xf]
    %v81 = vld [vmem:[%s2 + $0x4] sm:$0xf]
    %v82 = vld [vmem:[%s2 + $0x8] sm:$0xf]
    %v83 = vld [vmem:[%s2 + $0xc] sm:$0xf]
    %v84 = vld [vmem:[%s1] sm:$0xf]
    %v85 = vld [vmem:[%s1 + $0x4] sm:$0xf]
    %v86 = vld [vmem:[%s1 + $0x8] sm:$0xf]
    %v87 = vld [vmem:[%s1 + $0xc] sm:$0xf]
    %v88 = vld [vmem:[%s1 + $0x10] sm:$0xf]
    %v89 = vld [vmem:[%s1 + $0x14] sm:$0xf]
    %v90 = vld [vmem:[%s1 + $0x18] sm:$0xf]
    %v91 = vld [vmem:[%s1 + $0x1c] sm:$0xf]
    %v92 = vld [vmem:[#allocation2] sm:$0xf]
    %v93 = vld [vmem:[#allocation2 + $0x4] sm:$0xf]
    %v94 = vld [vmem:[#allocation2 + $0x8] sm:$0xf]
    %v95 = vld [vmem:[#allocation2 + $0xc] sm:$0xf]
    %v104 = vunpack.c.l.b16 %v84
    %v105 = vunpack.c.l.b16 %v85
    %v106 = vunpack.c.l.b16 %v86
    %v107 = vunpack.c.l.b16 %v87
    %v108 = vunpack.c.l.b16 %v88
    %v109 = vunpack.c.l.b16 %v89
    %v110 = vunpack.c.l.b16 %v90
    %v111 = vunpack.c.l.b16 %v91
    %v112 = vpack.c.b16 %v105, %v104
    %v113 = vpack.c.b16 %v107, %v106
    %v114 = vpack.c.b16 %v109, %v108
    %v115 = vpack.c.b16 %v111, %v110
    %v120 = vunpack.c.l.b16 %v92
    %v121 = vunpack.c.l.b16 %v93
    %v122 = vunpack.c.l.b16 %v94
    %v123 = vunpack.c.l.b16 %v95
    %v124 = vpack.c.b16 %v121, %v120
    %v125 = vpack.c.b16 %v123, %v122
    %vm128 = vcmask 261120
    %v130 = vsel %vm128, %v112, 0
    %v133 = vsel %vm128, %v113, 0
    %v136 = vsel %vm128, %v114, 0
    %v139 = vsel %vm128, %v115, 0
    %141 = vmatpush.bf16.msra.mxu0 0
    %142 = vmatpush.bf16.msra.mxu0 0
    %143 = vmatpush.bf16.msra.mxu0 0
    %144 = vmatpush.bf16.msra.mxu0 0
    %145 = vmatpush.bf16.msra.mxu0 0
    %146 = vmatpush.bf16.msra.mxu0 0
    %147 = vmatpush.bf16.msra.mxu0 %v125
    %148 = vmatpush.bf16.msra.mxu0 %v124
    %149 = vmatmul.bf16.gmra.mxu0 %v130
    %v150 = vpop.f32.mrf.mxu0
    %v151 = vadd.f32 0.0, %v150
    %v152 = vpop.f32.mrf.mxu0
    %v153 = vadd.f32 0.0, %v152
    %154 = vmatmul.bf16.gmra.mxu0 %v133
    %v155 = vpop.f32.mrf.mxu0
    %v156 = vadd.f32 0.0, %v155
    %v157 = vpop.f32.mrf.mxu0
    %v158 = vadd.f32 0.0, %v157
    %159 = vmatmul.bf16.gmra.mxu0 %v136
    %v160 = vpop.f32.mrf.mxu0
    %v161 = vadd.f32 0.0, %v160
    %v162 = vpop.f32.mrf.mxu0
    %v163 = vadd.f32 0.0, %v162
    %164 = vmatmul.bf16.gmra.mxu0 %v139
    %v165 = vpop.f32.mrf.mxu0
    %v166 = vadd.f32 0.0, %v165
    %v167 = vpop.f32.mrf.mxu0
    %v168 = vadd.f32 0.0, %v167
    %169 = vdwg.mxu0
    %v178 = vunpack.c.l.b16 %v72
    %v179 = vunpack.c.l.b16 %v73
    %v180 = vunpack.c.l.b16 %v74
    %v181 = vunpack.c.l.b16 %v75
    %v182 = vunpack.c.l.b16 %v76
    %v183 = vunpack.c.l.b16 %v77
    %v184 = vunpack.c.l.b16 %v78
    %v185 = vunpack.c.l.b16 %v79
    %v186 = vpack.c.b16 %v179, %v178
    %v187 = vpack.c.b16 %v181, %v180
    %v188 = vpack.c.b16 %v183, %v182
    %v189 = vpack.c.b16 %v185, %v184
    %v194 = vunpack.c.l.b16 %v80
    %v195 = vunpack.c.l.b16 %v81
    %v196 = vunpack.c.l.b16 %v82
    %v197 = vunpack.c.l.b16 %v83
    %v198 = vpack.c.b16 %v195, %v194
    %v199 = vpack.c.b16 %v197, %v196
    %v203 = vsel %vm128, %v186, 0
    %v206 = vsel %vm128, %v187, 0
    %v209 = vsel %vm128, %v188, 0
    %v212 = vsel %vm128, %v189, 0
    %214 = vmatpush.bf16.msra.mxu0 0
    %215 = vmatpush.bf16.msra.mxu0 0
    %216 = vmatpush.bf16.msra.mxu0 0
    %217 = vmatpush.bf16.msra.mxu0 0
    %218 = vmatpush.bf16.msra.mxu0 0
    %219 = vmatpush.bf16.msra.mxu0 0
    %220 = vmatpush.bf16.msra.mxu0 %v199
    %221 = vmatpush.bf16.msra.mxu0 %v198
    %222 = vmatmul.bf16.gmra.mxu0 %v203
    %v223 = vpop.f32.mrf.mxu0
    %v224 = vadd.f32 %v151, %v223
    %v225 = vpop.f32.mrf.mxu0
    %v226 = vadd.f32 %v153, %v225
    %227 = vmatmul.bf16.gmra.mxu0 %v206
    %v228 = vpop.f32.mrf.mxu0
    %v229 = vadd.f32 %v156, %v228
    %v230 = vpop.f32.mrf.mxu0
    %v231 = vadd.f32 %v158, %v230
    %232 = vmatmul.bf16.gmra.mxu0 %v209
    %v233 = vpop.f32.mrf.mxu0
    %v234 = vadd.f32 %v161, %v233
    %v235 = vpop.f32.mrf.mxu0
    %v236 = vadd.f32 %v163, %v235
    %237 = vmatmul.bf16.gmra.mxu0 %v212
    %v238 = vpop.f32.mrf.mxu0
    %v239 = vadd.f32 %v166, %v238
    %v240 = vpop.f32.mrf.mxu0
    %v241 = vadd.f32 %v168, %v240
    %242 = vdwg.mxu0
    %v243 = vld [vmem:[%s4] sm:$0x1]
    %v245 = vperm.slane %v243, 0
    %v247 = vadd.f32 %v224, %v245
    %v248 = vadd.f32 %v226, %v245
    %v249 = vadd.f32 %v229, %v245
    %v250 = vadd.f32 %v231, %v245
    %v251 = vadd.f32 %v234, %v245
    %v252 = vadd.f32 %v236, %v245
    %v253 = vadd.f32 %v239, %v245
    %v254 = vadd.f32 %v241, %v245
    %v255 = vpack.c.bf16 %v248, %v247
    %v256 = vpack.c.bf16 %v250, %v249
    %v257 = vpack.c.bf16 %v252, %v251
    %v258 = vpack.c.bf16 %v254, %v253
    %v259 = vld [vmem:[#allocation4] sm:$0xf]
    %v260 = vld [vmem:[#allocation4 + $0x4] sm:$0xf]
    %v261 = vld [vmem:[#allocation4 + $0x8] sm:$0xf]
    %v262 = vld [vmem:[#allocation4 + $0xc] sm:$0xf]
    %v263 = vld [vmem:[#allocation6] sm:$0x1]
    %v265 = vperm.slane %v263, 0
    %v271 = vunpack.c.l.b16 %v259
    %v272 = vunpack.c.l.b16 %v260
    %v273 = vunpack.c.l.b16 %v261
    %v274 = vunpack.c.l.b16 %v262
    %v275 = vpack.c.b16 %v272, %v271
    %v276 = vpack.c.b16 %v274, %v273
    %v280 = vsel %vm128, %v255, 0
    %v283 = vsel %vm128, %v256, 0
    %v286 = vsel %vm128, %v257, 0
    %v289 = vsel %vm128, %v258, 0
    %291 = vmatpush.bf16.msra.mxu0 0
    %292 = vmatpush.bf16.msra.mxu0 0
    %293 = vmatpush.bf16.msra.mxu0 0
    %294 = vmatpush.bf16.msra.mxu0 0
    %295 = vmatpush.bf16.msra.mxu0 0
    %296 = vmatpush.bf16.msra.mxu0 0
    %297 = vmatpush.bf16.msra.mxu0 %v276
    %298 = vmatpush.bf16.msra.mxu0 %v275
    %299 = vmatmul.bf16.gmra.mxu0 %v280
    %v300 = vpop.f32.mrf.mxu0
    %v301 = vadd.f32 %v265, %v300
    %v302 = vpop.f32.mrf.mxu0
    %v303 = vadd.f32 %v265, %v302
    %304 = vmatmul.bf16.gmra.mxu0 %v283
    %v305 = vpop.f32.mrf.mxu0
    %v306 = vadd.f32 %v265, %v305
    %v307 = vpop.f32.mrf.mxu0
    %v308 = vadd.f32 %v265, %v307
    %309 = vmatmul.bf16.gmra.mxu0 %v286
    %v310 = vpop.f32.mrf.mxu0
    %v311 = vadd.f32 %v265, %v310
    %v312 = vpop.f32.mrf.mxu0
    %v313 = vadd.f32 %v265, %v312
    %314 = vmatmul.bf16.gmra.mxu0 %v289
    %v315 = vpop.f32.mrf.mxu0
    %v316 = vadd.f32 %v265, %v315
    %v317 = vpop.f32.mrf.mxu0
    %v318 = vadd.f32 %v265, %v317
    %319 = vdwg.mxu0
    %v320 = vmax.f32 %v301, 0.0
    %v321 = vmax.f32 %v303, 0.0
    %v322 = vmax.f32 %v306, 0.0
    %v323 = vmax.f32 %v308, 0.0
    %v324 = vmax.f32 %v311, 0.0
    %v325 = vmax.f32 %v313, 0.0
    %v326 = vmax.f32 %v316, 0.0
    %v327 = vmax.f32 %v318, 0.0
    %328 = vst.msk [vmem:[%s7] sm:$0xff] %vm128, %v320
    %329 = vst.msk [vmem:[%s7 + $0x8] sm:$0xff] %vm128, %v321
    %330 = vst.msk [vmem:[%s7 + $0x10] sm:$0xff] %vm128, %v322
    %331 = vst.msk [vmem:[%s7 + $0x18] sm:$0xff] %vm128, %v323
    %332 = vst.msk [vmem:[%s7 + $0x20] sm:$0xff] %vm128, %v324
    %333 = vst.msk [vmem:[%s7 + $0x28] sm:$0xff] %vm128, %v325
    %334 = vst.msk [vmem:[%s7 + $0x30] sm:$0xff] %vm128, %v326
    %335 = vst.msk [vmem:[%s7 + $0x38] sm:$0xff] %vm128, %v327
    // Predicated region
    $region42: #{bilstm_moreff_forward.9} parent=1 // pred_check
      _
    $region43: #{bilstm_moreff_forward.9} parent=1 // pred_check_branch
      %337 = sbr.rel (0) target = $region45
    $region44: #{bilstm_moreff_forward.9} parent=1 // pred_region
      _
    $region45: #{bilstm_moreff_forward.9} parent=1 // pred_fallthru
      _
    // Predicated region
    $region46: #{bilstm_moreff_forward.9} parent=1 // pred_check
      _
    $region47: #{bilstm_moreff_forward.9} parent=1 // pred_check_branch
      %339 = sbr.rel (0) target = $region49
    $region48: #{bilstm_moreff_forward.9} parent=1 // pred_region
      _
    $region49: #{bilstm_moreff_forward.9} parent=1 // pred_fallthru
      _
    %340 = vsyncpa [#allocation3], 1
    %341 = vsyncpa [#allocation5], 1

</llo_original>
